<compile_context>
chip_gen: v5e
topology: v5e:2x2
jax: 0.10.0
libtpu: 0.0.40
codegen_flags: <defaults>
</compile_context>

<pallas_src>
import functools

import jax
import jax.numpy as jnp
from jax.experimental import pallas as pl
from jax.experimental.pallas import tpu as pltpu


# ---------------------------------------------------------------------------
# Fused embedding projection (Linear, no bias) + 2 highway layers.
# ---------------------------------------------------------------------------
def _embed_kernel(x_ref, pw_ref,
                  wt0_ref, bt0_ref, wg0_ref, bg0_ref,
                  wt1_ref, bt1_ref, wg1_ref, bg1_ref,
                  o_ref):
    x = jnp.dot(x_ref[...], pw_ref[...], preferred_element_type=jnp.float32)
    for wt, bt, wg, bg in ((wt0_ref, bt0_ref, wg0_ref, bg0_ref),
                           (wt1_ref, bt1_ref, wg1_ref, bg1_ref)):
        t = jnp.maximum(
            jnp.dot(x, wt[...], preferred_element_type=jnp.float32) + bt[...], 0.0)
        g = jax.nn.sigmoid(
            jnp.dot(x, wg[...], preferred_element_type=jnp.float32) + bg[...])
        x = g * t + (1.0 - g) * x
    o_ref[...] = x


def _pick_block_m(m, target=512):
    """Largest row-tile <= target that divides m and is a multiple of 8."""
    if m <= target:
        return m
    bm = target
    while bm >= 8:
        if m % bm == 0:
            return bm
        bm -= 8
    return m


def embed_highway(x, proj_w, hwy):
    """x: (M, E) -> (M, H) through proj + 2 highway layers, fused."""
    M, E = x.shape
    H = proj_w.shape[1]
    bm = _pick_block_m(M)

    def wspec(shape):
        return pl.BlockSpec(shape, lambda i: (0, 0))

    return pl.pallas_call(
        _embed_kernel,
        out_shape=jax.ShapeDtypeStruct((M, H), jnp.float32),
        grid=(M // bm,),
        in_specs=[pl.BlockSpec((bm, E), lambda i: (i, 0)),
                  wspec((E, H)),
                  wspec((H, H)), wspec((1, H)), wspec((H, H)), wspec((1, H)),
                  wspec((H, H)), wspec((1, H)), wspec((H, H)), wspec((1, H))],
        out_specs=pl.BlockSpec((bm, H), lambda i: (i, 0)),
        compiler_params=pltpu.CompilerParams(dimension_semantics=("parallel",)),
    )(x.astype(jnp.float32), proj_w,
      hwy[0]['wt'], hwy[0]['bt'].reshape(1, H),
      hwy[0]['wg'], hwy[0]['bg'].reshape(1, H),
      hwy[1]['wt'], hwy[1]['bt'].reshape(1, H),
      hwy[1]['wg'], hwy[1]['bg'].reshape(1, H))


# ---------------------------------------------------------------------------
# Bidirectional single-layer LSTM, batched over B, time-major (T*B, ...) rows.
# Emulates pack_padded_sequence: padded positions output exactly 0 and do not
# advance the state; the backward direction effectively starts at t=length-1.
# PyTorch gate order: [i, f, g, o];  c' = f*c + i*g;  h' = o*tanh(c').
# ---------------------------------------------------------------------------
def _bilstm_kernel(x_ref, wif_ref, bf_ref, whf_ref,
                   wib_ref, bb_ref, whb_ref, vm_ref,
                   o_ref, gif_ref, gib_ref, *, seq_len, batch):
    T, B = seq_len, batch
    H = whf_ref.shape[0]

    # Hoisted input projections: one big MXU matmul per direction over all
    # T*B rows (instead of 2*T*B rank-1 matmuls inside the recurrence).
    x_all = x_ref[...]
    gif_ref[...] = (jnp.dot(x_all, wif_ref[...],
                            preferred_element_type=jnp.float32) + bf_ref[...])
    gib_ref[...] = (jnp.dot(x_all, wib_ref[...],
                            preferred_element_type=jnp.float32) + bb_ref[...])

    whf = whf_ref[...]
    whb = whb_ref[...]

    def lstm_cell(pre, h, c, wh):
        gates = pre + jnp.dot(h, wh, preferred_element_type=jnp.float32)
        i = jax.nn.sigmoid(gates[:, 0:H])
        f = jax.nn.sigmoid(gates[:, H:2 * H])
        g = jnp.tanh(gates[:, 2 * H:3 * H])
        o = jax.nn.sigmoid(gates[:, 3 * H:4 * H])
        c_new = f * c + i * g
        h_new = o * jnp.tanh(c_new)
        return h_new, c_new

    def step(s, carry):
        h_f, c_f, h_b, c_b = carry
        rf = s * B                 # row offset of forward timestep s
        rb = (T - 1 - s) * B       # row offset of backward timestep T-1-s

        hf_new, cf_new = lstm_cell(gif_ref[pl.ds(rf, B), :], h_f, c_f, whf)
        hb_new, cb_new = lstm_cell(gib_ref[pl.ds(rb, B), :], h_b, c_b, whb)

        vf = vm_ref[pl.ds(rf, B), :]    # (B, 1) validity: t < length[b]
        vb = vm_ref[pl.ds(rb, B), :]

        # Direct slice stores (no concat / scratch round-trip).
        o_ref[pl.ds(rf, B), 0:H] = vf * hf_new
        o_ref[pl.ds(rb, B), H:2 * H] = vb * hb_new

        h_f = vf * hf_new + (1.0 - vf) * h_f
        c_f = vf * cf_new + (1.0 - vf) * c_f
        h_b = vb * hb_new + (1.0 - vb) * h_b
        c_b = vb * cb_new + (1.0 - vb) * c_b
        return (h_f, c_f, h_b, c_b)

    z = jnp.zeros((B, H), jnp.float32)
    jax.lax.fori_loop(0, T, step, (z, z, z, z))


def bilstm(x, lengths, p):
    """x: (B, T, Din), lengths: (B,) int32 -> (B, T, 2H)."""
    B, T, Din = x.shape
    H = p['whf'].shape[0]

    # Time-major flattening: row t*B + b holds x[b, t].
    x2d = jnp.transpose(x, (1, 0, 2)).reshape(T * B, Din).astype(jnp.float32)
    valid = (jnp.arange(T, dtype=jnp.int32)[:, None]
             < lengths.astype(jnp.int32)[None, :]).astype(jnp.float32)
    valid2d = valid.reshape(T * B, 1)

    def spec(shape):
        return pl.BlockSpec(shape, lambda i: (0, 0))

    out2d = pl.pallas_call(
        functools.partial(_bilstm_kernel, seq_len=T, batch=B),
        out_shape=jax.ShapeDtypeStruct((T * B, 2 * H), jnp.float32),
        grid=(1,),
        in_specs=[spec((T * B, Din)),
                  spec((Din, 4 * H)), spec((1, 4 * H)), spec((H, 4 * H)),
                  spec((Din, 4 * H)), spec((1, 4 * H)), spec((H, 4 * H)),
                  spec((T * B, 1))],
        out_specs=spec((T * B, 2 * H)),
        scratch_shapes=[pltpu.VMEM((T * B, 4 * H), jnp.float32),
                        pltpu.VMEM((T * B, 4 * H), jnp.float32)],
        compiler_params=pltpu.CompilerParams(dimension_semantics=("arbitrary",)),
    )(x2d, p['wif'], p['bf'].reshape(1, 4 * H), p['whf'],
      p['wib'], p['bb'].reshape(1, 4 * H), p['whb'], valid2d)

    return jnp.transpose(out2d.reshape(T, B, 2 * H), (1, 0, 2))


# ---------------------------------------------------------------------------
# BiDAF attention kernel (grid over batch, "parallel").
# ---------------------------------------------------------------------------
def _bidaf_att_kernel(c_ref, qt_ref, cmask_ref, qmask_ref,
                      cw_ref, qw_ref, cqw_ref, bias_ref, o_ref):
    c = c_ref[...]            # (Tc, D)   D = 2*hidden
    qt = qt_ref[...]          # (D, Tq)   q pre-transposed in the wrapper
    cmask = cmask_ref[...]    # (Tc, 1)
    qmask = qmask_ref[...]    # (1, Tq)
    D = c.shape[-1]
    nt = (((1,), (1,)), ((), ()))   # contract minor dims
    tn = (((0,), (0,)), ((), ()))   # contract major dims

    s0 = jnp.dot(c, cw_ref[...], preferred_element_type=jnp.float32)        # (Tc, 1)
    s1 = jnp.dot(qw_ref[...], qt, preferred_element_type=jnp.float32)       # (1, Tq)
    s2 = jnp.dot(c * cqw_ref[...], qt, preferred_element_type=jnp.float32)  # (Tc, Tq)
    s = s0 + s1 + s2 + bias_ref[...]

    # masked softmax over q dimension (dim=2 in torch)
    ml1 = qmask * s + (1.0 - qmask) * (-1e30)
    ml1 = ml1 - jnp.max(ml1, axis=-1, keepdims=True)
    e1 = jnp.exp(ml1)
    sm1 = e1 / jnp.sum(e1, axis=-1, keepdims=True)

    # masked softmax over c dimension (dim=1 in torch)
    ml2 = cmask * s + (1.0 - cmask) * (-1e30)
    ml2 = ml2 - jnp.max(ml2, axis=0, keepdims=True)
    e2 = jnp.exp(ml2)
    sm2 = e2 / jnp.sum(e2, axis=0, keepdims=True)

    a = jax.lax.dot_general(sm1, qt, nt,
                            preferred_element_type=jnp.float32)             # (Tc, D)
    # b = sm1 @ sm2^T @ c  computed as  sm1 @ (sm2^T @ c)
    s2t_c = jax.lax.dot_general(sm2, c, tn,
                                preferred_element_type=jnp.float32)         # (Tq, D)
    bvec = jnp.dot(sm1, s2t_c, preferred_element_type=jnp.float32)          # (Tc, D)

    # [c, a, c*a, c*b] via slice stores (no lane-dim concatenate).
    o_ref[:, 0:D] = c
    o_ref[:, D:2 * D] = a
    o_ref[:, 2 * D:3 * D] = c * a
    o_ref[:, 3 * D:4 * D] = c * bvec


def bidaf_attention(c, q, c_mask_f, q_mask_f, p):
    B, Tc, D = c.shape
    Tq = q.shape[1]
    qt = jnp.transpose(q, (0, 2, 1))          # one-time wrapper-side transpose
    return pl.pallas_call(
        _bidaf_att_kernel,
        out_shape=jax.ShapeDtypeStruct((B, Tc, 4 * D), jnp.float32),
        grid=(B,),
        in_specs=[
            pl.BlockSpec((None, Tc, D), lambda b: (b, 0, 0)),
            pl.BlockSpec((None, D, Tq), lambda b: (b, 0, 0)),
            pl.BlockSpec((None, Tc, 1), lambda b: (b, 0, 0)),
            pl.BlockSpec((None, 1, Tq), lambda b: (b, 0, 0)),
            pl.BlockSpec((D, 1), lambda b: (0, 0)),
            pl.BlockSpec((1, D), lambda b: (0, 0)),
            pl.BlockSpec((1, D), lambda b: (0, 0)),
            pl.BlockSpec((1, 1), lambda b: (0, 0)),
        ],
        out_specs=pl.BlockSpec((None, Tc, 4 * D), lambda b: (b, 0, 0)),
        compiler_params=pltpu.CompilerParams(dimension_semantics=("parallel",)),
    )(c, qt, c_mask_f.reshape(B, Tc, 1), q_mask_f.reshape(B, 1, Tq),
      p['c_w'], p['q_w'], p['cq_w'], p['bias'])


# ---------------------------------------------------------------------------
# Fused output heads: both logits (broadcast-mul + row-sum, no N=1 matmuls)
# and both masked log-softmaxes in a single kernel (grid over batch).
# ---------------------------------------------------------------------------
def _output_kernel(att_ref, mod_ref, mod2_ref, mask_ref,
                   wa1_ref, wm1_ref, b1_ref, wa2_ref, wm2_ref, b2_ref,
                   o1_ref, o2_ref):
    att = att_ref[...]        # (Tc, 8H)
    mod = mod_ref[...]        # (Tc, 2H)
    mod2 = mod2_ref[...]      # (Tc, 2H)
    mask = mask_ref[...]      # (Tc, 1)

    l1 = (jnp.sum(att * wa1_ref[...], axis=-1, keepdims=True)
          + jnp.sum(mod * wm1_ref[...], axis=-1, keepdims=True)
          + b1_ref[...])                                          # (Tc, 1)
    l2 = (jnp.sum(att * wa2_ref[...], axis=-1, keepdims=True)
          + jnp.sum(mod2 * wm2_ref[...], axis=-1, keepdims=True)
          + b2_ref[...])

    def masked_log_softmax(l):
        ml = mask * l + (1.0 - mask) * (-1e30)
        z = ml - jnp.max(ml, axis=0, keepdims=True)
        return z - jnp.log(jnp.sum(jnp.exp(z), axis=0, keepdims=True))

    o1_ref[...] = masked_log_softmax(l1)
    o2_ref[...] = masked_log_softmax(l2)


def output_head(att, mod, mod2, c_mask_f, p):
    B, Tc, D8 = att.shape
    D2 = mod.shape[-1]
    mask3 = c_mask_f.reshape(B, Tc, 1)

    def row(w):
        return w.reshape(1, -1)

    b1 = (p['att_b1'] + p['mod_b1']).reshape(1, 1)
    b2 = (p['att_b2'] + p['mod_b2']).reshape(1, 1)

    lp1, lp2 = pl.pallas_call(
        _output_kernel,
        out_shape=(jax.ShapeDtypeStruct((B, Tc, 1), jnp.float32),
                   jax.ShapeDtypeStruct((B, Tc, 1), jnp.float32)),
        grid=(B,),
        in_specs=[pl.BlockSpec((None, Tc, D8), lambda b: (b, 0, 0)),
                  pl.BlockSpec((None, Tc, D2), lambda b: (b, 0, 0)),
                  pl.BlockSpec((None, Tc, D2), lambda b: (b, 0, 0)),
                  pl.BlockSpec((None, Tc, 1), lambda b: (b, 0, 0)),
                  pl.BlockSpec((1, D8), lambda b: (0, 0)),
                  pl.BlockSpec((1, D2), lambda b: (0, 0)),
                  pl.BlockSpec((1, 1), lambda b: (0, 0)),
                  pl.BlockSpec((1, D8), lambda b: (0, 0)),
                  pl.BlockSpec((1, D2), lambda b: (0, 0)),
                  pl.BlockSpec((1, 1), lambda b: (0, 0))],
        out_specs=(pl.BlockSpec((None, Tc, 1), lambda b: (b, 0, 0)),
                   pl.BlockSpec((None, Tc, 1), lambda b: (b, 0, 0))),
        compiler_params=pltpu.CompilerParams(dimension_semantics=("parallel",)),
    )(att, mod, mod2, mask3,
      row(p['att_w1']), row(p['mod_w1']), b1,
      row(p['att_w2']), row(p['mod_w2']), b2)
    return lp1.reshape(B, Tc), lp2.reshape(B, Tc)


# ---------------------------------------------------------------------------
# Full BiDAF forward pass.
# ---------------------------------------------------------------------------
def bidaf_forward(params, cw_idxs, qw_idxs):
    H = params['proj_w'].shape[1]

    c_mask = (cw_idxs != 0)
    q_mask = (qw_idxs != 0)
    c_len = c_mask.sum(-1).astype(jnp.int32)
    q_len = q_mask.sum(-1).astype(jnp.int32)
    c_mask_f = c_mask.astype(jnp.float32)
    q_mask_f = q_mask.astype(jnp.float32)

    def embed(idxs):
        Bn, T = idxs.shape
        # TODO(synk): embedding-table gather stays in plain JAX (data-dependent
        # row gather); the fused proj + highway kernel consumes its output.
        wv = params['word_vectors'][idxs]                     # (Bn, T, E)
        x = embed_highway(wv.reshape(Bn * T, -1), params['proj_w'], params['hwy'])
        return x.reshape(Bn, T, H)

    c_emb = embed(cw_idxs)                                    # (B, Tc, H)
    q_emb = embed(qw_idxs)                                    # (B, Tq, H)

    c_enc = bilstm(c_emb, c_len, params['enc'])               # (B, Tc, 2H)
    q_enc = bilstm(q_emb, q_len, params['enc'])               # (B, Tq, 2H)

    att = bidaf_attention(c_enc, q_enc, c_mask_f, q_mask_f, params['att'])  # (B,Tc,8H)

    m0 = bilstm(att, c_len, params['mod0'])                   # 2-layer mod encoder
    mod = bilstm(m0, c_len, params['mod1'])                   # (B, Tc, 2H)
    mod2 = bilstm(mod, c_len, params['out_rnn'])              # output RNN

    return output_head(att, mod, mod2, c_mask_f, params)


# ---------------------------------------------------------------------------
# Main: deterministic synthetic parameters + small example inputs.
# ---------------------------------------------------------------------------
if __name__ == "__main__":
    H, E, V = 32, 64, 100          # hidden size, word-vector dim, vocab size
    B, Tc, Tq = 2, 16, 8           # batch, context length, question length

    keys = iter(jax.random.split(jax.random.PRNGKey(0), 64))

    def nrm(shape, scale=0.1):
        return jax.random.normal(next(keys), shape, dtype=jnp.float32) * scale

    def lstm_p(din, h):
        return dict(wif=nrm((din, 4 * h)), whf=nrm((h, 4 * h)), bf=nrm((4 * h,)),
                    wib=nrm((din, 4 * h)), whb=nrm((h, 4 * h)), bb=nrm((4 * h,)))

    params = dict(
        word_vectors=nrm((V, E), 1.0),
        proj_w=nrm((E, H)),                               # Linear(E->H, bias=False)
        hwy=[dict(wt=nrm((H, H)), bt=nrm((H,)), wg=nrm((H, H)), bg=nrm((H,)))
             for _ in range(2)],
        enc=lstm_p(H, H),                                 # RNNEncoder(H -> 2H)
        att=dict(c_w=nrm((2 * H, 1)), q_w=nrm((1, 2 * H)),
                 cq_w=nrm((1, 2 * H)), bias=nrm((1, 1))),
        mod0=lstm_p(8 * H, H),                            # 2-layer mod encoder
        mod1=lstm_p(2 * H, H),
        att_w1=nrm((8 * H, 1)), att_b1=nrm((1,)),
        mod_w1=nrm((2 * H, 1)), mod_b1=nrm((1,)),
        out_rnn=lstm_p(2 * H, H),
        att_w2=nrm((8 * H, 1)), att_b2=nrm((1,)),
        mod_w2=nrm((2 * H, 1)), mod_b2=nrm((1,)),
    )

    k1, k2 = jax.random.split(jax.random.PRNGKey(42))
    cw_idxs = jax.random.randint(k1, (B, Tc), 1, V, dtype=jnp.int32)
    qw_idxs = jax.random.randint(k2, (B, Tq), 1, V, dtype=jnp.int32)
    cw_idxs = cw_idxs.at[1, 12:].set(0)   # pad tail of 2nd context (length 12)
    qw_idxs = qw_idxs.at[1, 6:].set(0)    # pad tail of 2nd question (length 6)

    fwd = jax.jit(bidaf_forward)
    log_p1, log_p2 = fwd(params, cw_idxs, qw_idxs)
    jax.block_until_ready((log_p1, log_p2))
    print("KERNEL_OK")
</pallas_src>

<mosaic_0001>
module attributes {stable_mosaic.version = 11 : i64} {
  func.func @_embed_kernel(%arg0: i32, %arg1: memref<32x64xf32, #tpu.memory_space<vmem>>, %arg2: memref<64x32xf32, #tpu.memory_space<vmem>>, %arg3: memref<32x32xf32, #tpu.memory_space<vmem>>, %arg4: memref<1x32xf32, #tpu.memory_space<vmem>>, %arg5: memref<32x32xf32, #tpu.memory_space<vmem>>, %arg6: memref<1x32xf32, #tpu.memory_space<vmem>>, %arg7: memref<32x32xf32, #tpu.memory_space<vmem>>, %arg8: memref<1x32xf32, #tpu.memory_space<vmem>>, %arg9: memref<32x32xf32, #tpu.memory_space<vmem>>, %arg10: memref<1x32xf32, #tpu.memory_space<vmem>>, %arg11: memref<32x32xf32, #tpu.memory_space<vmem>>) attributes {dimension_semantics = [#tpu.dimension_semantics<parallel>], iteration_bounds = array<i64: 1>, scalar_prefetch = 0 : i64, scratch_operands = 0 : i64, tpu.core_type = #tpu.core_type<tc>, window_params = [{transform_indices = @transform_0, window_bounds = array<i64: 32, 64>}, {pipeline_mode = #tpu.pipeline_mode<synchronous>, transform_indices = @transform_1, window_bounds = array<i64: 64, 32>}, {pipeline_mode = #tpu.pipeline_mode<synchronous>, transform_indices = @transform_2, window_bounds = array<i64: 32, 32>}, {pipeline_mode = #tpu.pipeline_mode<synchronous>, transform_indices = @transform_3, window_bounds = array<i64: 1, 32>}, {pipeline_mode = #tpu.pipeline_mode<synchronous>, transform_indices = @transform_4, window_bounds = array<i64: 32, 32>}, {pipeline_mode = #tpu.pipeline_mode<synchronous>, transform_indices = @transform_5, window_bounds = array<i64: 1, 32>}, {pipeline_mode = #tpu.pipeline_mode<synchronous>, transform_indices = @transform_6, window_bounds = array<i64: 32, 32>}, {pipeline_mode = #tpu.pipeline_mode<synchronous>, transform_indices = @transform_7, window_bounds = array<i64: 1, 32>}, {pipeline_mode = #tpu.pipeline_mode<synchronous>, transform_indices = @transform_8, window_bounds = array<i64: 32, 32>}, {pipeline_mode = #tpu.pipeline_mode<synchronous>, transform_indices = @transform_9, window_bounds = array<i64: 1, 32>}, {transform_indices = @transform_10, window_bounds = array<i64: 32, 32>}]} {
    %c0 = arith.constant 0 : index
    %c0_0 = arith.constant 0 : index
    %0 = vector.load %arg1[%c0, %c0_0] : memref<32x64xf32, #tpu.memory_space<vmem>>, vector<32x64xf32>
    %c0_1 = arith.constant 0 : index
    %c0_2 = arith.constant 0 : index
    %1 = vector.load %arg2[%c0_1, %c0_2] : memref<64x32xf32, #tpu.memory_space<vmem>>, vector<64x32xf32>
    %cst = arith.constant dense<0.000000e+00> : vector<32x32xf32>
    %2 = tpu.matmul %0, %1, %cst {dimension_numbers = #tpu.dot_dimension_numbers<[1], [0], [0], [1], [0, 0, 1, 1], [], []>} : vector<32x64xf32>, vector<64x32xf32>, vector<32x32xf32> -> vector<32x32xf32>
    %c0_3 = arith.constant 0 : index
    %c0_4 = arith.constant 0 : index
    %3 = vector.load %arg3[%c0_3, %c0_4] : memref<32x32xf32, #tpu.memory_space<vmem>>, vector<32x32xf32>
    %cst_5 = arith.constant dense<0.000000e+00> : vector<32x32xf32>
    %4 = tpu.matmul %2, %3, %cst_5 {dimension_numbers = #tpu.dot_dimension_numbers<[1], [0], [0], [1], [0, 0, 1, 1], [], []>} : vector<32x32xf32>, vector<32x32xf32>, vector<32x32xf32> -> vector<32x32xf32>
    %c0_6 = arith.constant 0 : index
    %c0_7 = arith.constant 0 : index
    %5 = vector.load %arg4[%c0_6, %c0_7] : memref<1x32xf32, #tpu.memory_space<vmem>>, vector<1x32xf32>
    %6 = vector.broadcast %5 : vector<1x32xf32> to vector<32x32xf32>
    %7 = arith.addf %4, %6 : vector<32x32xf32>
    %cst_8 = arith.constant 0.000000e+00 : f32
    %8 = vector.broadcast %cst_8 : f32 to vector<32x32xf32>
    %9 = arith.maximumf %7, %8 : vector<32x32xf32>
    %c0_9 = arith.constant 0 : index
    %c0_10 = arith.constant 0 : index
    %10 = vector.load %arg5[%c0_9, %c0_10] : memref<32x32xf32, #tpu.memory_space<vmem>>, vector<32x32xf32>
    %cst_11 = arith.constant dense<0.000000e+00> : vector<32x32xf32>
    %11 = tpu.matmul %2, %10, %cst_11 {dimension_numbers = #tpu.dot_dimension_numbers<[1], [0], [0], [1], [0, 0, 1, 1], [], []>} : vector<32x32xf32>, vector<32x32xf32>, vector<32x32xf32> -> vector<32x32xf32>
    %c0_12 = arith.constant 0 : index
    %c0_13 = arith.constant 0 : index
    %12 = vector.load %arg6[%c0_12, %c0_13] : memref<1x32xf32, #tpu.memory_space<vmem>>, vector<1x32xf32>
    %13 = vector.broadcast %12 : vector<1x32xf32> to vector<32x32xf32>
    %14 = arith.addf %11, %13 : vector<32x32xf32>
    %15 = arith.negf %14 : vector<32x32xf32>
    %16 = math.exp %15 : vector<32x32xf32>
    %cst_14 = arith.constant 1.000000e+00 : f32
    %17 = vector.broadcast %cst_14 : f32 to vector<32x32xf32>
    %18 = arith.addf %17, %16 : vector<32x32xf32>
    %19 = arith.divf %17, %18 : vector<32x32xf32>
    %20 = arith.mulf %19, %9 : vector<32x32xf32>
    %cst_15 = arith.constant 1.000000e+00 : f32
    %21 = vector.broadcast %cst_15 : f32 to vector<32x32xf32>
    %22 = arith.subf %21, %19 : vector<32x32xf32>
    %23 = arith.mulf %22, %2 : vector<32x32xf32>
    %24 = arith.addf %20, %23 : vector<32x32xf32>
    %c0_16 = arith.constant 0 : index
    %c0_17 = arith.constant 0 : index
    %25 = vector.load %arg7[%c0_16, %c0_17] : memref<32x32xf32, #tpu.memory_space<vmem>>, vector<32x32xf32>
    %cst_18 = arith.constant dense<0.000000e+00> : vector<32x32xf32>
    %26 = tpu.matmul %24, %25, %cst_18 {dimension_numbers = #tpu.dot_dimension_numbers<[1], [0], [0], [1], [0, 0, 1, 1], [], []>} : vector<32x32xf32>, vector<32x32xf32>, vector<32x32xf32> -> vector<32x32xf32>
    %c0_19 = arith.constant 0 : index
    %c0_20 = arith.constant 0 : index
    %27 = vector.load %arg8[%c0_19, %c0_20] : memref<1x32xf32, #tpu.memory_space<vmem>>, vector<1x32xf32>
    %28 = vector.broadcast %27 : vector<1x32xf32> to vector<32x32xf32>
    %29 = arith.addf %26, %28 : vector<32x32xf32>
    %cst_21 = arith.constant 0.000000e+00 : f32
    %30 = vector.broadcast %cst_21 : f32 to vector<32x32xf32>
    %31 = arith.maximumf %29, %30 : vector<32x32xf32>
    %c0_22 = arith.constant 0 : index
    %c0_23 = arith.constant 0 : index
    %32 = vector.load %arg9[%c0_22, %c0_23] : memref<32x32xf32, #tpu.memory_space<vmem>>, vector<32x32xf32>
    %cst_24 = arith.constant dense<0.000000e+00> : vector<32x32xf32>
    %33 = tpu.matmul %24, %32, %cst_24 {dimension_numbers = #tpu.dot_dimension_numbers<[1], [0], [0], [1], [0, 0, 1, 1], [], []>} : vector<32x32xf32>, vector<32x32xf32>, vector<32x32xf32> -> vector<32x32xf32>
    %c0_25 = arith.constant 0 : index
    %c0_26 = arith.constant 0 : index
    %34 = vector.load %arg10[%c0_25, %c0_26] : memref<1x32xf32, #tpu.memory_space<vmem>>, vector<1x32xf32>
    %35 = vector.broadcast %34 : vector<1x32xf32> to vector<32x32xf32>
    %36 = arith.addf %33, %35 : vector<32x32xf32>
    %37 = arith.negf %36 : vector<32x32xf32>
    %38 = math.exp %37 : vector<32x32xf32>
    %cst_27 = arith.constant 1.000000e+00 : f32
    %39 = vector.broadcast %cst_27 : f32 to vector<32x32xf32>
    %40 = arith.addf %39, %38 : vector<32x32xf32>
    %41 = arith.divf %39, %40 : vector<32x32xf32>
    %42 = arith.mulf %41, %31 : vector<32x32xf32>
    %cst_28 = arith.constant 1.000000e+00 : f32
    %43 = vector.broadcast %cst_28 : f32 to vector<32x32xf32>
    %44 = arith.subf %43, %41 : vector<32x32xf32>
    %45 = arith.mulf %44, %24 : vector<32x32xf32>
    %46 = arith.addf %42, %45 : vector<32x32xf32>
    %c0_29 = arith.constant 0 : index
    %c0_30 = arith.constant 0 : index
    %47 = vector.load %arg11[%c0_29, %c0_30] : memref<32x32xf32, #tpu.memory_space<vmem>>, vector<32x32xf32>
    tpu.vector_store %arg11[%c0_29, %c0_30], %46 {strides = array<i32>} : memref<32x32xf32, #tpu.memory_space<vmem>>, vector<32x32xf32>,
    return
  }
  func.func @transform_0(%arg0: i32) -> (i32, i32) {
    %c0_i32 = arith.constant 0 : i32
    %c0_i32_0 = arith.constant 0 : i32
    return %arg0, %c0_i32 : i32, i32
  }
  func.func @transform_1(%arg0: i32) -> (i32, i32) {
    %c0_i32 = arith.constant 0 : i32
    %c0_i32_0 = arith.constant 0 : i32
    %c0_i32_1 = arith.constant 0 : i32
    return %c0_i32, %c0_i32_0 : i32, i32
  }
  func.func @transform_2(%arg0: i32) -> (i32, i32) {
    %c0_i32 = arith.constant 0 : i32
    %c0_i32_0 = arith.constant 0 : i32
    %c0_i32_1 = arith.constant 0 : i32
    return %c0_i32, %c0_i32_0 : i32, i32
  }
  func.func @transform_3(%arg0: i32) -> (i32, i32) {
    %c0_i32 = arith.constant 0 : i32
    %c0_i32_0 = arith.constant 0 : i32
    %c0_i32_1 = arith.constant 0 : i32
    return %c0_i32, %c0_i32_0 : i32, i32
  }
  func.func @transform_4(%arg0: i32) -> (i32, i32) {
    %c0_i32 = arith.constant 0 : i32
    %c0_i32_0 = arith.constant 0 : i32
    %c0_i32_1 = arith.constant 0 : i32
    return %c0_i32, %c0_i32_0 : i32, i32
  }
  func.func @transform_5(%arg0: i32) -> (i32, i32) {
    %c0_i32 = arith.constant 0 : i32
    %c0_i32_0 = arith.constant 0 : i32
    %c0_i32_1 = arith.constant 0 : i32
    return %c0_i32, %c0_i32_0 : i32, i32
  }
  func.func @transform_6(%arg0: i32) -> (i32, i32) {
    %c0_i32 = arith.constant 0 : i32
    %c0_i32_0 = arith.constant 0 : i32
    %c0_i32_1 = arith.constant 0 : i32
    return %c0_i32, %c0_i32_0 : i32, i32
  }
  func.func @transform_7(%arg0: i32) -> (i32, i32) {
    %c0_i32 = arith.constant 0 : i32
    %c0_i32_0 = arith.constant 0 : i32
    %c0_i32_1 = arith.constant 0 : i32
    return %c0_i32, %c0_i32_0 : i32, i32
  }
  func.func @transform_8(%arg0: i32) -> (i32, i32) {
    %c0_i32 = arith.constant 0 : i32
    %c0_i32_0 = arith.constant 0 : i32
    %c0_i32_1 = arith.constant 0 : i32
    return %c0_i32, %c0_i32_0 : i32, i32
  }
  func.func @transform_9(%arg0: i32) -> (i32, i32) {
    %c0_i32 = arith.constant 0 : i32
    %c0_i32_0 = arith.constant 0 : i32
    %c0_i32_1 = arith.constant 0 : i32
    return %c0_i32, %c0_i32_0 : i32, i32
  }
  func.func @transform_10(%arg0: i32) -> (i32, i32) {
    %c0_i32 = arith.constant 0 : i32
    %c0_i32_0 = arith.constant 0 : i32
    return %arg0, %c0_i32 : i32, i32
  }
}

module attributes {stable_mosaic.version = 11 : i64} {
  func.func @_bilstm_kernel(%arg0: i32, %arg1: memref<32x32xf32, #tpu.memory_space<vmem>>, %arg2: memref<32x128xf32, #tpu.memory_space<vmem>>, %arg3: memref<1x128xf32, #tpu.memory_space<vmem>>, %arg4: memref<32x128xf32, #tpu.memory_space<vmem>>, %arg5: memref<32x128xf32, #tpu.memory_space<vmem>>, %arg6: memref<1x128xf32, #tpu.memory_space<vmem>>, %arg7: memref<32x128xf32, #tpu.memory_space<vmem>>, %arg8: memref<32x1xf32, #tpu.memory_space<vmem>>, %arg9: memref<32x64xf32, #tpu.memory_space<vmem>>, %arg10: memref<32x128xf32, #tpu.memory_space<vmem>>, %arg11: memref<32x128xf32, #tpu.memory_space<vmem>>) attributes {dimension_semantics = [#tpu.dimension_semantics<arbitrary>], iteration_bounds = array<i64: 1>, scalar_prefetch = 0 : i64, scratch_operands = 2 : i64, tpu.core_type = #tpu.core_type<tc>, window_params = [{pipeline_mode = #tpu.pipeline_mode<synchronous>, transform_indices = @transform_0, window_bounds = array<i64: 32, 32>}, {pipeline_mode = #tpu.pipeline_mode<synchronous>, transform_indices = @transform_1, window_bounds = array<i64: 32, 128>}, {pipeline_mode = #tpu.pipeline_mode<synchronous>, transform_indices = @transform_2, window_bounds = array<i64: 1, 128>}, {pipeline_mode = #tpu.pipeline_mode<synchronous>, transform_indices = @transform_3, window_bounds = array<i64: 32, 128>}, {pipeline_mode = #tpu.pipeline_mode<synchronous>, transform_indices = @transform_4, window_bounds = array<i64: 32, 128>}, {pipeline_mode = #tpu.pipeline_mode<synchronous>, transform_indices = @transform_5, window_bounds = array<i64: 1, 128>}, {pipeline_mode = #tpu.pipeline_mode<synchronous>, transform_indices = @transform_6, window_bounds = array<i64: 32, 128>}, {pipeline_mode = #tpu.pipeline_mode<synchronous>, transform_indices = @transform_7, window_bounds = array<i64: 32, 1>}, {pipeline_mode = #tpu.pipeline_mode<synchronous>, transform_indices = @transform_8, window_bounds = array<i64: 32, 64>}]} {
    %c0 = arith.constant 0 : index
    %c0_0 = arith.constant 0 : index
    %0 = vector.load %arg1[%c0, %c0_0] : memref<32x32xf32, #tpu.memory_space<vmem>>, vector<32x32xf32>
    %c0_1 = arith.constant 0 : index
    %c0_2 = arith.constant 0 : index
    %1 = vector.load %arg2[%c0_1, %c0_2] : memref<32x128xf32, #tpu.memory_space<vmem>>, vector<32x128xf32>
    %cst = arith.constant dense<0.000000e+00> : vector<32x128xf32>
    %2 = tpu.matmul %0, %1, %cst {dimension_numbers = #tpu.dot_dimension_numbers<[1], [0], [0], [1], [0, 0, 1, 1], [], []>} : vector<32x32xf32>, vector<32x128xf32>, vector<32x128xf32> -> vector<32x128xf32>
    %c0_3 = arith.constant 0 : index
    %c0_4 = arith.constant 0 : index
    %3 = vector.load %arg3[%c0_3, %c0_4] : memref<1x128xf32, #tpu.memory_space<vmem>>, vector<1x128xf32>
    %4 = vector.broadcast %3 : vector<1x128xf32> to vector<32x128xf32>
    %5 = arith.addf %2, %4 : vector<32x128xf32>
    %c0_5 = arith.constant 0 : index
    %c0_6 = arith.constant 0 : index
    %6 = vector.load %arg10[%c0_5, %c0_6] : memref<32x128xf32, #tpu.memory_space<vmem>>, vector<32x128xf32>
    tpu.vector_store %arg10[%c0_5, %c0_6], %5 {strides = array<i32>} : memref<32x128xf32, #tpu.memory_space<vmem>>, vector<32x128xf32>,
    %c0_7 = arith.constant 0 : index
    %c0_8 = arith.constant 0 : index
    %7 = vector.load %arg5[%c0_7, %c0_8] : memref<32x128xf32, #tpu.memory_space<vmem>>, vector<32x128xf32>
    %cst_9 = arith.constant dense<0.000000e+00> : vector<32x128xf32>
    %8 = tpu.matmul %0, %7, %cst_9 {dimension_numbers = #tpu.dot_dimension_numbers<[1], [0], [0], [1], [0, 0, 1, 1], [], []>} : vector<32x32xf32>, vector<32x128xf32>, vector<32x128xf32> -> vector<32x128xf32>
    %c0_10 = arith.constant 0 : index
    %c0_11 = arith.constant 0 : index
    %9 = vector.load %arg6[%c0_10, %c0_11] : memref<1x128xf32, #tpu.memory_space<vmem>>, vector<1x128xf32>
    %10 = vector.broadcast %9 : vector<1x128xf32> to vector<32x128xf32>
    %11 = arith.addf %8, %10 : vector<32x128xf32>
    %c0_12 = arith.constant 0 : index
    %c0_13 = arith.constant 0 : index
    %12 = vector.load %arg11[%c0_12, %c0_13] : memref<32x128xf32, #tpu.memory_space<vmem>>, vector<32x128xf32>
    tpu.vector_store %arg11[%c0_12, %c0_13], %11 {strides = array<i32>} : memref<32x128xf32, #tpu.memory_space<vmem>>, vector<32x128xf32>,
    %c0_14 = arith.constant 0 : index
    %c0_15 = arith.constant 0 : index
    %13 = vector.load %arg4[%c0_14, %c0_15] : memref<32x128xf32, #tpu.memory_space<vmem>>, vector<32x128xf32>
    %c0_16 = arith.constant 0 : index
    %c0_17 = arith.constant 0 : index
    %14 = vector.load %arg7[%c0_16, %c0_17] : memref<32x128xf32, #tpu.memory_space<vmem>>, vector<32x128xf32>
    %cst_18 = arith.constant 0.000000e+00 : f32
    %15 = vector.broadcast %cst_18 : f32 to vector<2x32xf32>
    %c0_i32 = arith.constant 0 : i32
    %c16_i32 = arith.constant 16 : i32
    %16 = arith.addi %c0_i32, %c16_i32 : i32
    %c1_i32 = arith.constant 1 : i32
    %17:4 = scf.for %arg12 = %c0_i32 to %16 step %c1_i32 iter_args(%arg13 = %15, %arg14 = %15, %arg15 = %15, %arg16 = %15) -> (vector<2x32xf32>, vector<2x32xf32>, vector<2x32xf32>, vector<2x32xf32>)  : i32 {
      %c2_i32 = arith.constant 2 : i32
      %18 = arith.muli %arg12, %c2_i32 : i32
      %c15_i32 = arith.constant 15 : i32
      %19 = arith.subi %c15_i32, %arg12 : i32
      %c2_i32_20 = arith.constant 2 : i32
      %20 = arith.muli %19, %c2_i32_20 : i32
      %21 = arith.index_cast %18 : i32 to index
      %c0_21 = arith.constant 0 : index
      %22 = vector.load %arg10[%21, %c0_21] : memref<32x128xf32, #tpu.memory_space<vmem>>, vector<2x128xf32>
      %cst_22 = arith.constant dense<0.000000e+00> : vector<2x128xf32>
      %23 = tpu.matmul %arg13, %13, %cst_22 {dimension_numbers = #tpu.dot_dimension_numbers<[1], [0], [0], [1], [0, 0, 1, 1], [], []>} : vector<2x32xf32>, vector<32x128xf32>, vector<2x128xf32> -> vector<2x128xf32>
      %24 = arith.addf %22, %23 : vector<2x128xf32>
      %25 = vector.extract_strided_slice %24 {offsets = [0, 0], sizes = [2, 32], strides = [1, 1]} : vector<2x128xf32> to vector<2x32xf32>
      %26 = arith.negf %25 : vector<2x32xf32>
      %27 = math.exp %26 : vector<2x32xf32>
      %cst_23 = arith.constant 1.000000e+00 : f32
      %28 = vector.broadcast %cst_23 : f32 to vector<2x32xf32>
      %29 = arith.addf %28, %27 : vector<2x32xf32>
      %30 = arith.divf %28, %29 : vector<2x32xf32>
      %31 = vector.extract_strided_slice %24 {offsets = [0, 32], sizes = [2, 32], strides = [1, 1]} : vector<2x128xf32> to vector<2x32xf32>
      %32 = arith.negf %31 : vector<2x32xf32>
      %33 = math.exp %32 : vector<2x32xf32>
      %cst_24 = arith.constant 1.000000e+00 : f32
      %34 = vector.broadcast %cst_24 : f32 to vector<2x32xf32>
      %35 = arith.addf %34, %33 : vector<2x32xf32>
      %36 = arith.divf %34, %35 : vector<2x32xf32>
      %37 = vector.extract_strided_slice %24 {offsets = [0, 64], sizes = [2, 32], strides = [1, 1]} : vector<2x128xf32> to vector<2x32xf32>
      %38 = math.tanh %37 : vector<2x32xf32>
      %39 = vector.extract_strided_slice %24 {offsets = [0, 96], sizes = [2, 32], strides = [1, 1]} : vector<2x128xf32> to vector<2x32xf32>
      %40 = arith.negf %39 : vector<2x32xf32>
      %41 = math.exp %40 : vector<2x32xf32>
      %cst_25 = arith.constant 1.000000e+00 : f32
      %42 = vector.broadcast %cst_25 : f32 to vector<2x32xf32>
      %43 = arith.addf %42, %41 : vector<2x32xf32>
      %44 = arith.divf %42, %43 : vector<2x32xf32>
      %45 = arith.mulf %36, %arg14 : vector<2x32xf32>
      %46 = arith.mulf %30, %38 : vector<2x32xf32>
      %47 = arith.addf %45, %46 : vector<2x32xf32>
      %48 = math.tanh %47 : vector<2x32xf32>
      %49 = arith.mulf %44, %48 : vector<2x32xf32>
      %50 = arith.index_cast %20 : i32 to index
      %c0_26 = arith.constant 0 : index
      %51 = vector.load %arg11[%50, %c0_26] : memref<32x128xf32, #tpu.memory_space<vmem>>, vector<2x128xf32>
      %cst_27 = arith.constant dense<0.000000e+00> : vector<2x128xf32>
      %52 = tpu.matmul %arg15, %14, %cst_27 {dimension_numbers = #tpu.dot_dimension_numbers<[1], [0], [0], [1], [0, 0, 1, 1], [], []>} : vector<2x32xf32>, vector<32x128xf32>, vector<2x128xf32> -> vector<2x128xf32>
      %53 = arith.addf %51, %52 : vector<2x128xf32>
      %54 = vector.extract_strided_slice %53 {offsets = [0, 0], sizes = [2, 32], strides = [1, 1]} : vector<2x128xf32> to vector<2x32xf32>
      %55 = arith.negf %54 : vector<2x32xf32>
      %56 = math.exp %55 : vector<2x32xf32>
      %cst_28 = arith.constant 1.000000e+00 : f32
      %57 = vector.broadcast %cst_28 : f32 to vector<2x32xf32>
      %58 = arith.addf %57, %56 : vector<2x32xf32>
      %59 = arith.divf %57, %58 : vector<2x32xf32>
      %60 = vector.extract_strided_slice %53 {offsets = [0, 32], sizes = [2, 32], strides = [1, 1]} : vector<2x128xf32> to vector<2x32xf32>
      %61 = arith.negf %60 : vector<2x32xf32>
      %62 = math.exp %61 : vector<2x32xf32>
      %cst_29 = arith.constant 1.000000e+00 : f32
      %63 = vector.broadcast %cst_29 : f32 to vector<2x32xf32>
      %64 = arith.addf %63, %62 : vector<2x32xf32>
      %65 = arith.divf %63, %64 : vector<2x32xf32>
      %66 = vector.extract_strided_slice %53 {offsets = [0, 64], sizes = [2, 32], strides = [1, 1]} : vector<2x128xf32> to vector<2x32xf32>
      %67 = math.tanh %66 : vector<2x32xf32>
      %68 = vector.extract_strided_slice %53 {offsets = [0, 96], sizes = [2, 32], strides = [1, 1]} : vector<2x128xf32> to vector<2x32xf32>
      %69 = arith.negf %68 : vector<2x32xf32>
      %70 = math.exp %69 : vector<2x32xf32>
      %cst_30 = arith.constant 1.000000e+00 : f32
      %71 = vector.broadcast %cst_30 : f32 to vector<2x32xf32>
      %72 = arith.addf %71, %70 : vector<2x32xf32>
      %73 = arith.divf %71, %72 : vector<2x32xf32>
      %74 = arith.mulf %65, %arg16 : vector<2x32xf32>
      %75 = arith.mulf %59, %67 : vector<2x32xf32>
      %76 = arith.addf %74, %75 : vector<2x32xf32>
      %77 = math.tanh %76 : vector<2x32xf32>
      %78 = arith.mulf %73, %77 : vector<2x32xf32>
      %79 = arith.index_cast %18 : i32 to index
      %c0_31 = arith.constant 0 : index
      %80 = vector.load %arg8[%79, %c0_31] : memref<32x1xf32, #tpu.memory_space<vmem>>, vector<2x1xf32>
      %81 = arith.index_cast %20 : i32 to index
      %c0_32 = arith.constant 0 : index
      %82 = vector.load %arg8[%81, %c0_32] : memref<32x1xf32, #tpu.memory_space<vmem>>, vector<2x1xf32>
      %83 = vector.broadcast %80 : vector<2x1xf32> to vector<2x32xf32>
      %84 = arith.mulf %83, %49 : vector<2x32xf32>
      %85 = arith.index_cast %18 : i32 to index
      %c0_33 = arith.constant 0 : index
      %86 = vector.load %arg9[%85, %c0_33] : memref<32x64xf32, #tpu.memory_space<vmem>>, vector<2x32xf32>
      tpu.vector_store %arg9[%85, %c0_33], %84 {strides = array<i32>} : memref<32x64xf32, #tpu.memory_space<vmem>>, vector<2x32xf32>,
      %87 = vector.broadcast %82 : vector<2x1xf32> to vector<2x32xf32>
      %88 = arith.mulf %87, %78 : vector<2x32xf32>
      %89 = arith.index_cast %20 : i32 to index
      %c32 = arith.constant 32 : index
      %90 = vector.load %arg9[%89, %c32] : memref<32x64xf32, #tpu.memory_space<vmem>>, vector<2x32xf32>
      tpu.vector_store %arg9[%89, %c32], %88 {strides = array<i32>} : memref<32x64xf32, #tpu.memory_space<vmem>>, vector<2x32xf32>,
      %91 = vector.broadcast %80 : vector<2x1xf32> to vector<2x32xf32>
      %92 = arith.mulf %91, %49 : vector<2x32xf32>
      %cst_34 = arith.constant 1.000000e+00 : f32
      %93 = vector.broadcast %cst_34 : f32 to vector<2x1xf32>
      %94 = arith.subf %93, %80 : vector<2x1xf32>
      %95 = vector.broadcast %94 : vector<2x1xf32> to vector<2x32xf32>
      %96 = arith.mulf %95, %arg13 : vector<2x32xf32>
      %97 = arith.addf %92, %96 : vector<2x32xf32>
      %98 = vector.broadcast %80 : vector<2x1xf32> to vector<2x32xf32>
      %99 = arith.mulf %98, %47 : vector<2x32xf32>
      %cst_35 = arith.constant 1.000000e+00 : f32
      %100 = vector.broadcast %cst_35 : f32 to vector<2x1xf32>
      %101 = arith.subf %100, %80 : vector<2x1xf32>
      %102 = vector.broadcast %101 : vector<2x1xf32> to vector<2x32xf32>
      %103 = arith.mulf %102, %arg14 : vector<2x32xf32>
      %104 = arith.addf %99, %103 : vector<2x32xf32>
      %105 = vector.broadcast %82 : vector<2x1xf32> to vector<2x32xf32>
      %106 = arith.mulf %105, %78 : vector<2x32xf32>
      %cst_36 = arith.constant 1.000000e+00 : f32
      %107 = vector.broadcast %cst_36 : f32 to vector<2x1xf32>
      %108 = arith.subf %107, %82 : vector<2x1xf32>
      %109 = vector.broadcast %108 : vector<2x1xf32> to vector<2x32xf32>
      %110 = arith.mulf %109, %arg15 : vector<2x32xf32>
      %111 = arith.addf %106, %110 : vector<2x32xf32>
      %112 = vector.broadcast %82 : vector<2x1xf32> to vector<2x32xf32>
      %113 = arith.mulf %112, %76 : vector<2x32xf32>
      %cst_37 = arith.constant 1.000000e+00 : f32
      %114 = vector.broadcast %cst_37 : f32 to vector<2x1xf32>
      %115 = arith.subf %114, %82 : vector<2x1xf32>
      %116 = vector.broadcast %115 : vector<2x1xf32> to vector<2x32xf32>
      %117 = arith.mulf %116, %arg16 : vector<2x32xf32>
      %118 = arith.addf %113, %117 : vector<2x32xf32>
      scf.yield %97, %104, %111, %118 : vector<2x32xf32>, vector<2x32xf32>, vector<2x32xf32>, vector<2x32xf32>
    }
    %c16_i32_19 = arith.constant 16 : i32
    return
  }
  func.func @transform_0(%arg0: i32) -> (i32, i32) {
    %c0_i32 = arith.constant 0 : i32
    %c0_i32_0 = arith.constant 0 : i32
    %c0_i32_1 = arith.constant 0 : i32
    return %c0_i32, %c0_i32_0 : i32, i32
  }
  func.func @transform_1(%arg0: i32) -> (i32, i32) {
    %c0_i32 = arith.constant 0 : i32
    %c0_i32_0 = arith.constant 0 : i32
    %c0_i32_1 = arith.constant 0 : i32
    return %c0_i32, %c0_i32_0 : i32, i32
  }
  func.func @transform_2(%arg0: i32) -> (i32, i32) {
    %c0_i32 = arith.constant 0 : i32
    %c0_i32_0 = arith.constant 0 : i32
    %c0_i32_1 = arith.constant 0 : i32
    return %c0_i32, %c0_i32_0 : i32, i32
  }
  func.func @transform_3(%arg0: i32) -> (i32, i32) {
    %c0_i32 = arith.constant 0 : i32
    %c0_i32_0 = arith.constant 0 : i32
    %c0_i32_1 = arith.constant 0 : i32
    return %c0_i32, %c0_i32_0 : i32, i32
  }
  func.func @transform_4(%arg0: i32) -> (i32, i32) {
    %c0_i32 = arith.constant 0 : i32
    %c0_i32_0 = arith.constant 0 : i32
    %c0_i32_1 = arith.constant 0 : i32
    return %c0_i32, %c0_i32_0 : i32, i32
  }
  func.func @transform_5(%arg0: i32) -> (i32, i32) {
    %c0_i32 = arith.constant 0 : i32
    %c0_i32_0 = arith.constant 0 : i32
    %c0_i32_1 = arith.constant 0 : i32
    return %c0_i32, %c0_i32_0 : i32, i32
  }
  func.func @transform_6(%arg0: i32) -> (i32, i32) {
    %c0_i32 = arith.constant 0 : i32
    %c0_i32_0 = arith.constant 0 : i32
    %c0_i32_1 = arith.constant 0 : i32
    return %c0_i32, %c0_i32_0 : i32, i32
  }
  func.func @transform_7(%arg0: i32) -> (i32, i32) {
    %c0_i32 = arith.constant 0 : i32
    %c0_i32_0 = arith.constant 0 : i32
    %c0_i32_1 = arith.constant 0 : i32
    return %c0_i32, %c0_i32_0 : i32, i32
  }
  func.func @transform_8(%arg0: i32) -> (i32, i32) {
    %c0_i32 = arith.constant 0 : i32
    %c0_i32_0 = arith.constant 0 : i32
    %c0_i32_1 = arith.constant 0 : i32
    return %c0_i32, %c0_i32_0 : i32, i32
  }
}

module attributes {stable_mosaic.version = 11 : i64} {
  func.func @_embed_kernel(%arg0: i32, %arg1: memref<16x64xf32, #tpu.memory_space<vmem>>, %arg2: memref<64x32xf32, #tpu.memory_space<vmem>>, %arg3: memref<32x32xf32, #tpu.memory_space<vmem>>, %arg4: memref<1x32xf32, #tpu.memory_space<vmem>>, %arg5: memref<32x32xf32, #tpu.memory_space<vmem>>, %arg6: memref<1x32xf32, #tpu.memory_space<vmem>>, %arg7: memref<32x32xf32, #tpu.memory_space<vmem>>, %arg8: memref<1x32xf32, #tpu.memory_space<vmem>>, %arg9: memref<32x32xf32, #tpu.memory_space<vmem>>, %arg10: memref<1x32xf32, #tpu.memory_space<vmem>>, %arg11: memref<16x32xf32, #tpu.memory_space<vmem>>) attributes {dimension_semantics = [#tpu.dimension_semantics<parallel>], iteration_bounds = array<i64: 1>, scalar_prefetch = 0 : i64, scratch_operands = 0 : i64, tpu.core_type = #tpu.core_type<tc>, window_params = [{transform_indices = @transform_0, window_bounds = array<i64: 16, 64>}, {pipeline_mode = #tpu.pipeline_mode<synchronous>, transform_indices = @transform_1, window_bounds = array<i64: 64, 32>}, {pipeline_mode = #tpu.pipeline_mode<synchronous>, transform_indices = @transform_2, window_bounds = array<i64: 32, 32>}, {pipeline_mode = #tpu.pipeline_mode<synchronous>, transform_indices = @transform_3, window_bounds = array<i64: 1, 32>}, {pipeline_mode = #tpu.pipeline_mode<synchronous>, transform_indices = @transform_4, window_bounds = array<i64: 32, 32>}, {pipeline_mode = #tpu.pipeline_mode<synchronous>, transform_indices = @transform_5, window_bounds = array<i64: 1, 32>}, {pipeline_mode = #tpu.pipeline_mode<synchronous>, transform_indices = @transform_6, window_bounds = array<i64: 32, 32>}, {pipeline_mode = #tpu.pipeline_mode<synchronous>, transform_indices = @transform_7, window_bounds = array<i64: 1, 32>}, {pipeline_mode = #tpu.pipeline_mode<synchronous>, transform_indices = @transform_8, window_bounds = array<i64: 32, 32>}, {pipeline_mode = #tpu.pipeline_mode<synchronous>, transform_indices = @transform_9, window_bounds = array<i64: 1, 32>}, {transform_indices = @transform_10, window_bounds = array<i64: 16, 32>}]} {
    %c0 = arith.constant 0 : index
    %c0_0 = arith.constant 0 : index
    %0 = vector.load %arg1[%c0, %c0_0] : memref<16x64xf32, #tpu.memory_space<vmem>>, vector<16x64xf32>
    %c0_1 = arith.constant 0 : index
    %c0_2 = arith.constant 0 : index
    %1 = vector.load %arg2[%c0_1, %c0_2] : memref<64x32xf32, #tpu.memory_space<vmem>>, vector<64x32xf32>
    %cst = arith.constant dense<0.000000e+00> : vector<16x32xf32>
    %2 = tpu.matmul %0, %1, %cst {dimension_numbers = #tpu.dot_dimension_numbers<[1], [0], [0], [1], [0, 0, 1, 1], [], []>} : vector<16x64xf32>, vector<64x32xf32>, vector<16x32xf32> -> vector<16x32xf32>
    %c0_3 = arith.constant 0 : index
    %c0_4 = arith.constant 0 : index
    %3 = vector.load %arg3[%c0_3, %c0_4] : memref<32x32xf32, #tpu.memory_space<vmem>>, vector<32x32xf32>
    %cst_5 = arith.constant dense<0.000000e+00> : vector<16x32xf32>
    %4 = tpu.matmul %2, %3, %cst_5 {dimension_numbers = #tpu.dot_dimension_numbers<[1], [0], [0], [1], [0, 0, 1, 1], [], []>} : vector<16x32xf32>, vector<32x32xf32>, vector<16x32xf32> -> vector<16x32xf32>
    %c0_6 = arith.constant 0 : index
    %c0_7 = arith.constant 0 : index
    %5 = vector.load %arg4[%c0_6, %c0_7] : memref<1x32xf32, #tpu.memory_space<vmem>>, vector<1x32xf32>
    %6 = vector.broadcast %5 : vector<1x32xf32> to vector<16x32xf32>
    %7 = arith.addf %4, %6 : vector<16x32xf32>
    %cst_8 = arith.constant 0.000000e+00 : f32
    %8 = vector.broadcast %cst_8 : f32 to vector<16x32xf32>
    %9 = arith.maximumf %7, %8 : vector<16x32xf32>
    %c0_9 = arith.constant 0 : index
    %c0_10 = arith.constant 0 : index
    %10 = vector.load %arg5[%c0_9, %c0_10] : memref<32x32xf32, #tpu.memory_space<vmem>>, vector<32x32xf32>
    %cst_11 = arith.constant dense<0.000000e+00> : vector<16x32xf32>
    %11 = tpu.matmul %2, %10, %cst_11 {dimension_numbers = #tpu.dot_dimension_numbers<[1], [0], [0], [1], [0, 0, 1, 1], [], []>} : vector<16x32xf32>, vector<32x32xf32>, vector<16x32xf32> -> vector<16x32xf32>
    %c0_12 = arith.constant 0 : index
    %c0_13 = arith.constant 0 : index
    %12 = vector.load %arg6[%c0_12, %c0_13] : memref<1x32xf32, #tpu.memory_space<vmem>>, vector<1x32xf32>
    %13 = vector.broadcast %12 : vector<1x32xf32> to vector<16x32xf32>
    %14 = arith.addf %11, %13 : vector<16x32xf32>
    %15 = arith.negf %14 : vector<16x32xf32>
    %16 = math.exp %15 : vector<16x32xf32>
    %cst_14 = arith.constant 1.000000e+00 : f32
    %17 = vector.broadcast %cst_14 : f32 to vector<16x32xf32>
    %18 = arith.addf %17, %16 : vector<16x32xf32>
    %19 = arith.divf %17, %18 : vector<16x32xf32>
    %20 = arith.mulf %19, %9 : vector<16x32xf32>
    %cst_15 = arith.constant 1.000000e+00 : f32
    %21 = vector.broadcast %cst_15 : f32 to vector<16x32xf32>
    %22 = arith.subf %21, %19 : vector<16x32xf32>
    %23 = arith.mulf %22, %2 : vector<16x32xf32>
    %24 = arith.addf %20, %23 : vector<16x32xf32>
    %c0_16 = arith.constant 0 : index
    %c0_17 = arith.constant 0 : index
    %25 = vector.load %arg7[%c0_16, %c0_17] : memref<32x32xf32, #tpu.memory_space<vmem>>, vector<32x32xf32>
    %cst_18 = arith.constant dense<0.000000e+00> : vector<16x32xf32>
    %26 = tpu.matmul %24, %25, %cst_18 {dimension_numbers = #tpu.dot_dimension_numbers<[1], [0], [0], [1], [0, 0, 1, 1], [], []>} : vector<16x32xf32>, vector<32x32xf32>, vector<16x32xf32> -> vector<16x32xf32>
    %c0_19 = arith.constant 0 : index
    %c0_20 = arith.constant 0 : index
    %27 = vector.load %arg8[%c0_19, %c0_20] : memref<1x32xf32, #tpu.memory_space<vmem>>, vector<1x32xf32>
    %28 = vector.broadcast %27 : vector<1x32xf32> to vector<16x32xf32>
    %29 = arith.addf %26, %28 : vector<16x32xf32>
    %cst_21 = arith.constant 0.000000e+00 : f32
    %30 = vector.broadcast %cst_21 : f32 to vector<16x32xf32>
    %31 = arith.maximumf %29, %30 : vector<16x32xf32>
    %c0_22 = arith.constant 0 : index
    %c0_23 = arith.constant 0 : index
    %32 = vector.load %arg9[%c0_22, %c0_23] : memref<32x32xf32, #tpu.memory_space<vmem>>, vector<32x32xf32>
    %cst_24 = arith.constant dense<0.000000e+00> : vector<16x32xf32>
    %33 = tpu.matmul %24, %32, %cst_24 {dimension_numbers = #tpu.dot_dimension_numbers<[1], [0], [0], [1], [0, 0, 1, 1], [], []>} : vector<16x32xf32>, vector<32x32xf32>, vector<16x32xf32> -> vector<16x32xf32>
    %c0_25 = arith.constant 0 : index
    %c0_26 = arith.constant 0 : index
    %34 = vector.load %arg10[%c0_25, %c0_26] : memref<1x32xf32, #tpu.memory_space<vmem>>, vector<1x32xf32>
    %35 = vector.broadcast %34 : vector<1x32xf32> to vector<16x32xf32>
    %36 = arith.addf %33, %35 : vector<16x32xf32>
    %37 = arith.negf %36 : vector<16x32xf32>
    %38 = math.exp %37 : vector<16x32xf32>
    %cst_27 = arith.constant 1.000000e+00 : f32
    %39 = vector.broadcast %cst_27 : f32 to vector<16x32xf32>
    %40 = arith.addf %39, %38 : vector<16x32xf32>
    %41 = arith.divf %39, %40 : vector<16x32xf32>
    %42 = arith.mulf %41, %31 : vector<16x32xf32>
    %cst_28 = arith.constant 1.000000e+00 : f32
    %43 = vector.broadcast %cst_28 : f32 to vector<16x32xf32>
    %44 = arith.subf %43, %41 : vector<16x32xf32>
    %45 = arith.mulf %44, %24 : vector<16x32xf32>
    %46 = arith.addf %42, %45 : vector<16x32xf32>
    %c0_29 = arith.constant 0 : index
    %c0_30 = arith.constant 0 : index
    %47 = vector.load %arg11[%c0_29, %c0_30] : memref<16x32xf32, #tpu.memory_space<vmem>>, vector<16x32xf32>
    tpu.vector_store %arg11[%c0_29, %c0_30], %46 {strides = array<i32>} : memref<16x32xf32, #tpu.memory_space<vmem>>, vector<16x32xf32>,
    return
  }
  func.func @transform_0(%arg0: i32) -> (i32, i32) {
    %c0_i32 = arith.constant 0 : i32
    %c0_i32_0 = arith.constant 0 : i32
    return %arg0, %c0_i32 : i32, i32
  }
  func.func @transform_1(%arg0: i32) -> (i32, i32) {
    %c0_i32 = arith.constant 0 : i32
    %c0_i32_0 = arith.constant 0 : i32
    %c0_i32_1 = arith.constant 0 : i32
    return %c0_i32, %c0_i32_0 : i32, i32
  }
  func.func @transform_2(%arg0: i32) -> (i32, i32) {
    %c0_i32 = arith.constant 0 : i32
    %c0_i32_0 = arith.constant 0 : i32
    %c0_i32_1 = arith.constant 0 : i32
    return %c0_i32, %c0_i32_0 : i32, i32
  }
  func.func @transform_3(%arg0: i32) -> (i32, i32) {
    %c0_i32 = arith.constant 0 : i32
    %c0_i32_0 = arith.constant 0 : i32
    %c0_i32_1 = arith.constant 0 : i32
    return %c0_i32, %c0_i32_0 : i32, i32
  }
  func.func @transform_4(%arg0: i32) -> (i32, i32) {
    %c0_i32 = arith.constant 0 : i32
    %c0_i32_0 = arith.constant 0 : i32
    %c0_i32_1 = arith.constant 0 : i32
    return %c0_i32, %c0_i32_0 : i32, i32
  }
  func.func @transform_5(%arg0: i32) -> (i32, i32) {
    %c0_i32 = arith.constant 0 : i32
    %c0_i32_0 = arith.constant 0 : i32
    %c0_i32_1 = arith.constant 0 : i32
    return %c0_i32, %c0_i32_0 : i32, i32
  }
  func.func @transform_6(%arg0: i32) -> (i32, i32) {
    %c0_i32 = arith.constant 0 : i32
    %c0_i32_0 = arith.constant 0 : i32
    %c0_i32_1 = arith.constant 0 : i32
    return %c0_i32, %c0_i32_0 : i32, i32
  }
  func.func @transform_7(%arg0: i32) -> (i32, i32) {
    %c0_i32 = arith.constant 0 : i32
    %c0_i32_0 = arith.constant 0 : i32
    %c0_i32_1 = arith.constant 0 : i32
    return %c0_i32, %c0_i32_0 : i32, i32
  }
  func.func @transform_8(%arg0: i32) -> (i32, i32) {
    %c0_i32 = arith.constant 0 : i32
    %c0_i32_0 = arith.constant 0 : i32
    %c0_i32_1 = arith.constant 0 : i32
    return %c0_i32, %c0_i32_0 : i32, i32
  }
  func.func @transform_9(%arg0: i32) -> (i32, i32) {
    %c0_i32 = arith.constant 0 : i32
    %c0_i32_0 = arith.constant 0 : i32
    %c0_i32_1 = arith.constant 0 : i32
    return %c0_i32, %c0_i32_0 : i32, i32
  }
  func.func @transform_10(%arg0: i32) -> (i32, i32) {
    %c0_i32 = arith.constant 0 : i32
    %c0_i32_0 = arith.constant 0 : i32
    return %arg0, %c0_i32 : i32, i32
  }
}

module attributes {stable_mosaic.version = 11 : i64} {
  func.func @_bilstm_kernel(%arg0: i32, %arg1: memref<16x32xf32, #tpu.memory_space<vmem>>, %arg2: memref<32x128xf32, #tpu.memory_space<vmem>>, %arg3: memref<1x128xf32, #tpu.memory_space<vmem>>, %arg4: memref<32x128xf32, #tpu.memory_space<vmem>>, %arg5: memref<32x128xf32, #tpu.memory_space<vmem>>, %arg6: memref<1x128xf32, #tpu.memory_space<vmem>>, %arg7: memref<32x128xf32, #tpu.memory_space<vmem>>, %arg8: memref<16x1xf32, #tpu.memory_space<vmem>>, %arg9: memref<16x64xf32, #tpu.memory_space<vmem>>, %arg10: memref<16x128xf32, #tpu.memory_space<vmem>>, %arg11: memref<16x128xf32, #tpu.memory_space<vmem>>) attributes {dimension_semantics = [#tpu.dimension_semantics<arbitrary>], iteration_bounds = array<i64: 1>, scalar_prefetch = 0 : i64, scratch_operands = 2 : i64, tpu.core_type = #tpu.core_type<tc>, window_params = [{pipeline_mode = #tpu.pipeline_mode<synchronous>, transform_indices = @transform_0, window_bounds = array<i64: 16, 32>}, {pipeline_mode = #tpu.pipeline_mode<synchronous>, transform_indices = @transform_1, window_bounds = array<i64: 32, 128>}, {pipeline_mode = #tpu.pipeline_mode<synchronous>, transform_indices = @transform_2, window_bounds = array<i64: 1, 128>}, {pipeline_mode = #tpu.pipeline_mode<synchronous>, transform_indices = @transform_3, window_bounds = array<i64: 32, 128>}, {pipeline_mode = #tpu.pipeline_mode<synchronous>, transform_indices = @transform_4, window_bounds = array<i64: 32, 128>}, {pipeline_mode = #tpu.pipeline_mode<synchronous>, transform_indices = @transform_5, window_bounds = array<i64: 1, 128>}, {pipeline_mode = #tpu.pipeline_mode<synchronous>, transform_indices = @transform_6, window_bounds = array<i64: 32, 128>}, {pipeline_mode = #tpu.pipeline_mode<synchronous>, transform_indices = @transform_7, window_bounds = array<i64: 16, 1>}, {pipeline_mode = #tpu.pipeline_mode<synchronous>, transform_indices = @transform_8, window_bounds = array<i64: 16, 64>}]} {
    %c0 = arith.constant 0 : index
    %c0_0 = arith.constant 0 : index
    %0 = vector.load %arg1[%c0, %c0_0] : memref<16x32xf32, #tpu.memory_space<vmem>>, vector<16x32xf32>
    %c0_1 = arith.constant 0 : index
    %c0_2 = arith.constant 0 : index
    %1 = vector.load %arg2[%c0_1, %c0_2] : memref<32x128xf32, #tpu.memory_space<vmem>>, vector<32x128xf32>
    %cst = arith.constant dense<0.000000e+00> : vector<16x128xf32>
    %2 = tpu.matmul %0, %1, %cst {dimension_numbers = #tpu.dot_dimension_numbers<[1], [0], [0], [1], [0, 0, 1, 1], [], []>} : vector<16x32xf32>, vector<32x128xf32>, vector<16x128xf32> -> vector<16x128xf32>
    %c0_3 = arith.constant 0 : index
    %c0_4 = arith.constant 0 : index
    %3 = vector.load %arg3[%c0_3, %c0_4] : memref<1x128xf32, #tpu.memory_space<vmem>>, vector<1x128xf32>
    %4 = vector.broadcast %3 : vector<1x128xf32> to vector<16x128xf32>
    %5 = arith.addf %2, %4 : vector<16x128xf32>
    %c0_5 = arith.constant 0 : index
    %c0_6 = arith.constant 0 : index
    %6 = vector.load %arg10[%c0_5, %c0_6] : memref<16x128xf32, #tpu.memory_space<vmem>>, vector<16x128xf32>
    tpu.vector_store %arg10[%c0_5, %c0_6], %5 {strides = array<i32>} : memref<16x128xf32, #tpu.memory_space<vmem>>, vector<16x128xf32>,
    %c0_7 = arith.constant 0 : index
    %c0_8 = arith.constant 0 : index
    %7 = vector.load %arg5[%c0_7, %c0_8] : memref<32x128xf32, #tpu.memory_space<vmem>>, vector<32x128xf32>
    %cst_9 = arith.constant dense<0.000000e+00> : vector<16x128xf32>
    %8 = tpu.matmul %0, %7, %cst_9 {dimension_numbers = #tpu.dot_dimension_numbers<[1], [0], [0], [1], [0, 0, 1, 1], [], []>} : vector<16x32xf32>, vector<32x128xf32>, vector<16x128xf32> -> vector<16x128xf32>
    %c0_10 = arith.constant 0 : index
    %c0_11 = arith.constant 0 : index
    %9 = vector.load %arg6[%c0_10, %c0_11] : memref<1x128xf32, #tpu.memory_space<vmem>>, vector<1x128xf32>
    %10 = vector.broadcast %9 : vector<1x128xf32> to vector<16x128xf32>
    %11 = arith.addf %8, %10 : vector<16x128xf32>
    %c0_12 = arith.constant 0 : index
    %c0_13 = arith.constant 0 : index
    %12 = vector.load %arg11[%c0_12, %c0_13] : memref<16x128xf32, #tpu.memory_space<vmem>>, vector<16x128xf32>
    tpu.vector_store %arg11[%c0_12, %c0_13], %11 {strides = array<i32>} : memref<16x128xf32, #tpu.memory_space<vmem>>, vector<16x128xf32>,
    %c0_14 = arith.constant 0 : index
    %c0_15 = arith.constant 0 : index
    %13 = vector.load %arg4[%c0_14, %c0_15] : memref<32x128xf32, #tpu.memory_space<vmem>>, vector<32x128xf32>
    %c0_16 = arith.constant 0 : index
    %c0_17 = arith.constant 0 : index
    %14 = vector.load %arg7[%c0_16, %c0_17] : memref<32x128xf32, #tpu.memory_space<vmem>>, vector<32x128xf32>
    %cst_18 = arith.constant 0.000000e+00 : f32
    %15 = vector.broadcast %cst_18 : f32 to vector<2x32xf32>
    %c0_i32 = arith.constant 0 : i32
    %c8_i32 = arith.constant 8 : i32
    %16 = arith.addi %c0_i32, %c8_i32 : i32
    %c1_i32 = arith.constant 1 : i32
    %17:4 = scf.for %arg12 = %c0_i32 to %16 step %c1_i32 iter_args(%arg13 = %15, %arg14 = %15, %arg15 = %15, %arg16 = %15) -> (vector<2x32xf32>, vector<2x32xf32>, vector<2x32xf32>, vector<2x32xf32>)  : i32 {
      %c2_i32 = arith.constant 2 : i32
      %18 = arith.muli %arg12, %c2_i32 : i32
      %c7_i32 = arith.constant 7 : i32
      %19 = arith.subi %c7_i32, %arg12 : i32
      %c2_i32_20 = arith.constant 2 : i32
      %20 = arith.muli %19, %c2_i32_20 : i32
      %21 = arith.index_cast %18 : i32 to index
      %c0_21 = arith.constant 0 : index
      %22 = vector.load %arg10[%21, %c0_21] : memref<16x128xf32, #tpu.memory_space<vmem>>, vector<2x128xf32>
      %cst_22 = arith.constant dense<0.000000e+00> : vector<2x128xf32>
      %23 = tpu.matmul %arg13, %13, %cst_22 {dimension_numbers = #tpu.dot_dimension_numbers<[1], [0], [0], [1], [0, 0, 1, 1], [], []>} : vector<2x32xf32>, vector<32x128xf32>, vector<2x128xf32> -> vector<2x128xf32>
      %24 = arith.addf %22, %23 : vector<2x128xf32>
      %25 = vector.extract_strided_slice %24 {offsets = [0, 0], sizes = [2, 32], strides = [1, 1]} : vector<2x128xf32> to vector<2x32xf32>
      %26 = arith.negf %25 : vector<2x32xf32>
      %27 = math.exp %26 : vector<2x32xf32>
      %cst_23 = arith.constant 1.000000e+00 : f32
      %28 = vector.broadcast %cst_23 : f32 to vector<2x32xf32>
      %29 = arith.addf %28, %27 : vector<2x32xf32>
      %30 = arith.divf %28, %29 : vector<2x32xf32>
      %31 = vector.extract_strided_slice %24 {offsets = [0, 32], sizes = [2, 32], strides = [1, 1]} : vector<2x128xf32> to vector<2x32xf32>
      %32 = arith.negf %31 : vector<2x32xf32>
      %33 = math.exp %32 : vector<2x32xf32>
      %cst_24 = arith.constant 1.000000e+00 : f32
      %34 = vector.broadcast %cst_24 : f32 to vector<2x32xf32>
      %35 = arith.addf %34, %33 : vector<2x32xf32>
      %36 = arith.divf %34, %35 : vector<2x32xf32>
      %37 = vector.extract_strided_slice %24 {offsets = [0, 64], sizes = [2, 32], strides = [1, 1]} : vector<2x128xf32> to vector<2x32xf32>
      %38 = math.tanh %37 : vector<2x32xf32>
      %39 = vector.extract_strided_slice %24 {offsets = [0, 96], sizes = [2, 32], strides = [1, 1]} : vector<2x128xf32> to vector<2x32xf32>
      %40 = arith.negf %39 : vector<2x32xf32>
      %41 = math.exp %40 : vector<2x32xf32>
      %cst_25 = arith.constant 1.000000e+00 : f32
      %42 = vector.broadcast %cst_25 : f32 to vector<2x32xf32>
      %43 = arith.addf %42, %41 : vector<2x32xf32>
      %44 = arith.divf %42, %43 : vector<2x32xf32>
      %45 = arith.mulf %36, %arg14 : vector<2x32xf32>
      %46 = arith.mulf %30, %38 : vector<2x32xf32>
      %47 = arith.addf %45, %46 : vector<2x32xf32>
      %48 = math.tanh %47 : vector<2x32xf32>
      %49 = arith.mulf %44, %48 : vector<2x32xf32>
      %50 = arith.index_cast %20 : i32 to index
      %c0_26 = arith.constant 0 : index
      %51 = vector.load %arg11[%50, %c0_26] : memref<16x128xf32, #tpu.memory_space<vmem>>, vector<2x128xf32>
      %cst_27 = arith.constant dense<0.000000e+00> : vector<2x128xf32>
      %52 = tpu.matmul %arg15, %14, %cst_27 {dimension_numbers = #tpu.dot_dimension_numbers<[1], [0], [0], [1], [0, 0, 1, 1], [], []>} : vector<2x32xf32>, vector<32x128xf32>, vector<2x128xf32> -> vector<2x128xf32>
      %53 = arith.addf %51, %52 : vector<2x128xf32>
      %54 = vector.extract_strided_slice %53 {offsets = [0, 0], sizes = [2, 32], strides = [1, 1]} : vector<2x128xf32> to vector<2x32xf32>
      %55 = arith.negf %54 : vector<2x32xf32>
      %56 = math.exp %55 : vector<2x32xf32>
      %cst_28 = arith.constant 1.000000e+00 : f32
      %57 = vector.broadcast %cst_28 : f32 to vector<2x32xf32>
      %58 = arith.addf %57, %56 : vector<2x32xf32>
      %59 = arith.divf %57, %58 : vector<2x32xf32>
      %60 = vector.extract_strided_slice %53 {offsets = [0, 32], sizes = [2, 32], strides = [1, 1]} : vector<2x128xf32> to vector<2x32xf32>
      %61 = arith.negf %60 : vector<2x32xf32>
      %62 = math.exp %61 : vector<2x32xf32>
      %cst_29 = arith.constant 1.000000e+00 : f32
      %63 = vector.broadcast %cst_29 : f32 to vector<2x32xf32>
      %64 = arith.addf %63, %62 : vector<2x32xf32>
      %65 = arith.divf %63, %64 : vector<2x32xf32>
      %66 = vector.extract_strided_slice %53 {offsets = [0, 64], sizes = [2, 32], strides = [1, 1]} : vector<2x128xf32> to vector<2x32xf32>
      %67 = math.tanh %66 : vector<2x32xf32>
      %68 = vector.extract_strided_slice %53 {offsets = [0, 96], sizes = [2, 32], strides = [1, 1]} : vector<2x128xf32> to vector<2x32xf32>
      %69 = arith.negf %68 : vector<2x32xf32>
      %70 = math.exp %69 : vector<2x32xf32>
      %cst_30 = arith.constant 1.000000e+00 : f32
      %71 = vector.broadcast %cst_30 : f32 to vector<2x32xf32>
      %72 = arith.addf %71, %70 : vector<2x32xf32>
      %73 = arith.divf %71, %72 : vector<2x32xf32>
      %74 = arith.mulf %65, %arg16 : vector<2x32xf32>
      %75 = arith.mulf %59, %67 : vector<2x32xf32>
      %76 = arith.addf %74, %75 : vector<2x32xf32>
      %77 = math.tanh %76 : vector<2x32xf32>
      %78 = arith.mulf %73, %77 : vector<2x32xf32>
      %79 = arith.index_cast %18 : i32 to index
      %c0_31 = arith.constant 0 : index
      %80 = vector.load %arg8[%79, %c0_31] : memref<16x1xf32, #tpu.memory_space<vmem>>, vector<2x1xf32>
      %81 = arith.index_cast %20 : i32 to index
      %c0_32 = arith.constant 0 : index
      %82 = vector.load %arg8[%81, %c0_32] : memref<16x1xf32, #tpu.memory_space<vmem>>, vector<2x1xf32>
      %83 = vector.broadcast %80 : vector<2x1xf32> to vector<2x32xf32>
      %84 = arith.mulf %83, %49 : vector<2x32xf32>
      %85 = arith.index_cast %18 : i32 to index
      %c0_33 = arith.constant 0 : index
      %86 = vector.load %arg9[%85, %c0_33] : memref<16x64xf32, #tpu.memory_space<vmem>>, vector<2x32xf32>
      tpu.vector_store %arg9[%85, %c0_33], %84 {strides = array<i32>} : memref<16x64xf32, #tpu.memory_space<vmem>>, vector<2x32xf32>,
      %87 = vector.broadcast %82 : vector<2x1xf32> to vector<2x32xf32>
      %88 = arith.mulf %87, %78 : vector<2x32xf32>
      %89 = arith.index_cast %20 : i32 to index
      %c32 = arith.constant 32 : index
      %90 = vector.load %arg9[%89, %c32] : memref<16x64xf32, #tpu.memory_space<vmem>>, vector<2x32xf32>
      tpu.vector_store %arg9[%89, %c32], %88 {strides = array<i32>} : memref<16x64xf32, #tpu.memory_space<vmem>>, vector<2x32xf32>,
      %91 = vector.broadcast %80 : vector<2x1xf32> to vector<2x32xf32>
      %92 = arith.mulf %91, %49 : vector<2x32xf32>
      %cst_34 = arith.constant 1.000000e+00 : f32
      %93 = vector.broadcast %cst_34 : f32 to vector<2x1xf32>
      %94 = arith.subf %93, %80 : vector<2x1xf32>
      %95 = vector.broadcast %94 : vector<2x1xf32> to vector<2x32xf32>
      %96 = arith.mulf %95, %arg13 : vector<2x32xf32>
      %97 = arith.addf %92, %96 : vector<2x32xf32>
      %98 = vector.broadcast %80 : vector<2x1xf32> to vector<2x32xf32>
      %99 = arith.mulf %98, %47 : vector<2x32xf32>
      %cst_35 = arith.constant 1.000000e+00 : f32
      %100 = vector.broadcast %cst_35 : f32 to vector<2x1xf32>
      %101 = arith.subf %100, %80 : vector<2x1xf32>
      %102 = vector.broadcast %101 : vector<2x1xf32> to vector<2x32xf32>
      %103 = arith.mulf %102, %arg14 : vector<2x32xf32>
      %104 = arith.addf %99, %103 : vector<2x32xf32>
      %105 = vector.broadcast %82 : vector<2x1xf32> to vector<2x32xf32>
      %106 = arith.mulf %105, %78 : vector<2x32xf32>
      %cst_36 = arith.constant 1.000000e+00 : f32
      %107 = vector.broadcast %cst_36 : f32 to vector<2x1xf32>
      %108 = arith.subf %107, %82 : vector<2x1xf32>
      %109 = vector.broadcast %108 : vector<2x1xf32> to vector<2x32xf32>
      %110 = arith.mulf %109, %arg15 : vector<2x32xf32>
      %111 = arith.addf %106, %110 : vector<2x32xf32>
      %112 = vector.broadcast %82 : vector<2x1xf32> to vector<2x32xf32>
      %113 = arith.mulf %112, %76 : vector<2x32xf32>
      %cst_37 = arith.constant 1.000000e+00 : f32
      %114 = vector.broadcast %cst_37 : f32 to vector<2x1xf32>
      %115 = arith.subf %114, %82 : vector<2x1xf32>
      %116 = vector.broadcast %115 : vector<2x1xf32> to vector<2x32xf32>
      %117 = arith.mulf %116, %arg16 : vector<2x32xf32>
      %118 = arith.addf %113, %117 : vector<2x32xf32>
      scf.yield %97, %104, %111, %118 : vector<2x32xf32>, vector<2x32xf32>, vector<2x32xf32>, vector<2x32xf32>
    }
    %c8_i32_19 = arith.constant 8 : i32
    return
  }
  func.func @transform_0(%arg0: i32) -> (i32, i32) {
    %c0_i32 = arith.constant 0 : i32
    %c0_i32_0 = arith.constant 0 : i32
    %c0_i32_1 = arith.constant 0 : i32
    return %c0_i32, %c0_i32_0 : i32, i32
  }
  func.func @transform_1(%arg0: i32) -> (i32, i32) {
    %c0_i32 = arith.constant 0 : i32
    %c0_i32_0 = arith.constant 0 : i32
    %c0_i32_1 = arith.constant 0 : i32
    return %c0_i32, %c0_i32_0 : i32, i32
  }
  func.func @transform_2(%arg0: i32) -> (i32, i32) {
    %c0_i32 = arith.constant 0 : i32
    %c0_i32_0 = arith.constant 0 : i32
    %c0_i32_1 = arith.constant 0 : i32
    return %c0_i32, %c0_i32_0 : i32, i32
  }
  func.func @transform_3(%arg0: i32) -> (i32, i32) {
    %c0_i32 = arith.constant 0 : i32
    %c0_i32_0 = arith.constant 0 : i32
    %c0_i32_1 = arith.constant 0 : i32
    return %c0_i32, %c0_i32_0 : i32, i32
  }
  func.func @transform_4(%arg0: i32) -> (i32, i32) {
    %c0_i32 = arith.constant 0 : i32
    %c0_i32_0 = arith.constant 0 : i32
    %c0_i32_1 = arith.constant 0 : i32
    return %c0_i32, %c0_i32_0 : i32, i32
  }
  func.func @transform_5(%arg0: i32) -> (i32, i32) {
    %c0_i32 = arith.constant 0 : i32
    %c0_i32_0 = arith.constant 0 : i32
    %c0_i32_1 = arith.constant 0 : i32
    return %c0_i32, %c0_i32_0 : i32, i32
  }
  func.func @transform_6(%arg0: i32) -> (i32, i32) {
    %c0_i32 = arith.constant 0 : i32
    %c0_i32_0 = arith.constant 0 : i32
    %c0_i32_1 = arith.constant 0 : i32
    return %c0_i32, %c0_i32_0 : i32, i32
  }
  func.func @transform_7(%arg0: i32) -> (i32, i32) {
    %c0_i32 = arith.constant 0 : i32
    %c0_i32_0 = arith.constant 0 : i32
    %c0_i32_1 = arith.constant 0 : i32
    return %c0_i32, %c0_i32_0 : i32, i32
  }
  func.func @transform_8(%arg0: i32) -> (i32, i32) {
    %c0_i32 = arith.constant 0 : i32
    %c0_i32_0 = arith.constant 0 : i32
    %c0_i32_1 = arith.constant 0 : i32
    return %c0_i32, %c0_i32_0 : i32, i32
  }
}

module attributes {stable_mosaic.version = 11 : i64} {
  func.func @_bidaf_att_kernel(%arg0: i32, %arg1: memref<1x16x64xf32, #tpu.memory_space<vmem>>, %arg2: memref<1x64x8xf32, #tpu.memory_space<vmem>>, %arg3: memref<1x16x1xf32, #tpu.memory_space<vmem>>, %arg4: memref<1x1x8xf32, #tpu.memory_space<vmem>>, %arg5: memref<64x1xf32, #tpu.memory_space<vmem>>, %arg6: memref<1x64xf32, #tpu.memory_space<vmem>>, %arg7: memref<1x64xf32, #tpu.memory_space<vmem>>, %arg8: memref<1x1xf32, #tpu.memory_space<vmem>>, %arg9: memref<1x16x256xf32, #tpu.memory_space<vmem>>) attributes {dimension_semantics = [#tpu.dimension_semantics<parallel>], iteration_bounds = array<i64: 2>, scalar_prefetch = 0 : i64, scratch_operands = 0 : i64, tpu.core_type = #tpu.core_type<tc>, window_params = [{transform_indices = @transform_0, window_bounds = array<i64: 1, 16, 64>}, {transform_indices = @transform_1, window_bounds = array<i64: 1, 64, 8>}, {transform_indices = @transform_2, window_bounds = array<i64: 1, 16, 1>}, {transform_indices = @transform_3, window_bounds = array<i64: 1, 1, 8>}, {pipeline_mode = #tpu.pipeline_mode<synchronous>, transform_indices = @transform_4, window_bounds = array<i64: 64, 1>}, {pipeline_mode = #tpu.pipeline_mode<synchronous>, transform_indices = @transform_5, window_bounds = array<i64: 1, 64>}, {pipeline_mode = #tpu.pipeline_mode<synchronous>, transform_indices = @transform_6, window_bounds = array<i64: 1, 64>}, {pipeline_mode = #tpu.pipeline_mode<synchronous>, transform_indices = @transform_7, window_bounds = array<i64: 1, 1>}, {transform_indices = @transform_8, window_bounds = array<i64: 1, 16, 256>}]} {
    %c0 = arith.constant 0 : index
    %c0_0 = arith.constant 0 : index
    %c0_1 = arith.constant 0 : index
    %0 = vector.load %arg1[%c0, %c0_0, %c0_1] : memref<1x16x64xf32, #tpu.memory_space<vmem>>, vector<1x16x64xf32>
    %1 = vector.shape_cast %0 : vector<1x16x64xf32> to vector<16x64xf32>
    %c0_2 = arith.constant 0 : index
    %c0_3 = arith.constant 0 : index
    %c0_4 = arith.constant 0 : index
    %2 = vector.load %arg2[%c0_2, %c0_3, %c0_4] : memref<1x64x8xf32, #tpu.memory_space<vmem>>, vector<1x64x8xf32>
    %3 = vector.shape_cast %2 : vector<1x64x8xf32> to vector<64x8xf32>
    %c0_5 = arith.constant 0 : index
    %c0_6 = arith.constant 0 : index
    %c0_7 = arith.constant 0 : index
    %4 = vector.load %arg3[%c0_5, %c0_6, %c0_7] : memref<1x16x1xf32, #tpu.memory_space<vmem>>, vector<1x16x1xf32>
    %5 = vector.shape_cast %4 : vector<1x16x1xf32> to vector<16x1xf32>
    %c0_8 = arith.constant 0 : index
    %c0_9 = arith.constant 0 : index
    %c0_10 = arith.constant 0 : index
    %6 = vector.load %arg4[%c0_8, %c0_9, %c0_10] : memref<1x1x8xf32, #tpu.memory_space<vmem>>, vector<1x1x8xf32>
    %7 = vector.shape_cast %6 : vector<1x1x8xf32> to vector<1x8xf32>
    %c0_11 = arith.constant 0 : index
    %c0_12 = arith.constant 0 : index
    %8 = vector.load %arg5[%c0_11, %c0_12] : memref<64x1xf32, #tpu.memory_space<vmem>>, vector<64x1xf32>
    %cst = arith.constant dense<0.000000e+00> : vector<16x1xf32>
    %9 = tpu.matmul %1, %8, %cst {dimension_numbers = #tpu.dot_dimension_numbers<[1], [0], [0], [1], [0, 0, 1, 1], [], []>} : vector<16x64xf32>, vector<64x1xf32>, vector<16x1xf32> -> vector<16x1xf32>
    %c0_13 = arith.constant 0 : index
    %c0_14 = arith.constant 0 : index
    %10 = vector.load %arg6[%c0_13, %c0_14] : memref<1x64xf32, #tpu.memory_space<vmem>>, vector<1x64xf32>
    %cst_15 = arith.constant dense<0.000000e+00> : vector<1x8xf32>
    %11 = tpu.matmul %10, %3, %cst_15 {dimension_numbers = #tpu.dot_dimension_numbers<[1], [0], [0], [1], [0, 0, 1, 1], [], []>} : vector<1x64xf32>, vector<64x8xf32>, vector<1x8xf32> -> vector<1x8xf32>
    %c0_16 = arith.constant 0 : index
    %c0_17 = arith.constant 0 : index
    %12 = vector.load %arg7[%c0_16, %c0_17] : memref<1x64xf32, #tpu.memory_space<vmem>>, vector<1x64xf32>
    %13 = vector.broadcast %12 : vector<1x64xf32> to vector<16x64xf32>
    %14 = arith.mulf %1, %13 : vector<16x64xf32>
    %cst_18 = arith.constant dense<0.000000e+00> : vector<16x8xf32>
    %15 = tpu.matmul %14, %3, %cst_18 {dimension_numbers = #tpu.dot_dimension_numbers<[1], [0], [0], [1], [0, 0, 1, 1], [], []>} : vector<16x64xf32>, vector<64x8xf32>, vector<16x8xf32> -> vector<16x8xf32>
    %16 = vector.broadcast %9 : vector<16x1xf32> to vector<16x8xf32>
    %17 = vector.broadcast %11 : vector<1x8xf32> to vector<16x8xf32>
    %18 = arith.addf %16, %17 : vector<16x8xf32>
    %19 = arith.addf %18, %15 : vector<16x8xf32>
    %c0_19 = arith.constant 0 : index
    %c0_20 = arith.constant 0 : index
    %20 = vector.load %arg8[%c0_19, %c0_20] : memref<1x1xf32, #tpu.memory_space<vmem>>, vector<1x1xf32>
    %21 = vector.broadcast %20 : vector<1x1xf32> to vector<16x8xf32>
    %22 = arith.addf %19, %21 : vector<16x8xf32>
    %23 = vector.broadcast %7 : vector<1x8xf32> to vector<16x8xf32>
    %24 = arith.mulf %23, %22 : vector<16x8xf32>
    %cst_21 = arith.constant 1.000000e+00 : f32
    %25 = vector.broadcast %cst_21 : f32 to vector<1x8xf32>
    %26 = arith.subf %25, %7 : vector<1x8xf32>
    %cst_22 = arith.constant -1.000000e+30 : f32
    %27 = vector.broadcast %cst_22 : f32 to vector<1x8xf32>
    %28 = arith.mulf %26, %27 : vector<1x8xf32>
    %29 = vector.broadcast %28 : vector<1x8xf32> to vector<16x8xf32>
    %30 = arith.addf %24, %29 : vector<16x8xf32>
    %cst_23 = arith.constant dense<0xFF800000> : vector<16xf32>
    %31 = vector.multi_reduction <maximumf>, %30, %cst_23 [1] : vector<16x8xf32> to vector<16xf32>
    %32 = vector.shape_cast %31 : vector<16xf32> to vector<16x1xf32>
    %33 = vector.broadcast %32 : vector<16x1xf32> to vector<16x8xf32>
    %34 = arith.subf %30, %33 : vector<16x8xf32>
    %35 = math.exp %34 : vector<16x8xf32>
    %cst_24 = arith.constant dense<0.000000e+00> : vector<16xf32>
    %36 = vector.multi_reduction <add>, %35, %cst_24 [1] : vector<16x8xf32> to vector<16xf32>
    %37 = vector.shape_cast %36 : vector<16xf32> to vector<16x1xf32>
    %38 = vector.broadcast %37 : vector<16x1xf32> to vector<16x8xf32>
    %39 = arith.divf %35, %38 : vector<16x8xf32>
    %40 = vector.broadcast %5 : vector<16x1xf32> to vector<16x8xf32>
    %41 = arith.mulf %40, %22 : vector<16x8xf32>
    %cst_25 = arith.constant 1.000000e+00 : f32
    %42 = vector.broadcast %cst_25 : f32 to vector<16x1xf32>
    %43 = arith.subf %42, %5 : vector<16x1xf32>
    %cst_26 = arith.constant -1.000000e+30 : f32
    %44 = vector.broadcast %cst_26 : f32 to vector<16x1xf32>
    %45 = arith.mulf %43, %44 : vector<16x1xf32>
    %46 = vector.broadcast %45 : vector<16x1xf32> to vector<16x8xf32>
    %47 = arith.addf %41, %46 : vector<16x8xf32>
    %cst_27 = arith.constant dense<0xFF800000> : vector<8xf32>
    %48 = vector.multi_reduction <maximumf>, %47, %cst_27 [0] : vector<16x8xf32> to vector<8xf32>
    %49 = vector.shape_cast %48 : vector<8xf32> to vector<1x8xf32>
    %50 = vector.broadcast %49 : vector<1x8xf32> to vector<16x8xf32>
    %51 = arith.subf %47, %50 : vector<16x8xf32>
    %52 = math.exp %51 : vector<16x8xf32>
    %cst_28 = arith.constant dense<0.000000e+00> : vector<8xf32>
    %53 = vector.multi_reduction <add>, %52, %cst_28 [0] : vector<16x8xf32> to vector<8xf32>
    %54 = vector.shape_cast %53 : vector<8xf32> to vector<1x8xf32>
    %55 = vector.broadcast %54 : vector<1x8xf32> to vector<16x8xf32>
    %56 = arith.divf %52, %55 : vector<16x8xf32>
    %cst_29 = arith.constant dense<0.000000e+00> : vector<16x64xf32>
    %57 = tpu.matmul %39, %3, %cst_29 {dimension_numbers = #tpu.dot_dimension_numbers<[1], [1], [0], [0], [0, 0, 1, 0], [], []>} : vector<16x8xf32>, vector<64x8xf32>, vector<16x64xf32> -> vector<16x64xf32>
    %cst_30 = arith.constant dense<0.000000e+00> : vector<8x64xf32>
    %58 = tpu.matmul %56, %1, %cst_30 {dimension_numbers = #tpu.dot_dimension_numbers<[0], [0], [1], [1], [0, 1, 1, 1], [], []>} : vector<16x8xf32>, vector<16x64xf32>, vector<8x64xf32> -> vector<8x64xf32>
    %cst_31 = arith.constant dense<0.000000e+00> : vector<16x64xf32>
    %59 = tpu.matmul %39, %58, %cst_31 {dimension_numbers = #tpu.dot_dimension_numbers<[1], [0], [0], [1], [0, 0, 1, 1], [], []>} : vector<16x8xf32>, vector<8x64xf32>, vector<16x64xf32> -> vector<16x64xf32>
    %c0_32 = arith.constant 0 : index
    %c0_33 = arith.constant 0 : index
    %c0_34 = arith.constant 0 : index
    %60 = vector.load %arg9[%c0_32, %c0_33, %c0_34] : memref<1x16x256xf32, #tpu.memory_space<vmem>>, vector<1x16x64xf32>
    %61 = vector.shape_cast %60 : vector<1x16x64xf32> to vector<16x64xf32>
    %62 = vector.shape_cast %1 : vector<16x64xf32> to vector<1x16x64xf32>
    tpu.vector_store %arg9[%c0_32, %c0_33, %c0_34], %62 {strides = array<i32>} : memref<1x16x256xf32, #tpu.memory_space<vmem>>, vector<1x16x64xf32>,
    %c0_35 = arith.constant 0 : index
    %c0_36 = arith.constant 0 : index
    %c64 = arith.constant 64 : index
    %63 = vector.load %arg9[%c0_35, %c0_36, %c64] : memref<1x16x256xf32, #tpu.memory_space<vmem>>, vector<1x16x64xf32>
    %64 = vector.shape_cast %63 : vector<1x16x64xf32> to vector<16x64xf32>
    %65 = vector.shape_cast %57 : vector<16x64xf32> to vector<1x16x64xf32>
    tpu.vector_store %arg9[%c0_35, %c0_36, %c64], %65 {strides = array<i32>} : memref<1x16x256xf32, #tpu.memory_space<vmem>>, vector<1x16x64xf32>,
    %66 = arith.mulf %1, %57 : vector<16x64xf32>
    %c0_37 = arith.constant 0 : index
    %c0_38 = arith.constant 0 : index
    %c128 = arith.constant 128 : index
    %67 = vector.load %arg9[%c0_37, %c0_38, %c128] : memref<1x16x256xf32, #tpu.memory_space<vmem>>, vector<1x16x64xf32>
    %68 = vector.shape_cast %67 : vector<1x16x64xf32> to vector<16x64xf32>
    %69 = vector.shape_cast %66 : vector<16x64xf32> to vector<1x16x64xf32>
    tpu.vector_store %arg9[%c0_37, %c0_38, %c128], %69 {strides = array<i32>} : memref<1x16x256xf32, #tpu.memory_space<vmem>>, vector<1x16x64xf32>,
    %70 = arith.mulf %1, %59 : vector<16x64xf32>
    %c0_39 = arith.constant 0 : index
    %c0_40 = arith.constant 0 : index
    %c192 = arith.constant 192 : index
    %71 = vector.load %arg9[%c0_39, %c0_40, %c192] : memref<1x16x256xf32, #tpu.memory_space<vmem>>, vector<1x16x64xf32>
    %72 = vector.shape_cast %71 : vector<1x16x64xf32> to vector<16x64xf32>
    %73 = vector.shape_cast %70 : vector<16x64xf32> to vector<1x16x64xf32>
    tpu.vector_store %arg9[%c0_39, %c0_40, %c192], %73 {strides = array<i32>} : memref<1x16x256xf32, #tpu.memory_space<vmem>>, vector<1x16x64xf32>,
    return
  }
  func.func @transform_0(%arg0: i32) -> (i32, i32, i32) {
    %c0_i32 = arith.constant 0 : i32
    %c0_i32_0 = arith.constant 0 : i32
    %c0_i32_1 = arith.constant 0 : i32
    return %arg0, %c0_i32, %c0_i32_0 : i32, i32, i32
  }
  func.func @transform_1(%arg0: i32) -> (i32, i32, i32) {
    %c0_i32 = arith.constant 0 : i32
    %c0_i32_0 = arith.constant 0 : i32
    %c0_i32_1 = arith.constant 0 : i32
    return %arg0, %c0_i32, %c0_i32_0 : i32, i32, i32
  }
  func.func @transform_2(%arg0: i32) -> (i32, i32, i32) {
    %c0_i32 = arith.constant 0 : i32
    %c0_i32_0 = arith.constant 0 : i32
    %c0_i32_1 = arith.constant 0 : i32
    return %arg0, %c0_i32, %c0_i32_0 : i32, i32, i32
  }
  func.func @transform_3(%arg0: i32) -> (i32, i32, i32) {
    %c0_i32 = arith.constant 0 : i32
    %c0_i32_0 = arith.constant 0 : i32
    %c0_i32_1 = arith.constant 0 : i32
    return %arg0, %c0_i32, %c0_i32_0 : i32, i32, i32
  }
  func.func @transform_4(%arg0: i32) -> (i32, i32) {
    %c0_i32 = arith.constant 0 : i32
    %c0_i32_0 = arith.constant 0 : i32
    %c0_i32_1 = arith.constant 0 : i32
    return %c0_i32, %c0_i32_0 : i32, i32
  }
  func.func @transform_5(%arg0: i32) -> (i32, i32) {
    %c0_i32 = arith.constant 0 : i32
    %c0_i32_0 = arith.constant 0 : i32
    %c0_i32_1 = arith.constant 0 : i32
    return %c0_i32, %c0_i32_0 : i32, i32
  }
  func.func @transform_6(%arg0: i32) -> (i32, i32) {
    %c0_i32 = arith.constant 0 : i32
    %c0_i32_0 = arith.constant 0 : i32
    %c0_i32_1 = arith.constant 0 : i32
    return %c0_i32, %c0_i32_0 : i32, i32
  }
  func.func @transform_7(%arg0: i32) -> (i32, i32) {
    %c0_i32 = arith.constant 0 : i32
    %c0_i32_0 = arith.constant 0 : i32
    %c0_i32_1 = arith.constant 0 : i32
    return %c0_i32, %c0_i32_0 : i32, i32
  }
  func.func @transform_8(%arg0: i32) -> (i32, i32, i32) {
    %c0_i32 = arith.constant 0 : i32
    %c0_i32_0 = arith.constant 0 : i32
    %c0_i32_1 = arith.constant 0 : i32
    return %arg0, %c0_i32, %c0_i32_0 : i32, i32, i32
  }
}

module attributes {stable_mosaic.version = 11 : i64} {
  func.func @_bilstm_kernel(%arg0: i32, %arg1: memref<32x64xf32, #tpu.memory_space<vmem>>, %arg2: memref<64x128xf32, #tpu.memory_space<vmem>>, %arg3: memref<1x128xf32, #tpu.memory_space<vmem>>, %arg4: memref<32x128xf32, #tpu.memory_space<vmem>>, %arg5: memref<64x128xf32, #tpu.memory_space<vmem>>, %arg6: memref<1x128xf32, #tpu.memory_space<vmem>>, %arg7: memref<32x128xf32, #tpu.memory_space<vmem>>, %arg8: memref<32x1xf32, #tpu.memory_space<vmem>>, %arg9: memref<32x64xf32, #tpu.memory_space<vmem>>, %arg10: memref<32x128xf32, #tpu.memory_space<vmem>>, %arg11: memref<32x128xf32, #tpu.memory_space<vmem>>) attributes {dimension_semantics = [#tpu.dimension_semantics<arbitrary>], iteration_bounds = array<i64: 1>, scalar_prefetch = 0 : i64, scratch_operands = 2 : i64, tpu.core_type = #tpu.core_type<tc>, window_params = [{pipeline_mode = #tpu.pipeline_mode<synchronous>, transform_indices = @transform_0, window_bounds = array<i64: 32, 64>}, {pipeline_mode = #tpu.pipeline_mode<synchronous>, transform_indices = @transform_1, window_bounds = array<i64: 64, 128>}, {pipeline_mode = #tpu.pipeline_mode<synchronous>, transform_indices = @transform_2, window_bounds = array<i64: 1, 128>}, {pipeline_mode = #tpu.pipeline_mode<synchronous>, transform_indices = @transform_3, window_bounds = array<i64: 32, 128>}, {pipeline_mode = #tpu.pipeline_mode<synchronous>, transform_indices = @transform_4, window_bounds = array<i64: 64, 128>}, {pipeline_mode = #tpu.pipeline_mode<synchronous>, transform_indices = @transform_5, window_bounds = array<i64: 1, 128>}, {pipeline_mode = #tpu.pipeline_mode<synchronous>, transform_indices = @transform_6, window_bounds = array<i64: 32, 128>}, {pipeline_mode = #tpu.pipeline_mode<synchronous>, transform_indices = @transform_7, window_bounds = array<i64: 32, 1>}, {pipeline_mode = #tpu.pipeline_mode<synchronous>, transform_indices = @transform_8, window_bounds = array<i64: 32, 64>}]} {
    %c0 = arith.constant 0 : index
    %c0_0 = arith.constant 0 : index
    %0 = vector.load %arg1[%c0, %c0_0] : memref<32x64xf32, #tpu.memory_space<vmem>>, vector<32x64xf32>
    %c0_1 = arith.constant 0 : index
    %c0_2 = arith.constant 0 : index
    %1 = vector.load %arg2[%c0_1, %c0_2] : memref<64x128xf32, #tpu.memory_space<vmem>>, vector<64x128xf32>
    %cst = arith.constant dense<0.000000e+00> : vector<32x128xf32>
    %2 = tpu.matmul %0, %1, %cst {dimension_numbers = #tpu.dot_dimension_numbers<[1], [0], [0], [1], [0, 0, 1, 1], [], []>} : vector<32x64xf32>, vector<64x128xf32>, vector<32x128xf32> -> vector<32x128xf32>
    %c0_3 = arith.constant 0 : index
    %c0_4 = arith.constant 0 : index
    %3 = vector.load %arg3[%c0_3, %c0_4] : memref<1x128xf32, #tpu.memory_space<vmem>>, vector<1x128xf32>
    %4 = vector.broadcast %3 : vector<1x128xf32> to vector<32x128xf32>
    %5 = arith.addf %2, %4 : vector<32x128xf32>
    %c0_5 = arith.constant 0 : index
    %c0_6 = arith.constant 0 : index
    %6 = vector.load %arg10[%c0_5, %c0_6] : memref<32x128xf32, #tpu.memory_space<vmem>>, vector<32x128xf32>
    tpu.vector_store %arg10[%c0_5, %c0_6], %5 {strides = array<i32>} : memref<32x128xf32, #tpu.memory_space<vmem>>, vector<32x128xf32>,
    %c0_7 = arith.constant 0 : index
    %c0_8 = arith.constant 0 : index
    %7 = vector.load %arg5[%c0_7, %c0_8] : memref<64x128xf32, #tpu.memory_space<vmem>>, vector<64x128xf32>
    %cst_9 = arith.constant dense<0.000000e+00> : vector<32x128xf32>
    %8 = tpu.matmul %0, %7, %cst_9 {dimension_numbers = #tpu.dot_dimension_numbers<[1], [0], [0], [1], [0, 0, 1, 1], [], []>} : vector<32x64xf32>, vector<64x128xf32>, vector<32x128xf32> -> vector<32x128xf32>
    %c0_10 = arith.constant 0 : index
    %c0_11 = arith.constant 0 : index
    %9 = vector.load %arg6[%c0_10, %c0_11] : memref<1x128xf32, #tpu.memory_space<vmem>>, vector<1x128xf32>
    %10 = vector.broadcast %9 : vector<1x128xf32> to vector<32x128xf32>
    %11 = arith.addf %8, %10 : vector<32x128xf32>
    %c0_12 = arith.constant 0 : index
    %c0_13 = arith.constant 0 : index
    %12 = vector.load %arg11[%c0_12, %c0_13] : memref<32x128xf32, #tpu.memory_space<vmem>>, vector<32x128xf32>
    tpu.vector_store %arg11[%c0_12, %c0_13], %11 {strides = array<i32>} : memref<32x128xf32, #tpu.memory_space<vmem>>, vector<32x128xf32>,
    %c0_14 = arith.constant 0 : index
    %c0_15 = arith.constant 0 : index
    %13 = vector.load %arg4[%c0_14, %c0_15] : memref<32x128xf32, #tpu.memory_space<vmem>>, vector<32x128xf32>
    %c0_16 = arith.constant 0 : index
    %c0_17 = arith.constant 0 : index
    %14 = vector.load %arg7[%c0_16, %c0_17] : memref<32x128xf32, #tpu.memory_space<vmem>>, vector<32x128xf32>
    %cst_18 = arith.constant 0.000000e+00 : f32
    %15 = vector.broadcast %cst_18 : f32 to vector<2x32xf32>
    %c0_i32 = arith.constant 0 : i32
    %c16_i32 = arith.constant 16 : i32
    %16 = arith.addi %c0_i32, %c16_i32 : i32
    %c1_i32 = arith.constant 1 : i32
    %17:4 = scf.for %arg12 = %c0_i32 to %16 step %c1_i32 iter_args(%arg13 = %15, %arg14 = %15, %arg15 = %15, %arg16 = %15) -> (vector<2x32xf32>, vector<2x32xf32>, vector<2x32xf32>, vector<2x32xf32>)  : i32 {
      %c2_i32 = arith.constant 2 : i32
      %18 = arith.muli %arg12, %c2_i32 : i32
      %c15_i32 = arith.constant 15 : i32
      %19 = arith.subi %c15_i32, %arg12 : i32
      %c2_i32_20 = arith.constant 2 : i32
      %20 = arith.muli %19, %c2_i32_20 : i32
      %21 = arith.index_cast %18 : i32 to index
      %c0_21 = arith.constant 0 : index
      %22 = vector.load %arg10[%21, %c0_21] : memref<32x128xf32, #tpu.memory_space<vmem>>, vector<2x128xf32>
      %cst_22 = arith.constant dense<0.000000e+00> : vector<2x128xf32>
      %23 = tpu.matmul %arg13, %13, %cst_22 {dimension_numbers = #tpu.dot_dimension_numbers<[1], [0], [0], [1], [0, 0, 1, 1], [], []>} : vector<2x32xf32>, vector<32x128xf32>, vector<2x128xf32> -> vector<2x128xf32>
      %24 = arith.addf %22, %23 : vector<2x128xf32>
      %25 = vector.extract_strided_slice %24 {offsets = [0, 0], sizes = [2, 32], strides = [1, 1]} : vector<2x128xf32> to vector<2x32xf32>
      %26 = arith.negf %25 : vector<2x32xf32>
      %27 = math.exp %26 : vector<2x32xf32>
      %cst_23 = arith.constant 1.000000e+00 : f32
      %28 = vector.broadcast %cst_23 : f32 to vector<2x32xf32>
      %29 = arith.addf %28, %27 : vector<2x32xf32>
      %30 = arith.divf %28, %29 : vector<2x32xf32>
      %31 = vector.extract_strided_slice %24 {offsets = [0, 32], sizes = [2, 32], strides = [1, 1]} : vector<2x128xf32> to vector<2x32xf32>
      %32 = arith.negf %31 : vector<2x32xf32>
      %33 = math.exp %32 : vector<2x32xf32>
      %cst_24 = arith.constant 1.000000e+00 : f32
      %34 = vector.broadcast %cst_24 : f32 to vector<2x32xf32>
      %35 = arith.addf %34, %33 : vector<2x32xf32>
      %36 = arith.divf %34, %35 : vector<2x32xf32>
      %37 = vector.extract_strided_slice %24 {offsets = [0, 64], sizes = [2, 32], strides = [1, 1]} : vector<2x128xf32> to vector<2x32xf32>
      %38 = math.tanh %37 : vector<2x32xf32>
      %39 = vector.extract_strided_slice %24 {offsets = [0, 96], sizes = [2, 32], strides = [1, 1]} : vector<2x128xf32> to vector<2x32xf32>
      %40 = arith.negf %39 : vector<2x32xf32>
      %41 = math.exp %40 : vector<2x32xf32>
      %cst_25 = arith.constant 1.000000e+00 : f32
      %42 = vector.broadcast %cst_25 : f32 to vector<2x32xf32>
      %43 = arith.addf %42, %41 : vector<2x32xf32>
      %44 = arith.divf %42, %43 : vector<2x32xf32>
      %45 = arith.mulf %36, %arg14 : vector<2x32xf32>
      %46 = arith.mulf %30, %38 : vector<2x32xf32>
      %47 = arith.addf %45, %46 : vector<2x32xf32>
      %48 = math.tanh %47 : vector<2x32xf32>
      %49 = arith.mulf %44, %48 : vector<2x32xf32>
      %50 = arith.index_cast %20 : i32 to index
      %c0_26 = arith.constant 0 : index
      %51 = vector.load %arg11[%50, %c0_26] : memref<32x128xf32, #tpu.memory_space<vmem>>, vector<2x128xf32>
      %cst_27 = arith.constant dense<0.000000e+00> : vector<2x128xf32>
      %52 = tpu.matmul %arg15, %14, %cst_27 {dimension_numbers = #tpu.dot_dimension_numbers<[1], [0], [0], [1], [0, 0, 1, 1], [], []>} : vector<2x32xf32>, vector<32x128xf32>, vector<2x128xf32> -> vector<2x128xf32>
      %53 = arith.addf %51, %52 : vector<2x128xf32>
      %54 = vector.extract_strided_slice %53 {offsets = [0, 0], sizes = [2, 32], strides = [1, 1]} : vector<2x128xf32> to vector<2x32xf32>
      %55 = arith.negf %54 : vector<2x32xf32>
      %56 = math.exp %55 : vector<2x32xf32>
      %cst_28 = arith.constant 1.000000e+00 : f32
      %57 = vector.broadcast %cst_28 : f32 to vector<2x32xf32>
      %58 = arith.addf %57, %56 : vector<2x32xf32>
      %59 = arith.divf %57, %58 : vector<2x32xf32>
      %60 = vector.extract_strided_slice %53 {offsets = [0, 32], sizes = [2, 32], strides = [1, 1]} : vector<2x128xf32> to vector<2x32xf32>
      %61 = arith.negf %60 : vector<2x32xf32>
      %62 = math.exp %61 : vector<2x32xf32>
      %cst_29 = arith.constant 1.000000e+00 : f32
      %63 = vector.broadcast %cst_29 : f32 to vector<2x32xf32>
      %64 = arith.addf %63, %62 : vector<2x32xf32>
      %65 = arith.divf %63, %64 : vector<2x32xf32>
      %66 = vector.extract_strided_slice %53 {offsets = [0, 64], sizes = [2, 32], strides = [1, 1]} : vector<2x128xf32> to vector<2x32xf32>
      %67 = math.tanh %66 : vector<2x32xf32>
      %68 = vector.extract_strided_slice %53 {offsets = [0, 96], sizes = [2, 32], strides = [1, 1]} : vector<2x128xf32> to vector<2x32xf32>
      %69 = arith.negf %68 : vector<2x32xf32>
      %70 = math.exp %69 : vector<2x32xf32>
      %cst_30 = arith.constant 1.000000e+00 : f32
      %71 = vector.broadcast %cst_30 : f32 to vector<2x32xf32>
      %72 = arith.addf %71, %70 : vector<2x32xf32>
      %73 = arith.divf %71, %72 : vector<2x32xf32>
      %74 = arith.mulf %65, %arg16 : vector<2x32xf32>
      %75 = arith.mulf %59, %67 : vector<2x32xf32>
      %76 = arith.addf %74, %75 : vector<2x32xf32>
      %77 = math.tanh %76 : vector<2x32xf32>
      %78 = arith.mulf %73, %77 : vector<2x32xf32>
      %79 = arith.index_cast %18 : i32 to index
      %c0_31 = arith.constant 0 : index
      %80 = vector.load %arg8[%79, %c0_31] : memref<32x1xf32, #tpu.memory_space<vmem>>, vector<2x1xf32>
      %81 = arith.index_cast %20 : i32 to index
      %c0_32 = arith.constant 0 : index
      %82 = vector.load %arg8[%81, %c0_32] : memref<32x1xf32, #tpu.memory_space<vmem>>, vector<2x1xf32>
      %83 = vector.broadcast %80 : vector<2x1xf32> to vector<2x32xf32>
      %84 = arith.mulf %83, %49 : vector<2x32xf32>
      %85 = arith.index_cast %18 : i32 to index
      %c0_33 = arith.constant 0 : index
      %86 = vector.load %arg9[%85, %c0_33] : memref<32x64xf32, #tpu.memory_space<vmem>>, vector<2x32xf32>
      tpu.vector_store %arg9[%85, %c0_33], %84 {strides = array<i32>} : memref<32x64xf32, #tpu.memory_space<vmem>>, vector<2x32xf32>,
      %87 = vector.broadcast %82 : vector<2x1xf32> to vector<2x32xf32>
      %88 = arith.mulf %87, %78 : vector<2x32xf32>
      %89 = arith.index_cast %20 : i32 to index
      %c32 = arith.constant 32 : index
      %90 = vector.load %arg9[%89, %c32] : memref<32x64xf32, #tpu.memory_space<vmem>>, vector<2x32xf32>
      tpu.vector_store %arg9[%89, %c32], %88 {strides = array<i32>} : memref<32x64xf32, #tpu.memory_space<vmem>>, vector<2x32xf32>,
      %91 = vector.broadcast %80 : vector<2x1xf32> to vector<2x32xf32>
      %92 = arith.mulf %91, %49 : vector<2x32xf32>
      %cst_34 = arith.constant 1.000000e+00 : f32
      %93 = vector.broadcast %cst_34 : f32 to vector<2x1xf32>
      %94 = arith.subf %93, %80 : vector<2x1xf32>
      %95 = vector.broadcast %94 : vector<2x1xf32> to vector<2x32xf32>
      %96 = arith.mulf %95, %arg13 : vector<2x32xf32>
      %97 = arith.addf %92, %96 : vector<2x32xf32>
      %98 = vector.broadcast %80 : vector<2x1xf32> to vector<2x32xf32>
      %99 = arith.mulf %98, %47 : vector<2x32xf32>
      %cst_35 = arith.constant 1.000000e+00 : f32
      %100 = vector.broadcast %cst_35 : f32 to vector<2x1xf32>
      %101 = arith.subf %100, %80 : vector<2x1xf32>
      %102 = vector.broadcast %101 : vector<2x1xf32> to vector<2x32xf32>
      %103 = arith.mulf %102, %arg14 : vector<2x32xf32>
      %104 = arith.addf %99, %103 : vector<2x32xf32>
      %105 = vector.broadcast %82 : vector<2x1xf32> to vector<2x32xf32>
      %106 = arith.mulf %105, %78 : vector<2x32xf32>
      %cst_36 = arith.constant 1.000000e+00 : f32
      %107 = vector.broadcast %cst_36 : f32 to vector<2x1xf32>
      %108 = arith.subf %107, %82 : vector<2x1xf32>
      %109 = vector.broadcast %108 : vector<2x1xf32> to vector<2x32xf32>
      %110 = arith.mulf %109, %arg15 : vector<2x32xf32>
      %111 = arith.addf %106, %110 : vector<2x32xf32>
      %112 = vector.broadcast %82 : vector<2x1xf32> to vector<2x32xf32>
      %113 = arith.mulf %112, %76 : vector<2x32xf32>
      %cst_37 = arith.constant 1.000000e+00 : f32
      %114 = vector.broadcast %cst_37 : f32 to vector<2x1xf32>
      %115 = arith.subf %114, %82 : vector<2x1xf32>
      %116 = vector.broadcast %115 : vector<2x1xf32> to vector<2x32xf32>
      %117 = arith.mulf %116, %arg16 : vector<2x32xf32>
      %118 = arith.addf %113, %117 : vector<2x32xf32>
      scf.yield %97, %104, %111, %118 : vector<2x32xf32>, vector<2x32xf32>, vector<2x32xf32>, vector<2x32xf32>
    }
    %c16_i32_19 = arith.constant 16 : i32
    return
  }
  func.func @transform_0(%arg0: i32) -> (i32, i32) {
    %c0_i32 = arith.constant 0 : i32
    %c0_i32_0 = arith.constant 0 : i32
    %c0_i32_1 = arith.constant 0 : i32
    return %c0_i32, %c0_i32_0 : i32, i32
  }
  func.func @transform_1(%arg0: i32) -> (i32, i32) {
    %c0_i32 = arith.constant 0 : i32
    %c0_i32_0 = arith.constant 0 : i32
    %c0_i32_1 = arith.constant 0 : i32
    return %c0_i32, %c0_i32_0 : i32, i32
  }
  func.func @transform_2(%arg0: i32) -> (i32, i32) {
    %c0_i32 = arith.constant 0 : i32
    %c0_i32_0 = arith.constant 0 : i32
    %c0_i32_1 = arith.constant 0 : i32
    return %c0_i32, %c0_i32_0 : i32, i32
  }
  func.func @transform_3(%arg0: i32) -> (i32, i32) {
    %c0_i32 = arith.constant 0 : i32
    %c0_i32_0 = arith.constant 0 : i32
    %c0_i32_1 = arith.constant 0 : i32
    return %c0_i32, %c0_i32_0 : i32, i32
  }
  func.func @transform_4(%arg0: i32) -> (i32, i32) {
    %c0_i32 = arith.constant 0 : i32
    %c0_i32_0 = arith.constant 0 : i32
    %c0_i32_1 = arith.constant 0 : i32
    return %c0_i32, %c0_i32_0 : i32, i32
  }
  func.func @transform_5(%arg0: i32) -> (i32, i32) {
    %c0_i32 = arith.constant 0 : i32
    %c0_i32_0 = arith.constant 0 : i32
    %c0_i32_1 = arith.constant 0 : i32
    return %c0_i32, %c0_i32_0 : i32, i32
  }
  func.func @transform_6(%arg0: i32) -> (i32, i32) {
    %c0_i32 = arith.constant 0 : i32
    %c0_i32_0 = arith.constant 0 : i32
    %c0_i32_1 = arith.constant 0 : i32
    return %c0_i32, %c0_i32_0 : i32, i32
  }
  func.func @transform_7(%arg0: i32) -> (i32, i32) {
    %c0_i32 = arith.constant 0 : i32
    %c0_i32_0 = arith.constant 0 : i32
    %c0_i32_1 = arith.constant 0 : i32
    return %c0_i32, %c0_i32_0 : i32, i32
  }
  func.func @transform_8(%arg0: i32) -> (i32, i32) {
    %c0_i32 = arith.constant 0 : i32
    %c0_i32_0 = arith.constant 0 : i32
    %c0_i32_1 = arith.constant 0 : i32
    return %c0_i32, %c0_i32_0 : i32, i32
  }
}

module attributes {stable_mosaic.version = 11 : i64} {
  func.func @_bilstm_kernel(%arg0: i32, %arg1: memref<32x256xf32, #tpu.memory_space<vmem>>, %arg2: memref<256x128xf32, #tpu.memory_space<vmem>>, %arg3: memref<1x128xf32, #tpu.memory_space<vmem>>, %arg4: memref<32x128xf32, #tpu.memory_space<vmem>>, %arg5: memref<256x128xf32, #tpu.memory_space<vmem>>, %arg6: memref<1x128xf32, #tpu.memory_space<vmem>>, %arg7: memref<32x128xf32, #tpu.memory_space<vmem>>, %arg8: memref<32x1xf32, #tpu.memory_space<vmem>>, %arg9: memref<32x64xf32, #tpu.memory_space<vmem>>, %arg10: memref<32x128xf32, #tpu.memory_space<vmem>>, %arg11: memref<32x128xf32, #tpu.memory_space<vmem>>) attributes {dimension_semantics = [#tpu.dimension_semantics<arbitrary>], iteration_bounds = array<i64: 1>, scalar_prefetch = 0 : i64, scratch_operands = 2 : i64, tpu.core_type = #tpu.core_type<tc>, window_params = [{pipeline_mode = #tpu.pipeline_mode<synchronous>, transform_indices = @transform_0, window_bounds = array<i64: 32, 256>}, {pipeline_mode = #tpu.pipeline_mode<synchronous>, transform_indices = @transform_1, window_bounds = array<i64: 256, 128>}, {pipeline_mode = #tpu.pipeline_mode<synchronous>, transform_indices = @transform_2, window_bounds = array<i64: 1, 128>}, {pipeline_mode = #tpu.pipeline_mode<synchronous>, transform_indices = @transform_3, window_bounds = array<i64: 32, 128>}, {pipeline_mode = #tpu.pipeline_mode<synchronous>, transform_indices = @transform_4, window_bounds = array<i64: 256, 128>}, {pipeline_mode = #tpu.pipeline_mode<synchronous>, transform_indices = @transform_5, window_bounds = array<i64: 1, 128>}, {pipeline_mode = #tpu.pipeline_mode<synchronous>, transform_indices = @transform_6, window_bounds = array<i64: 32, 128>}, {pipeline_mode = #tpu.pipeline_mode<synchronous>, transform_indices = @transform_7, window_bounds = array<i64: 32, 1>}, {pipeline_mode = #tpu.pipeline_mode<synchronous>, transform_indices = @transform_8, window_bounds = array<i64: 32, 64>}]} {
    %c0 = arith.constant 0 : index
    %c0_0 = arith.constant 0 : index
    %0 = vector.load %arg1[%c0, %c0_0] : memref<32x256xf32, #tpu.memory_space<vmem>>, vector<32x256xf32>
    %c0_1 = arith.constant 0 : index
    %c0_2 = arith.constant 0 : index
    %1 = vector.load %arg2[%c0_1, %c0_2] : memref<256x128xf32, #tpu.memory_space<vmem>>, vector<256x128xf32>
    %cst = arith.constant dense<0.000000e+00> : vector<32x128xf32>
    %2 = tpu.matmul %0, %1, %cst {dimension_numbers = #tpu.dot_dimension_numbers<[1], [0], [0], [1], [0, 0, 1, 1], [], []>} : vector<32x256xf32>, vector<256x128xf32>, vector<32x128xf32> -> vector<32x128xf32>
    %c0_3 = arith.constant 0 : index
    %c0_4 = arith.constant 0 : index
    %3 = vector.load %arg3[%c0_3, %c0_4] : memref<1x128xf32, #tpu.memory_space<vmem>>, vector<1x128xf32>
    %4 = vector.broadcast %3 : vector<1x128xf32> to vector<32x128xf32>
    %5 = arith.addf %2, %4 : vector<32x128xf32>
    %c0_5 = arith.constant 0 : index
    %c0_6 = arith.constant 0 : index
    %6 = vector.load %arg10[%c0_5, %c0_6] : memref<32x128xf32, #tpu.memory_space<vmem>>, vector<32x128xf32>
    tpu.vector_store %arg10[%c0_5, %c0_6], %5 {strides = array<i32>} : memref<32x128xf32, #tpu.memory_space<vmem>>, vector<32x128xf32>,
    %c0_7 = arith.constant 0 : index
    %c0_8 = arith.constant 0 : index
    %7 = vector.load %arg5[%c0_7, %c0_8] : memref<256x128xf32, #tpu.memory_space<vmem>>, vector<256x128xf32>
    %cst_9 = arith.constant dense<0.000000e+00> : vector<32x128xf32>
    %8 = tpu.matmul %0, %7, %cst_9 {dimension_numbers = #tpu.dot_dimension_numbers<[1], [0], [0], [1], [0, 0, 1, 1], [], []>} : vector<32x256xf32>, vector<256x128xf32>, vector<32x128xf32> -> vector<32x128xf32>
    %c0_10 = arith.constant 0 : index
    %c0_11 = arith.constant 0 : index
    %9 = vector.load %arg6[%c0_10, %c0_11] : memref<1x128xf32, #tpu.memory_space<vmem>>, vector<1x128xf32>
    %10 = vector.broadcast %9 : vector<1x128xf32> to vector<32x128xf32>
    %11 = arith.addf %8, %10 : vector<32x128xf32>
    %c0_12 = arith.constant 0 : index
    %c0_13 = arith.constant 0 : index
    %12 = vector.load %arg11[%c0_12, %c0_13] : memref<32x128xf32, #tpu.memory_space<vmem>>, vector<32x128xf32>
    tpu.vector_store %arg11[%c0_12, %c0_13], %11 {strides = array<i32>} : memref<32x128xf32, #tpu.memory_space<vmem>>, vector<32x128xf32>,
    %c0_14 = arith.constant 0 : index
    %c0_15 = arith.constant 0 : index
    %13 = vector.load %arg4[%c0_14, %c0_15] : memref<32x128xf32, #tpu.memory_space<vmem>>, vector<32x128xf32>
    %c0_16 = arith.constant 0 : index
    %c0_17 = arith.constant 0 : index
    %14 = vector.load %arg7[%c0_16, %c0_17] : memref<32x128xf32, #tpu.memory_space<vmem>>, vector<32x128xf32>
    %cst_18 = arith.constant 0.000000e+00 : f32
    %15 = vector.broadcast %cst_18 : f32 to vector<2x32xf32>
    %c0_i32 = arith.constant 0 : i32
    %c16_i32 = arith.constant 16 : i32
    %16 = arith.addi %c0_i32, %c16_i32 : i32
    %c1_i32 = arith.constant 1 : i32
    %17:4 = scf.for %arg12 = %c0_i32 to %16 step %c1_i32 iter_args(%arg13 = %15, %arg14 = %15, %arg15 = %15, %arg16 = %15) -> (vector<2x32xf32>, vector<2x32xf32>, vector<2x32xf32>, vector<2x32xf32>)  : i32 {
      %c2_i32 = arith.constant 2 : i32
      %18 = arith.muli %arg12, %c2_i32 : i32
      %c15_i32 = arith.constant 15 : i32
      %19 = arith.subi %c15_i32, %arg12 : i32
      %c2_i32_20 = arith.constant 2 : i32
      %20 = arith.muli %19, %c2_i32_20 : i32
      %21 = arith.index_cast %18 : i32 to index
      %c0_21 = arith.constant 0 : index
      %22 = vector.load %arg10[%21, %c0_21] : memref<32x128xf32, #tpu.memory_space<vmem>>, vector<2x128xf32>
      %cst_22 = arith.constant dense<0.000000e+00> : vector<2x128xf32>
      %23 = tpu.matmul %arg13, %13, %cst_22 {dimension_numbers = #tpu.dot_dimension_numbers<[1], [0], [0], [1], [0, 0, 1, 1], [], []>} : vector<2x32xf32>, vector<32x128xf32>, vector<2x128xf32> -> vector<2x128xf32>
      %24 = arith.addf %22, %23 : vector<2x128xf32>
      %25 = vector.extract_strided_slice %24 {offsets = [0, 0], sizes = [2, 32], strides = [1, 1]} : vector<2x128xf32> to vector<2x32xf32>
      %26 = arith.negf %25 : vector<2x32xf32>
      %27 = math.exp %26 : vector<2x32xf32>
      %cst_23 = arith.constant 1.000000e+00 : f32
      %28 = vector.broadcast %cst_23 : f32 to vector<2x32xf32>
      %29 = arith.addf %28, %27 : vector<2x32xf32>
      %30 = arith.divf %28, %29 : vector<2x32xf32>
      %31 = vector.extract_strided_slice %24 {offsets = [0, 32], sizes = [2, 32], strides = [1, 1]} : vector<2x128xf32> to vector<2x32xf32>
      %32 = arith.negf %31 : vector<2x32xf32>
      %33 = math.exp %32 : vector<2x32xf32>
      %cst_24 = arith.constant 1.000000e+00 : f32
      %34 = vector.broadcast %cst_24 : f32 to vector<2x32xf32>
      %35 = arith.addf %34, %33 : vector<2x32xf32>
      %36 = arith.divf %34, %35 : vector<2x32xf32>
      %37 = vector.extract_strided_slice %24 {offsets = [0, 64], sizes = [2, 32], strides = [1, 1]} : vector<2x128xf32> to vector<2x32xf32>
      %38 = math.tanh %37 : vector<2x32xf32>
      %39 = vector.extract_strided_slice %24 {offsets = [0, 96], sizes = [2, 32], strides = [1, 1]} : vector<2x128xf32> to vector<2x32xf32>
      %40 = arith.negf %39 : vector<2x32xf32>
      %41 = math.exp %40 : vector<2x32xf32>
      %cst_25 = arith.constant 1.000000e+00 : f32
      %42 = vector.broadcast %cst_25 : f32 to vector<2x32xf32>
      %43 = arith.addf %42, %41 : vector<2x32xf32>
      %44 = arith.divf %42, %43 : vector<2x32xf32>
      %45 = arith.mulf %36, %arg14 : vector<2x32xf32>
      %46 = arith.mulf %30, %38 : vector<2x32xf32>
      %47 = arith.addf %45, %46 : vector<2x32xf32>
      %48 = math.tanh %47 : vector<2x32xf32>
      %49 = arith.mulf %44, %48 : vector<2x32xf32>
      %50 = arith.index_cast %20 : i32 to index
      %c0_26 = arith.constant 0 : index
      %51 = vector.load %arg11[%50, %c0_26] : memref<32x128xf32, #tpu.memory_space<vmem>>, vector<2x128xf32>
      %cst_27 = arith.constant dense<0.000000e+00> : vector<2x128xf32>
      %52 = tpu.matmul %arg15, %14, %cst_27 {dimension_numbers = #tpu.dot_dimension_numbers<[1], [0], [0], [1], [0, 0, 1, 1], [], []>} : vector<2x32xf32>, vector<32x128xf32>, vector<2x128xf32> -> vector<2x128xf32>
      %53 = arith.addf %51, %52 : vector<2x128xf32>
      %54 = vector.extract_strided_slice %53 {offsets = [0, 0], sizes = [2, 32], strides = [1, 1]} : vector<2x128xf32> to vector<2x32xf32>
      %55 = arith.negf %54 : vector<2x32xf32>
      %56 = math.exp %55 : vector<2x32xf32>
      %cst_28 = arith.constant 1.000000e+00 : f32
      %57 = vector.broadcast %cst_28 : f32 to vector<2x32xf32>
      %58 = arith.addf %57, %56 : vector<2x32xf32>
      %59 = arith.divf %57, %58 : vector<2x32xf32>
      %60 = vector.extract_strided_slice %53 {offsets = [0, 32], sizes = [2, 32], strides = [1, 1]} : vector<2x128xf32> to vector<2x32xf32>
      %61 = arith.negf %60 : vector<2x32xf32>
      %62 = math.exp %61 : vector<2x32xf32>
      %cst_29 = arith.constant 1.000000e+00 : f32
      %63 = vector.broadcast %cst_29 : f32 to vector<2x32xf32>
      %64 = arith.addf %63, %62 : vector<2x32xf32>
      %65 = arith.divf %63, %64 : vector<2x32xf32>
      %66 = vector.extract_strided_slice %53 {offsets = [0, 64], sizes = [2, 32], strides = [1, 1]} : vector<2x128xf32> to vector<2x32xf32>
      %67 = math.tanh %66 : vector<2x32xf32>
      %68 = vector.extract_strided_slice %53 {offsets = [0, 96], sizes = [2, 32], strides = [1, 1]} : vector<2x128xf32> to vector<2x32xf32>
      %69 = arith.negf %68 : vector<2x32xf32>
      %70 = math.exp %69 : vector<2x32xf32>
      %cst_30 = arith.constant 1.000000e+00 : f32
      %71 = vector.broadcast %cst_30 : f32 to vector<2x32xf32>
      %72 = arith.addf %71, %70 : vector<2x32xf32>
      %73 = arith.divf %71, %72 : vector<2x32xf32>
      %74 = arith.mulf %65, %arg16 : vector<2x32xf32>
      %75 = arith.mulf %59, %67 : vector<2x32xf32>
      %76 = arith.addf %74, %75 : vector<2x32xf32>
      %77 = math.tanh %76 : vector<2x32xf32>
      %78 = arith.mulf %73, %77 : vector<2x32xf32>
      %79 = arith.index_cast %18 : i32 to index
      %c0_31 = arith.constant 0 : index
      %80 = vector.load %arg8[%79, %c0_31] : memref<32x1xf32, #tpu.memory_space<vmem>>, vector<2x1xf32>
      %81 = arith.index_cast %20 : i32 to index
      %c0_32 = arith.constant 0 : index
      %82 = vector.load %arg8[%81, %c0_32] : memref<32x1xf32, #tpu.memory_space<vmem>>, vector<2x1xf32>
      %83 = vector.broadcast %80 : vector<2x1xf32> to vector<2x32xf32>
      %84 = arith.mulf %83, %49 : vector<2x32xf32>
      %85 = arith.index_cast %18 : i32 to index
      %c0_33 = arith.constant 0 : index
      %86 = vector.load %arg9[%85, %c0_33] : memref<32x64xf32, #tpu.memory_space<vmem>>, vector<2x32xf32>
      tpu.vector_store %arg9[%85, %c0_33], %84 {strides = array<i32>} : memref<32x64xf32, #tpu.memory_space<vmem>>, vector<2x32xf32>,
      %87 = vector.broadcast %82 : vector<2x1xf32> to vector<2x32xf32>
      %88 = arith.mulf %87, %78 : vector<2x32xf32>
      %89 = arith.index_cast %20 : i32 to index
      %c32 = arith.constant 32 : index
      %90 = vector.load %arg9[%89, %c32] : memref<32x64xf32, #tpu.memory_space<vmem>>, vector<2x32xf32>
      tpu.vector_store %arg9[%89, %c32], %88 {strides = array<i32>} : memref<32x64xf32, #tpu.memory_space<vmem>>, vector<2x32xf32>,
      %91 = vector.broadcast %80 : vector<2x1xf32> to vector<2x32xf32>
      %92 = arith.mulf %91, %49 : vector<2x32xf32>
      %cst_34 = arith.constant 1.000000e+00 : f32
      %93 = vector.broadcast %cst_34 : f32 to vector<2x1xf32>
      %94 = arith.subf %93, %80 : vector<2x1xf32>
      %95 = vector.broadcast %94 : vector<2x1xf32> to vector<2x32xf32>
      %96 = arith.mulf %95, %arg13 : vector<2x32xf32>
      %97 = arith.addf %92, %96 : vector<2x32xf32>
      %98 = vector.broadcast %80 : vector<2x1xf32> to vector<2x32xf32>
      %99 = arith.mulf %98, %47 : vector<2x32xf32>
      %cst_35 = arith.constant 1.000000e+00 : f32
      %100 = vector.broadcast %cst_35 : f32 to vector<2x1xf32>
      %101 = arith.subf %100, %80 : vector<2x1xf32>
      %102 = vector.broadcast %101 : vector<2x1xf32> to vector<2x32xf32>
      %103 = arith.mulf %102, %arg14 : vector<2x32xf32>
      %104 = arith.addf %99, %103 : vector<2x32xf32>
      %105 = vector.broadcast %82 : vector<2x1xf32> to vector<2x32xf32>
      %106 = arith.mulf %105, %78 : vector<2x32xf32>
      %cst_36 = arith.constant 1.000000e+00 : f32
      %107 = vector.broadcast %cst_36 : f32 to vector<2x1xf32>
      %108 = arith.subf %107, %82 : vector<2x1xf32>
      %109 = vector.broadcast %108 : vector<2x1xf32> to vector<2x32xf32>
      %110 = arith.mulf %109, %arg15 : vector<2x32xf32>
      %111 = arith.addf %106, %110 : vector<2x32xf32>
      %112 = vector.broadcast %82 : vector<2x1xf32> to vector<2x32xf32>
      %113 = arith.mulf %112, %76 : vector<2x32xf32>
      %cst_37 = arith.constant 1.000000e+00 : f32
      %114 = vector.broadcast %cst_37 : f32 to vector<2x1xf32>
      %115 = arith.subf %114, %82 : vector<2x1xf32>
      %116 = vector.broadcast %115 : vector<2x1xf32> to vector<2x32xf32>
      %117 = arith.mulf %116, %arg16 : vector<2x32xf32>
      %118 = arith.addf %113, %117 : vector<2x32xf32>
      scf.yield %97, %104, %111, %118 : vector<2x32xf32>, vector<2x32xf32>, vector<2x32xf32>, vector<2x32xf32>
    }
    %c16_i32_19 = arith.constant 16 : i32
    return
  }
  func.func @transform_0(%arg0: i32) -> (i32, i32) {
    %c0_i32 = arith.constant 0 : i32
    %c0_i32_0 = arith.constant 0 : i32
    %c0_i32_1 = arith.constant 0 : i32
    return %c0_i32, %c0_i32_0 : i32, i32
  }
  func.func @transform_1(%arg0: i32) -> (i32, i32) {
    %c0_i32 = arith.constant 0 : i32
    %c0_i32_0 = arith.constant 0 : i32
    %c0_i32_1 = arith.constant 0 : i32
    return %c0_i32, %c0_i32_0 : i32, i32
  }
  func.func @transform_2(%arg0: i32) -> (i32, i32) {
    %c0_i32 = arith.constant 0 : i32
    %c0_i32_0 = arith.constant 0 : i32
    %c0_i32_1 = arith.constant 0 : i32
    return %c0_i32, %c0_i32_0 : i32, i32
  }
  func.func @transform_3(%arg0: i32) -> (i32, i32) {
    %c0_i32 = arith.constant 0 : i32
    %c0_i32_0 = arith.constant 0 : i32
    %c0_i32_1 = arith.constant 0 : i32
    return %c0_i32, %c0_i32_0 : i32, i32
  }
  func.func @transform_4(%arg0: i32) -> (i32, i32) {
    %c0_i32 = arith.constant 0 : i32
    %c0_i32_0 = arith.constant 0 : i32
    %c0_i32_1 = arith.constant 0 : i32
    return %c0_i32, %c0_i32_0 : i32, i32
  }
  func.func @transform_5(%arg0: i32) -> (i32, i32) {
    %c0_i32 = arith.constant 0 : i32
    %c0_i32_0 = arith.constant 0 : i32
    %c0_i32_1 = arith.constant 0 : i32
    return %c0_i32, %c0_i32_0 : i32, i32
  }
  func.func @transform_6(%arg0: i32) -> (i32, i32) {
    %c0_i32 = arith.constant 0 : i32
    %c0_i32_0 = arith.constant 0 : i32
    %c0_i32_1 = arith.constant 0 : i32
    return %c0_i32, %c0_i32_0 : i32, i32
  }
  func.func @transform_7(%arg0: i32) -> (i32, i32) {
    %c0_i32 = arith.constant 0 : i32
    %c0_i32_0 = arith.constant 0 : i32
    %c0_i32_1 = arith.constant 0 : i32
    return %c0_i32, %c0_i32_0 : i32, i32
  }
  func.func @transform_8(%arg0: i32) -> (i32, i32) {
    %c0_i32 = arith.constant 0 : i32
    %c0_i32_0 = arith.constant 0 : i32
    %c0_i32_1 = arith.constant 0 : i32
    return %c0_i32, %c0_i32_0 : i32, i32
  }
}

module attributes {stable_mosaic.version = 11 : i64} {
  func.func @_output_kernel(%arg0: i32, %arg1: memref<1x16x256xf32, #tpu.memory_space<vmem>>, %arg2: memref<1x16x64xf32, #tpu.memory_space<vmem>>, %arg3: memref<1x16x64xf32, #tpu.memory_space<vmem>>, %arg4: memref<1x16x1xf32, #tpu.memory_space<vmem>>, %arg5: memref<1x256xf32, #tpu.memory_space<vmem>>, %arg6: memref<1x64xf32, #tpu.memory_space<vmem>>, %arg7: memref<1x1xf32, #tpu.memory_space<vmem>>, %arg8: memref<1x256xf32, #tpu.memory_space<vmem>>, %arg9: memref<1x64xf32, #tpu.memory_space<vmem>>, %arg10: memref<1x1xf32, #tpu.memory_space<vmem>>, %arg11: memref<1x16x1xf32, #tpu.memory_space<vmem>>, %arg12: memref<1x16x1xf32, #tpu.memory_space<vmem>>) attributes {dimension_semantics = [#tpu.dimension_semantics<parallel>], iteration_bounds = array<i64: 2>, scalar_prefetch = 0 : i64, scratch_operands = 0 : i64, tpu.core_type = #tpu.core_type<tc>, window_params = [{transform_indices = @transform_0, window_bounds = array<i64: 1, 16, 256>}, {transform_indices = @transform_1, window_bounds = array<i64: 1, 16, 64>}, {transform_indices = @transform_2, window_bounds = array<i64: 1, 16, 64>}, {transform_indices = @transform_3, window_bounds = array<i64: 1, 16, 1>}, {pipeline_mode = #tpu.pipeline_mode<synchronous>, transform_indices = @transform_4, window_bounds = array<i64: 1, 256>}, {pipeline_mode = #tpu.pipeline_mode<synchronous>, transform_indices = @transform_5, window_bounds = array<i64: 1, 64>}, {pipeline_mode = #tpu.pipeline_mode<synchronous>, transform_indices = @transform_6, window_bounds = array<i64: 1, 1>}, {pipeline_mode = #tpu.pipeline_mode<synchronous>, transform_indices = @transform_7, window_bounds = array<i64: 1, 256>}, {pipeline_mode = #tpu.pipeline_mode<synchronous>, transform_indices = @transform_8, window_bounds = array<i64: 1, 64>}, {pipeline_mode = #tpu.pipeline_mode<synchronous>, transform_indices = @transform_9, window_bounds = array<i64: 1, 1>}, {transform_indices = @transform_10, window_bounds = array<i64: 1, 16, 1>}, {transform_indices = @transform_11, window_bounds = array<i64: 1, 16, 1>}]} {
    %c0 = arith.constant 0 : index
    %c0_0 = arith.constant 0 : index
    %c0_1 = arith.constant 0 : index
    %0 = vector.load %arg1[%c0, %c0_0, %c0_1] : memref<1x16x256xf32, #tpu.memory_space<vmem>>, vector<1x16x256xf32>
    %1 = vector.shape_cast %0 : vector<1x16x256xf32> to vector<16x256xf32>
    %c0_2 = arith.constant 0 : index
    %c0_3 = arith.constant 0 : index
    %c0_4 = arith.constant 0 : index
    %2 = vector.load %arg2[%c0_2, %c0_3, %c0_4] : memref<1x16x64xf32, #tpu.memory_space<vmem>>, vector<1x16x64xf32>
    %3 = vector.shape_cast %2 : vector<1x16x64xf32> to vector<16x64xf32>
    %c0_5 = arith.constant 0 : index
    %c0_6 = arith.constant 0 : index
    %c0_7 = arith.constant 0 : index
    %4 = vector.load %arg3[%c0_5, %c0_6, %c0_7] : memref<1x16x64xf32, #tpu.memory_space<vmem>>, vector<1x16x64xf32>
    %5 = vector.shape_cast %4 : vector<1x16x64xf32> to vector<16x64xf32>
    %c0_8 = arith.constant 0 : index
    %c0_9 = arith.constant 0 : index
    %c0_10 = arith.constant 0 : index
    %6 = vector.load %arg4[%c0_8, %c0_9, %c0_10] : memref<1x16x1xf32, #tpu.memory_space<vmem>>, vector<1x16x1xf32>
    %7 = vector.shape_cast %6 : vector<1x16x1xf32> to vector<16x1xf32>
    %c0_11 = arith.constant 0 : index
    %c0_12 = arith.constant 0 : index
    %8 = vector.load %arg5[%c0_11, %c0_12] : memref<1x256xf32, #tpu.memory_space<vmem>>, vector<1x256xf32>
    %9 = vector.broadcast %8 : vector<1x256xf32> to vector<16x256xf32>
    %10 = arith.mulf %1, %9 : vector<16x256xf32>
    %cst = arith.constant dense<0.000000e+00> : vector<16xf32>
    %11 = vector.multi_reduction <add>, %10, %cst [1] : vector<16x256xf32> to vector<16xf32>
    %12 = vector.shape_cast %11 : vector<16xf32> to vector<16x1xf32>
    %c0_13 = arith.constant 0 : index
    %c0_14 = arith.constant 0 : index
    %13 = vector.load %arg6[%c0_13, %c0_14] : memref<1x64xf32, #tpu.memory_space<vmem>>, vector<1x64xf32>
    %14 = vector.broadcast %13 : vector<1x64xf32> to vector<16x64xf32>
    %15 = arith.mulf %3, %14 : vector<16x64xf32>
    %cst_15 = arith.constant dense<0.000000e+00> : vector<16xf32>
    %16 = vector.multi_reduction <add>, %15, %cst_15 [1] : vector<16x64xf32> to vector<16xf32>
    %17 = vector.shape_cast %16 : vector<16xf32> to vector<16x1xf32>
    %18 = arith.addf %12, %17 : vector<16x1xf32>
    %c0_16 = arith.constant 0 : index
    %c0_17 = arith.constant 0 : index
    %19 = vector.load %arg7[%c0_16, %c0_17] : memref<1x1xf32, #tpu.memory_space<vmem>>, vector<1x1xf32>
    %20 = vector.broadcast %19 : vector<1x1xf32> to vector<16x1xf32>
    %21 = arith.addf %18, %20 : vector<16x1xf32>
    %c0_18 = arith.constant 0 : index
    %c0_19 = arith.constant 0 : index
    %22 = vector.load %arg8[%c0_18, %c0_19] : memref<1x256xf32, #tpu.memory_space<vmem>>, vector<1x256xf32>
    %23 = vector.broadcast %22 : vector<1x256xf32> to vector<16x256xf32>
    %24 = arith.mulf %1, %23 : vector<16x256xf32>
    %cst_20 = arith.constant dense<0.000000e+00> : vector<16xf32>
    %25 = vector.multi_reduction <add>, %24, %cst_20 [1] : vector<16x256xf32> to vector<16xf32>
    %26 = vector.shape_cast %25 : vector<16xf32> to vector<16x1xf32>
    %c0_21 = arith.constant 0 : index
    %c0_22 = arith.constant 0 : index
    %27 = vector.load %arg9[%c0_21, %c0_22] : memref<1x64xf32, #tpu.memory_space<vmem>>, vector<1x64xf32>
    %28 = vector.broadcast %27 : vector<1x64xf32> to vector<16x64xf32>
    %29 = arith.mulf %5, %28 : vector<16x64xf32>
    %cst_23 = arith.constant dense<0.000000e+00> : vector<16xf32>
    %30 = vector.multi_reduction <add>, %29, %cst_23 [1] : vector<16x64xf32> to vector<16xf32>
    %31 = vector.shape_cast %30 : vector<16xf32> to vector<16x1xf32>
    %32 = arith.addf %26, %31 : vector<16x1xf32>
    %c0_24 = arith.constant 0 : index
    %c0_25 = arith.constant 0 : index
    %33 = vector.load %arg10[%c0_24, %c0_25] : memref<1x1xf32, #tpu.memory_space<vmem>>, vector<1x1xf32>
    %34 = vector.broadcast %33 : vector<1x1xf32> to vector<16x1xf32>
    %35 = arith.addf %32, %34 : vector<16x1xf32>
    %36 = arith.mulf %7, %21 : vector<16x1xf32>
    %cst_26 = arith.constant 1.000000e+00 : f32
    %37 = vector.broadcast %cst_26 : f32 to vector<16x1xf32>
    %38 = arith.subf %37, %7 : vector<16x1xf32>
    %cst_27 = arith.constant -1.000000e+30 : f32
    %39 = vector.broadcast %cst_27 : f32 to vector<16x1xf32>
    %40 = arith.mulf %38, %39 : vector<16x1xf32>
    %41 = arith.addf %36, %40 : vector<16x1xf32>
    %cst_28 = arith.constant dense<0xFF800000> : vector<1xf32>
    %42 = vector.multi_reduction <maximumf>, %41, %cst_28 [0] : vector<16x1xf32> to vector<1xf32>
    %43 = vector.shape_cast %42 : vector<1xf32> to vector<1x1xf32>
    %44 = vector.broadcast %43 : vector<1x1xf32> to vector<16x1xf32>
    %45 = arith.subf %41, %44 : vector<16x1xf32>
    %46 = math.exp %45 : vector<16x1xf32>
    %cst_29 = arith.constant dense<0.000000e+00> : vector<1xf32>
    %47 = vector.multi_reduction <add>, %46, %cst_29 [0] : vector<16x1xf32> to vector<1xf32>
    %48 = vector.shape_cast %47 : vector<1xf32> to vector<1x1xf32>
    %49 = math.log %48 : vector<1x1xf32>
    %50 = vector.broadcast %49 : vector<1x1xf32> to vector<16x1xf32>
    %51 = arith.subf %45, %50 : vector<16x1xf32>
    %c0_30 = arith.constant 0 : index
    %c0_31 = arith.constant 0 : index
    %c0_32 = arith.constant 0 : index
    %52 = vector.load %arg11[%c0_30, %c0_31, %c0_32] : memref<1x16x1xf32, #tpu.memory_space<vmem>>, vector<1x16x1xf32>
    %53 = vector.shape_cast %52 : vector<1x16x1xf32> to vector<16x1xf32>
    %54 = vector.shape_cast %51 : vector<16x1xf32> to vector<1x16x1xf32>
    tpu.vector_store %arg11[%c0_30, %c0_31, %c0_32], %54 {strides = array<i32>} : memref<1x16x1xf32, #tpu.memory_space<vmem>>, vector<1x16x1xf32>,
    %55 = arith.mulf %7, %35 : vector<16x1xf32>
    %cst_33 = arith.constant 1.000000e+00 : f32
    %56 = vector.broadcast %cst_33 : f32 to vector<16x1xf32>
    %57 = arith.subf %56, %7 : vector<16x1xf32>
    %cst_34 = arith.constant -1.000000e+30 : f32
    %58 = vector.broadcast %cst_34 : f32 to vector<16x1xf32>
    %59 = arith.mulf %57, %58 : vector<16x1xf32>
    %60 = arith.addf %55, %59 : vector<16x1xf32>
    %cst_35 = arith.constant dense<0xFF800000> : vector<1xf32>
    %61 = vector.multi_reduction <maximumf>, %60, %cst_35 [0] : vector<16x1xf32> to vector<1xf32>
    %62 = vector.shape_cast %61 : vector<1xf32> to vector<1x1xf32>
    %63 = vector.broadcast %62 : vector<1x1xf32> to vector<16x1xf32>
    %64 = arith.subf %60, %63 : vector<16x1xf32>
    %65 = math.exp %64 : vector<16x1xf32>
    %cst_36 = arith.constant dense<0.000000e+00> : vector<1xf32>
    %66 = vector.multi_reduction <add>, %65, %cst_36 [0] : vector<16x1xf32> to vector<1xf32>
    %67 = vector.shape_cast %66 : vector<1xf32> to vector<1x1xf32>
    %68 = math.log %67 : vector<1x1xf32>
    %69 = vector.broadcast %68 : vector<1x1xf32> to vector<16x1xf32>
    %70 = arith.subf %64, %69 : vector<16x1xf32>
    %c0_37 = arith.constant 0 : index
    %c0_38 = arith.constant 0 : index
    %c0_39 = arith.constant 0 : index
    %71 = vector.load %arg12[%c0_37, %c0_38, %c0_39] : memref<1x16x1xf32, #tpu.memory_space<vmem>>, vector<1x16x1xf32>
    %72 = vector.shape_cast %71 : vector<1x16x1xf32> to vector<16x1xf32>
    %73 = vector.shape_cast %70 : vector<16x1xf32> to vector<1x16x1xf32>
    tpu.vector_store %arg12[%c0_37, %c0_38, %c0_39], %73 {strides = array<i32>} : memref<1x16x1xf32, #tpu.memory_space<vmem>>, vector<1x16x1xf32>,
    return
  }
  func.func @transform_0(%arg0: i32) -> (i32, i32, i32) {
    %c0_i32 = arith.constant 0 : i32
    %c0_i32_0 = arith.constant 0 : i32
    %c0_i32_1 = arith.constant 0 : i32
    return %arg0, %c0_i32, %c0_i32_0 : i32, i32, i32
  }
  func.func @transform_1(%arg0: i32) -> (i32, i32, i32) {
    %c0_i32 = arith.constant 0 : i32
    %c0_i32_0 = arith.constant 0 : i32
    %c0_i32_1 = arith.constant 0 : i32
    return %arg0, %c0_i32, %c0_i32_0 : i32, i32, i32
  }
  func.func @transform_2(%arg0: i32) -> (i32, i32, i32) {
    %c0_i32 = arith.constant 0 : i32
    %c0_i32_0 = arith.constant 0 : i32
    %c0_i32_1 = arith.constant 0 : i32
    return %arg0, %c0_i32, %c0_i32_0 : i32, i32, i32
  }
  func.func @transform_3(%arg0: i32) -> (i32, i32, i32) {
    %c0_i32 = arith.constant 0 : i32
    %c0_i32_0 = arith.constant 0 : i32
    %c0_i32_1 = arith.constant 0 : i32
    return %arg0, %c0_i32, %c0_i32_0 : i32, i32, i32
  }
  func.func @transform_4(%arg0: i32) -> (i32, i32) {
    %c0_i32 = arith.constant 0 : i32
    %c0_i32_0 = arith.constant 0 : i32
    %c0_i32_1 = arith.constant 0 : i32
    return %c0_i32, %c0_i32_0 : i32, i32
  }
  func.func @transform_5(%arg0: i32) -> (i32, i32) {
    %c0_i32 = arith.constant 0 : i32
    %c0_i32_0 = arith.constant 0 : i32
    %c0_i32_1 = arith.constant 0 : i32
    return %c0_i32, %c0_i32_0 : i32, i32
  }
  func.func @transform_6(%arg0: i32) -> (i32, i32) {
    %c0_i32 = arith.constant 0 : i32
    %c0_i32_0 = arith.constant 0 : i32
    %c0_i32_1 = arith.constant 0 : i32
    return %c0_i32, %c0_i32_0 : i32, i32
  }
  func.func @transform_7(%arg0: i32) -> (i32, i32) {
    %c0_i32 = arith.constant 0 : i32
    %c0_i32_0 = arith.constant 0 : i32
    %c0_i32_1 = arith.constant 0 : i32
    return %c0_i32, %c0_i32_0 : i32, i32
  }
  func.func @transform_8(%arg0: i32) -> (i32, i32) {
    %c0_i32 = arith.constant 0 : i32
    %c0_i32_0 = arith.constant 0 : i32
    %c0_i32_1 = arith.constant 0 : i32
    return %c0_i32, %c0_i32_0 : i32, i32
  }
  func.func @transform_9(%arg0: i32) -> (i32, i32) {
    %c0_i32 = arith.constant 0 : i32
    %c0_i32_0 = arith.constant 0 : i32
    %c0_i32_1 = arith.constant 0 : i32
    return %c0_i32, %c0_i32_0 : i32, i32
  }
  func.func @transform_10(%arg0: i32) -> (i32, i32, i32) {
    %c0_i32 = arith.constant 0 : i32
    %c0_i32_0 = arith.constant 0 : i32
    %c0_i32_1 = arith.constant 0 : i32
    return %arg0, %c0_i32, %c0_i32_0 : i32, i32, i32
  }
  func.func @transform_11(%arg0: i32) -> (i32, i32, i32) {
    %c0_i32 = arith.constant 0 : i32
    %c0_i32_0 = arith.constant 0 : i32
    %c0_i32_1 = arith.constant 0 : i32
    return %arg0, %c0_i32, %c0_i32_0 : i32, i32, i32
  }
}

</mosaic_0001>

<llo_original>
// kernel: bidaf_forward.9
$region0: #{bidaf_forward.9}
  #allocation0 [shape = 'u32[]', space=smem, size = 0x4, offset = 0x4, fixed_abs, tag = 'smem constant byte address 0x4 - core index']
  #allocation1 [shape = 'u32[72,128]{1,0:T(1,128)}', space=vmem, size = 0x9000, scoped, tag = 'internal scratch']
  %s0 = inlined_call_operand.vmem [shape: f32[32,64], index: 0, kind: input, shape index: {}]
  %s1 = inlined_call_operand.vmem [shape: f32[64,32], index: 1, kind: input, shape index: {}]
  %s2 = inlined_call_operand.vmem [shape: f32[32,32], index: 2, kind: input, shape index: {}]
  %s3 = inlined_call_operand.vmem [shape: f32[1,32], index: 3, kind: input, shape index: {}]
  %s4 = inlined_call_operand.vmem [shape: f32[32,32], index: 4, kind: input, shape index: {}]
  %s5 = inlined_call_operand.vmem [shape: f32[1,32], index: 5, kind: input, shape index: {}]
  %s6 = inlined_call_operand.vmem [shape: f32[32,32], index: 6, kind: input, shape index: {}]
  %s7 = inlined_call_operand.vmem [shape: f32[1,32], index: 7, kind: input, shape index: {}]
  %s8 = inlined_call_operand.vmem [shape: f32[32,32], index: 8, kind: input, shape index: {}]
  %s9 = inlined_call_operand.vmem [shape: f32[1,32], index: 9, kind: input, shape index: {}]
  %s10 = inlined_call_operand.vmem [shape: f32[32,32], index: 10, kind: output, shape index: {}]
  %s11 = sld [smem:[#allocation0]]
  $region50: #{bidaf_forward.9} parent=0
    _
  %s13 = ssub.s32 1, %s11
  %s14 = scalar_select 0, %s13, %s11
  // Predicated region
  $region2: #{bidaf_forward.9} parent=0 // pred_check
    _
  $region3: #{bidaf_forward.9} parent=0 // pred_check_branch
    %16 = sbr.rel (0) target = $region5
  $region4: #{bidaf_forward.9} parent=0 // pred_region
    _
  $region5: #{bidaf_forward.9} parent=0 // pred_fallthru
    _
  // Predicated region
  $region6: #{bidaf_forward.9} parent=0 // pred_check
    _
  $region7: #{bidaf_forward.9} parent=0 // pred_check_branch
    %18 = sbr.rel (0) target = $region9
  $region8: #{bidaf_forward.9} parent=0 // pred_region
    _
  $region9: #{bidaf_forward.9} parent=0 // pred_fallthru
    _
  // Predicated region
  $region10: #{bidaf_forward.9} parent=0 // pred_check
    _
  $region11: #{bidaf_forward.9} parent=0 // pred_check_branch
    %20 = sbr.rel (0) target = $region13
  $region12: #{bidaf_forward.9} parent=0 // pred_region
    _
  $region13: #{bidaf_forward.9} parent=0 // pred_fallthru
    _
  // Predicated region
  $region14: #{bidaf_forward.9} parent=0 // pred_check
    _
  $region15: #{bidaf_forward.9} parent=0 // pred_check_branch
    %22 = sbr.rel (0) target = $region17
  $region16: #{bidaf_forward.9} parent=0 // pred_region
    _
  $region17: #{bidaf_forward.9} parent=0 // pred_fallthru
    _
  // Predicated region
  $region18: #{bidaf_forward.9} parent=0 // pred_check
    _
  $region19: #{bidaf_forward.9} parent=0 // pred_check_branch
    %24 = sbr.rel (0) target = $region21
  $region20: #{bidaf_forward.9} parent=0 // pred_region
    _
  $region21: #{bidaf_forward.9} parent=0 // pred_fallthru
    _
  // Predicated region
  $region22: #{bidaf_forward.9} parent=0 // pred_check
    _
  $region23: #{bidaf_forward.9} parent=0 // pred_check_branch
    %26 = sbr.rel (0) target = $region25
  $region24: #{bidaf_forward.9} parent=0 // pred_region
    _
  $region25: #{bidaf_forward.9} parent=0 // pred_fallthru
    _
  // Predicated region
  $region26: #{bidaf_forward.9} parent=0 // pred_check
    _
  $region27: #{bidaf_forward.9} parent=0 // pred_check_branch
    %28 = sbr.rel (0) target = $region29
  $region28: #{bidaf_forward.9} parent=0 // pred_region
    _
  $region29: #{bidaf_forward.9} parent=0 // pred_fallthru
    _
  // Predicated region
  $region30: #{bidaf_forward.9} parent=0 // pred_check
    _
  $region31: #{bidaf_forward.9} parent=0 // pred_check_branch
    %30 = sbr.rel (0) target = $region33
  $region32: #{bidaf_forward.9} parent=0 // pred_region
    _
  $region33: #{bidaf_forward.9} parent=0 // pred_fallthru
    _
  // Predicated region
  $region34: #{bidaf_forward.9} parent=0 // pred_check
    _
  $region35: #{bidaf_forward.9} parent=0 // pred_check_branch
    %32 = sbr.rel (0) target = $region37
  $region36: #{bidaf_forward.9} parent=0 // pred_region
    _
  $region37: #{bidaf_forward.9} parent=0 // pred_fallthru
    _
  // Predicated region
  $region38: #{bidaf_forward.9} parent=0 // pred_check
    _
  $region39: #{bidaf_forward.9} parent=0 // pred_check_branch
    %34 = sbr.rel (0) target = $region41
  $region40: #{bidaf_forward.9} parent=0 // pred_region
    _
  $region41: #{bidaf_forward.9} parent=0 // pred_fallthru
    _
  %v35 = vld [vmem:[%s0] sm:$0xff]
  %v36 = vld [vmem:[%s0 + $0x8] sm:$0xff]
  %v37 = vld [vmem:[%s0 + $0x10] sm:$0xff]
  %v38 = vld [vmem:[%s0 + $0x18] sm:$0xff]
  %v39 = vld [vmem:[%s1] sm:$0xff]
  %v40 = vld [vmem:[%s1 + $0x8] sm:$0xff]
  %v41 = vld [vmem:[%s1 + $0x10] sm:$0xff]
  %v42 = vld [vmem:[%s1 + $0x18] sm:$0xff]
  %v43 = vld [vmem:[%s1 + $0x20] sm:$0xff]
  %v44 = vld [vmem:[%s1 + $0x28] sm:$0xff]
  %v45 = vld [vmem:[%s1 + $0x30] sm:$0xff]
  %v46 = vld [vmem:[%s1 + $0x38] sm:$0xff]
  %vm47 = vcmask 523264
  %v49 = vsel %vm47, %v35, 0
  %v52 = vsel %vm47, %v36, 0
  %v55 = vsel %vm47, %v37, 0
  %v58 = vsel %vm47, %v38, 0
  %60 = vmatpush.msra.mxu0 0.0
  %61 = vmatpush.msra.mxu0 0.0
  %62 = vmatpush.msra.mxu0 0.0
  %63 = vmatpush.msra.mxu0 0.0
  %64 = vmatpush.msra.mxu0 0.0
  %65 = vmatpush.msra.mxu0 0.0
  %66 = vmatpush.msra.mxu0 0.0
  %67 = vmatpush.msra.mxu0 0.0
  %68 = vmatpush.msra.mxu0 %v46
  %69 = vmatpush.msra.mxu0 %v45
  %70 = vmatpush.msra.mxu0 %v44
  %71 = vmatpush.msra.mxu0 %v43
  %72 = vmatpush.msra.mxu0 %v42
  %73 = vmatpush.msra.mxu0 %v41
  %74 = vmatpush.msra.mxu0 %v40
  %75 = vmatpush.msra.mxu0 %v39
  %76 = vmatmul.f32.gmra.mxu0 %v49
  %v77 = vpop.f32.mrf.mxu0
  %v78 = vadd.f32 0.0, %v77
  %79 = vmatmul.f32.gmra.mxu0 %v52
  %v80 = vpop.f32.mrf.mxu0
  %v81 = vadd.f32 0.0, %v80
  %82 = vmatmul.f32.gmra.mxu0 %v55
  %v83 = vpop.f32.mrf.mxu0
  %v84 = vadd.f32 0.0, %v83
  %85 = vmatmul.f32.gmra.mxu0 %v58
  %v86 = vpop.f32.mrf.mxu0
  %v87 = vadd.f32 0.0, %v86
  %88 = vdwg.mxu0
  %v89 = vld [vmem:[%s2] sm:$0xff]
  %v90 = vld [vmem:[%s2 + $0x8] sm:$0xff]
  %v91 = vld [vmem:[%s2 + $0x10] sm:$0xff]
  %v92 = vld [vmem:[%s2 + $0x18] sm:$0xff]
  %v93 = vld [vmem:[%s3] sm:$0x1]
  %v95 = vperm.slane %v93, 0
  %vm97 = vcmask 261120
  %v99 = vsel %vm97, %v78, 0
  %v102 = vsel %vm97, %v81, 0
  %v105 = vsel %vm97, %v84, 0
  %v108 = vsel %vm97, %v87, 0
  %110 = vmatpush.msra.mxu0 0.0
  %111 = vmatpush.msra.mxu0 0.0
  %112 = vmatpush.msra.mxu0 0.0
  %113 = vmatpush.msra.mxu0 0.0
  %114 = vmatpush.msra.mxu0 0.0
  %115 = vmatpush.msra.mxu0 0.0
  %116 = vmatpush.msra.mxu0 0.0
  %117 = vmatpush.msra.mxu0 0.0
  %118 = vmatpush.msra.mxu0 0.0
  %119 = vmatpush.msra.mxu0 0.0
  %120 = vmatpush.msra.mxu0 0.0
  %121 = vmatpush.msra.mxu0 0.0
  %122 = vmatpush.msra.mxu0 %v92
  %123 = vmatpush.msra.mxu0 %v91
  %124 = vmatpush.msra.mxu0 %v90
  %125 = vmatpush.msra.mxu0 %v89
  %126 = vmatmul.f32.gmra.mxu0 %v99
  %v127 = vpop.f32.mrf.mxu0
  %v128 = vadd.f32 %v95, %v127
  %129 = vmatmul.f32.gmra.mxu0 %v102
  %v130 = vpop.f32.mrf.mxu0
  %v131 = vadd.f32 %v95, %v130
  %132 = vmatmul.f32.gmra.mxu0 %v105
  %v133 = vpop.f32.mrf.mxu0
  %v134 = vadd.f32 %v95, %v133
  %135 = vmatmul.f32.gmra.mxu0 %v108
  %v136 = vpop.f32.mrf.mxu0
  %v137 = vadd.f32 %v95, %v136
  %138 = vdwg.mxu0
  %v139 = vmax.f32 %v128, 0.0
  %v140 = vmax.f32 %v131, 0.0
  %v141 = vmax.f32 %v134, 0.0
  %v142 = vmax.f32 %v137, 0.0
  %v143 = vld [vmem:[%s4] sm:$0xff]
  %v144 = vld [vmem:[%s4 + $0x8] sm:$0xff]
  %v145 = vld [vmem:[%s4 + $0x10] sm:$0xff]
  %v146 = vld [vmem:[%s4 + $0x18] sm:$0xff]
  %v147 = vld [vmem:[%s5] sm:$0x1]
  %v149 = vperm.slane %v147, 0
  %151 = vmatpush.msra.mxu0 0.0
  %152 = vmatpush.msra.mxu0 0.0
  %153 = vmatpush.msra.mxu0 0.0
  %154 = vmatpush.msra.mxu0 0.0
  %155 = vmatpush.msra.mxu0 0.0
  %156 = vmatpush.msra.mxu0 0.0
  %157 = vmatpush.msra.mxu0 0.0
  %158 = vmatpush.msra.mxu0 0.0
  %159 = vmatpush.msra.mxu0 0.0
  %160 = vmatpush.msra.mxu0 0.0
  %161 = vmatpush.msra.mxu0 0.0
  %162 = vmatpush.msra.mxu0 0.0
  %163 = vmatpush.msra.mxu0 %v146
  %164 = vmatpush.msra.mxu0 %v145
  %165 = vmatpush.msra.mxu0 %v144
  %166 = vmatpush.msra.mxu0 %v143
  %167 = vmatmul.f32.gmra.mxu0 %v99
  %v168 = vpop.f32.mrf.mxu0
  %v169 = vadd.f32 %v149, %v168
  %170 = vmatmul.f32.gmra.mxu0 %v102
  %v171 = vpop.f32.mrf.mxu0
  %v172 = vadd.f32 %v149, %v171
  %173 = vmatmul.f32.gmra.mxu0 %v105
  %v174 = vpop.f32.mrf.mxu0
  %v175 = vadd.f32 %v149, %v174
  %176 = vmatmul.f32.gmra.mxu0 %v108
  %v177 = vpop.f32.mrf.mxu0
  %v178 = vadd.f32 %v149, %v177
  %179 = vdwg.mxu0
  %v180 = vxor.u32 %v169, 2147483648
  %v181 = vxor.u32 %v172, 2147483648
  %v182 = vxor.u32 %v175, 2147483648
  %v183 = vxor.u32 %v178, 2147483648
  %v184 = vmul.f32 %v180, 1.442695
  %v185 = vpow.pop %v184
  %v186 = vmul.f32 %v181, 1.442695
  %v187 = vpow.pop %v186
  %v188 = vmul.f32 %v182, 1.442695
  %v189 = vpow.pop %v188
  %v190 = vmul.f32 %v183, 1.442695
  %v191 = vpow.pop %v190
  %v192 = vadd.f32 %v185, 1.0
  %v193 = vadd.f32 %v187, 1.0
  %v194 = vadd.f32 %v189, 1.0
  %v195 = vadd.f32 %v191, 1.0
  %v196 = vrcp.pop %v192
  %v197 = vmul.f32 %v192, %v196
  %v198 = vsub.f32 1.0, %v197
  %v199 = vmul.f32 %v196, %v198
  %v200 = vadd.f32 %v196, %v199
  %vm201 = vweird.f32 %v192
  %vm202 = vweird.f32 %v196
  %vm203 = vmor %vm201, %vm202
  %v204 = vsel %vm203, %v196, %v200
  %v205 = vand.u32 2147483647, %v192
  %vm206 = vcmp.eq.f32.partialorder %v205, 8.507059e+37
  %v207 = vand.u32 %v192, 2147483648
  %v208 = vor.u32 1.1754944e-38, %v207
  %v209 = vsel %vm206, %v208, %v204
  %v210 = vmul.f32 1.0, %v209
  %v211 = vrcp.pop %v193
  %v212 = vmul.f32 %v193, %v211
  %v213 = vsub.f32 1.0, %v212
  %v214 = vmul.f32 %v211, %v213
  %v215 = vadd.f32 %v211, %v214
  %vm216 = vweird.f32 %v193
  %vm217 = vweird.f32 %v211
  %vm218 = vmor %vm216, %vm217
  %v219 = vsel %vm218, %v211, %v215
  %v220 = vand.u32 2147483647, %v193
  %vm221 = vcmp.eq.f32.partialorder %v220, 8.507059e+37
  %v222 = vand.u32 %v193, 2147483648
  %v223 = vor.u32 1.1754944e-38, %v222
  %v224 = vsel %vm221, %v223, %v219
  %v225 = vmul.f32 1.0, %v224
  %v226 = vrcp.pop %v194
  %v227 = vmul.f32 %v194, %v226
  %v228 = vsub.f32 1.0, %v227
  %v229 = vmul.f32 %v226, %v228
  %v230 = vadd.f32 %v226, %v229
  %vm231 = vweird.f32 %v194
  %vm232 = vweird.f32 %v226
  %vm233 = vmor %vm231, %vm232
  %v234 = vsel %vm233, %v226, %v230
  %v235 = vand.u32 2147483647, %v194
  %vm236 = vcmp.eq.f32.partialorder %v235, 8.507059e+37
  %v237 = vand.u32 %v194, 2147483648
  %v238 = vor.u32 1.1754944e-38, %v237
  %v239 = vsel %vm236, %v238, %v234
  %v240 = vmul.f32 1.0, %v239
  %v241 = vrcp.pop %v195
  %v242 = vmul.f32 %v195, %v241
  %v243 = vsub.f32 1.0, %v242
  %v244 = vmul.f32 %v241, %v243
  %v245 = vadd.f32 %v241, %v244
  %vm246 = vweird.f32 %v195
  %vm247 = vweird.f32 %v241
  %vm248 = vmor %vm246, %vm247
  %v249 = vsel %vm248, %v241, %v245
  %v250 = vand.u32 2147483647, %v195
  %vm251 = vcmp.eq.f32.partialorder %v250, 8.507059e+37
  %v252 = vand.u32 %v195, 2147483648
  %v253 = vor.u32 1.1754944e-38, %v252
  %v254 = vsel %vm251, %v253, %v249
  %v255 = vmul.f32 1.0, %v254
  %v256 = vmul.f32 %v210, %v139
  %v257 = vmul.f32 %v225, %v140
  %v258 = vmul.f32 %v240, %v141
  %v259 = vmul.f32 %v255, %v142
  %v260 = vsub.f32 1.0, %v210
  %v261 = vsub.f32 1.0, %v225
  %v262 = vsub.f32 1.0, %v240
  %v263 = vsub.f32 1.0, %v255
  %v264 = vmul.f32 %v260, %v78
  %v265 = vmul.f32 %v261, %v81
  %v266 = vmul.f32 %v262, %v84
  %v267 = vmul.f32 %v263, %v87
  %v268 = vadd.f32 %v256, %v264
  %v269 = vadd.f32 %v257, %v265
  %v270 = vadd.f32 %v258, %v266
  %v271 = vadd.f32 %v259, %v267
  %v272 = vld [vmem:[%s6] sm:$0xff]
  %v273 = vld [vmem:[%s6 + $0x8] sm:$0xff]
  %v274 = vld [vmem:[%s6 + $0x10] sm:$0xff]
  %v275 = vld [vmem:[%s6 + $0x18] sm:$0xff]
  %v276 = vld [vmem:[%s7] sm:$0x1]
  %v278 = vperm.slane %v276, 0
  %v281 = vsel %vm97, %v268, 0
  %v284 = vsel %vm97, %v269, 0
  %v287 = vsel %vm97, %v270, 0
  %v290 = vsel %vm97, %v271, 0
  %292 = vmatpush.msra.mxu0 0.0
  %293 = vmatpush.msra.mxu0 0.0
  %294 = vmatpush.msra.mxu0 0.0
  %295 = vmatpush.msra.mxu0 0.0
  %296 = vmatpush.msra.mxu0 0.0
  %297 = vmatpush.msra.mxu0 0.0
  %298 = vmatpush.msra.mxu0 0.0
  %299 = vmatpush.msra.mxu0 0.0
  %300 = vmatpush.msra.mxu0 0.0
  %301 = vmatpush.msra.mxu0 0.0
  %302 = vmatpush.msra.mxu0 0.0
  %303 = vmatpush.msra.mxu0 0.0
  %304 = vmatpush.msra.mxu0 %v275
  %305 = vmatpush.msra.mxu0 %v274
  %306 = vmatpush.msra.mxu0 %v273
  %307 = vmatpush.msra.mxu0 %v272
  %308 = vmatmul.f32.gmra.mxu0 %v281
  %v309 = vpop.f32.mrf.mxu0
  %v310 = vadd.f32 %v278, %v309
  %311 = vmatmul.f32.gmra.mxu0 %v284
  %v312 = vpop.f32.mrf.mxu0
  %v313 = vadd.f32 %v278, %v312
  %314 = vmatmul.f32.gmra.mxu0 %v287
  %v315 = vpop.f32.mrf.mxu0
  %v316 = vadd.f32 %v278, %v315
  %317 = vmatmul.f32.gmra.mxu0 %v290
  %v318 = vpop.f32.mrf.mxu0
  %v319 = vadd.f32 %v278, %v318
  %320 = vdwg.mxu0
  %v321 = vmax.f32 %v310, 0.0
  %v322 = vmax.f32 %v313, 0.0
  %v323 = vmax.f32 %v316, 0.0
  %v324 = vmax.f32 %v319, 0.0
  %v325 = vld [vmem:[%s8] sm:$0xff]
  %v326 = vld [vmem:[%s8 + $0x8] sm:$0xff]
  %v327 = vld [vmem:[%s8 + $0x10] sm:$0xff]
  %v328 = vld [vmem:[%s8 + $0x18] sm:$0xff]
  %v329 = vld [vmem:[%s9] sm:$0x1]
  %v331 = vperm.slane %v329, 0
  %333 = vmatpush.msra.mxu0 0.0
  %334 = vmatpush.msra.mxu0 0.0
  %335 = vmatpush.msra.mxu0 0.0
  %336 = vmatpush.msra.mxu0 0.0
  %337 = vmatpush.msra.mxu0 0.0
  %338 = vmatpush.msra.mxu0 0.0
  %339 = vmatpush.msra.mxu0 0.0
  %340 = vmatpush.msra.mxu0 0.0
  %341 = vmatpush.msra.mxu0 0.0
  %342 = vmatpush.msra.mxu0 0.0
  %343 = vmatpush.msra.mxu0 0.0
  %344 = vmatpush.msra.mxu0 0.0
  %345 = vmatpush.msra.mxu0 %v328
  %346 = vmatpush.msra.mxu0 %v327
  %347 = vmatpush.msra.mxu0 %v326
  %348 = vmatpush.msra.mxu0 %v325
  %349 = vmatmul.f32.gmra.mxu0 %v281
  %v350 = vpop.f32.mrf.mxu0
  %v351 = vadd.f32 %v331, %v350
  %352 = vmatmul.f32.gmra.mxu0 %v284
  %v353 = vpop.f32.mrf.mxu0
  %v354 = vadd.f32 %v331, %v353
  %355 = vmatmul.f32.gmra.mxu0 %v287
  %v356 = vpop.f32.mrf.mxu0
  %v357 = vadd.f32 %v331, %v356
  %358 = vmatmul.f32.gmra.mxu0 %v290
  %v359 = vpop.f32.mrf.mxu0
  %v360 = vadd.f32 %v331, %v359
  %361 = vdwg.mxu0
  %v362 = vxor.u32 %v351, 2147483648
  %v363 = vxor.u32 %v354, 2147483648
  %v364 = vxor.u32 %v357, 2147483648
  %v365 = vxor.u32 %v360, 2147483648
  %v366 = vmul.f32 %v362, 1.442695
  %v367 = vpow.pop %v366
  %v368 = vmul.f32 %v363, 1.442695
  %v369 = vpow.pop %v368
  %v370 = vmul.f32 %v364, 1.442695
  %v371 = vpow.pop %v370
  %v372 = vmul.f32 %v365, 1.442695
  %v373 = vpow.pop %v372
  %v374 = vadd.f32 %v367, 1.0
  %v375 = vadd.f32 %v369, 1.0
  %v376 = vadd.f32 %v371, 1.0
  %v377 = vadd.f32 %v373, 1.0
  %v378 = vrcp.pop %v374
  %v379 = vmul.f32 %v374, %v378
  %v380 = vsub.f32 1.0, %v379
  %v381 = vmul.f32 %v378, %v380
  %v382 = vadd.f32 %v378, %v381
  %vm383 = vweird.f32 %v374
  %vm384 = vweird.f32 %v378
  %vm385 = vmor %vm383, %vm384
  %v386 = vsel %vm385, %v378, %v382
  %v387 = vand.u32 2147483647, %v374
  %vm388 = vcmp.eq.f32.partialorder %v387, 8.507059e+37
  %v389 = vand.u32 %v374, 2147483648
  %v390 = vor.u32 1.1754944e-38, %v389
  %v391 = vsel %vm388, %v390, %v386
  %v392 = vmul.f32 1.0, %v391
  %v393 = vrcp.pop %v375
  %v394 = vmul.f32 %v375, %v393
  %v395 = vsub.f32 1.0, %v394
  %v396 = vmul.f32 %v393, %v395
  %v397 = vadd.f32 %v393, %v396
  %vm398 = vweird.f32 %v375
  %vm399 = vweird.f32 %v393
  %vm400 = vmor %vm398, %vm399
  %v401 = vsel %vm400, %v393, %v397
  %v402 = vand.u32 2147483647, %v375
  %vm403 = vcmp.eq.f32.partialorder %v402, 8.507059e+37
  %v404 = vand.u32 %v375, 2147483648
  %v405 = vor.u32 1.1754944e-38, %v404
  %v406 = vsel %vm403, %v405, %v401
  %v407 = vmul.f32 1.0, %v406
  %v408 = vrcp.pop %v376
  %v409 = vmul.f32 %v376, %v408
  %v410 = vsub.f32 1.0, %v409
  %v411 = vmul.f32 %v408, %v410
  %v412 = vadd.f32 %v408, %v411
  %vm413 = vweird.f32 %v376
  %vm414 = vweird.f32 %v408
  %vm415 = vmor %vm413, %vm414
  %v416 = vsel %vm415, %v408, %v412
  %v417 = vand.u32 2147483647, %v376
  %vm418 = vcmp.eq.f32.partialorder %v417, 8.507059e+37
  %v419 = vand.u32 %v376, 2147483648
  %v420 = vor.u32 1.1754944e-38, %v419
  %v421 = vsel %vm418, %v420, %v416
  %v422 = vmul.f32 1.0, %v421
  %v423 = vrcp.pop %v377
  %v424 = vmul.f32 %v377, %v423
  %v425 = vsub.f32 1.0, %v424
  %v426 = vmul.f32 %v423, %v425
  %v427 = vadd.f32 %v423, %v426
  %vm428 = vweird.f32 %v377
  %vm429 = vweird.f32 %v423
  %vm430 = vmor %vm428, %vm429
  %v431 = vsel %vm430, %v423, %v427
  %v432 = vand.u32 2147483647, %v377
  %vm433 = vcmp.eq.f32.partialorder %v432, 8.507059e+37
  %v434 = vand.u32 %v377, 2147483648
  %v435 = vor.u32 1.1754944e-38, %v434
  %v436 = vsel %vm433, %v435, %v431
  %v437 = vmul.f32 1.0, %v436
  %v438 = vmul.f32 %v392, %v321
  %v439 = vmul.f32 %v407, %v322
  %v440 = vmul.f32 %v422, %v323
  %v441 = vmul.f32 %v437, %v324
  %v442 = vsub.f32 1.0, %v392
  %v443 = vsub.f32 1.0, %v407
  %v444 = vsub.f32 1.0, %v422
  %v445 = vsub.f32 1.0, %v437
  %v446 = vmul.f32 %v442, %v268
  %v447 = vmul.f32 %v443, %v269
  %v448 = vmul.f32 %v444, %v270
  %v449 = vmul.f32 %v445, %v271
  %v450 = vadd.f32 %v438, %v446
  %v451 = vadd.f32 %v439, %v447
  %v452 = vadd.f32 %v440, %v448
  %v453 = vadd.f32 %v441, %v449
  %454 = vst.msk [vmem:[%s10] sm:$0xff] %vm97, %v450
  %455 = vst.msk [vmem:[%s10 + $0x8] sm:$0xff] %vm97, %v451
  %456 = vst.msk [vmem:[%s10 + $0x10] sm:$0xff] %vm97, %v452
  %457 = vst.msk [vmem:[%s10 + $0x18] sm:$0xff] %vm97, %v453
  // Predicated region
  $region42: #{bidaf_forward.9} parent=0 // pred_check
    _
  $region43: #{bidaf_forward.9} parent=0 // pred_check_branch
    %459 = sbr.rel (0) target = $region45
  $region44: #{bidaf_forward.9} parent=0 // pred_region
    _
  $region45: #{bidaf_forward.9} parent=0 // pred_fallthru
    _
  // Predicated region
  $region46: #{bidaf_forward.9} parent=0 // pred_check
    _
  $region47: #{bidaf_forward.9} parent=0 // pred_check_branch
    %461 = sbr.rel (0) target = $region49
  $region48: #{bidaf_forward.9} parent=0 // pred_region
    _
  $region49: #{bidaf_forward.9} parent=0 // pred_fallthru
    _

// kernel: bidaf_forward.11
$region0: #{bidaf_forward.11}
  #allocation0 [shape = 'u32[]', space=smem, size = 0x4, offset = 0x4, fixed_abs, tag = 'smem constant byte address 0x4 - core index']
  #allocation1 [shape = 'u32[72,128]{1,0:T(1,128)}', space=vmem, size = 0x9000, scoped, tag = 'internal scratch']
  #allocation2 [shape = 'f32[32,128]{1,0:T(8,128)}', space=vmem, size = 0x4000, scoped, tag = 'scratch operand']
  #allocation3 [shape = 'f32[32,128]{1,0:T(8,128)}', space=vmem, size = 0x4000, scoped, tag = 'scratch operand']
  %s0 = inlined_call_operand.vmem [shape: f32[32,32], index: 0, kind: input, shape index: {}]
  %s1 = inlined_call_operand.vmem [shape: f32[32,128], index: 1, kind: input, shape index: {}]
  %s2 = inlined_call_operand.vmem [shape: f32[1,128], index: 2, kind: input, shape index: {}]
  %s3 = inlined_call_operand.vmem [shape: f32[32,128], index: 3, kind: input, shape index: {}]
  %s4 = inlined_call_operand.vmem [shape: f32[32,128], index: 4, kind: input, shape index: {}]
  %s5 = inlined_call_operand.vmem [shape: f32[1,128], index: 5, kind: input, shape index: {}]
  %s6 = inlined_call_operand.vmem [shape: f32[32,128], index: 6, kind: input, shape index: {}]
  %s7 = inlined_call_operand.vmem [shape: f32[32,1], index: 7, kind: input, shape index: {}]
  %s8 = inlined_call_operand.vmem [shape: f32[32,64], index: 8, kind: output, shape index: {}]
  %s9 = sld [smem:[#allocation0]]
  $region49: #{bidaf_forward.11} parent=0
    _
  %s11 = ssub.s32 1, %s9
  %s12 = scalar_select 0, %s11, %s9
  // Predicated region
  $region2: #{bidaf_forward.11} parent=0 // pred_check
    _
  $region3: #{bidaf_forward.11} parent=0 // pred_check_branch
    %14 = sbr.rel (0) target = $region5
  $region4: #{bidaf_forward.11} parent=0 // pred_region
    _
  $region5: #{bidaf_forward.11} parent=0 // pred_fallthru
    _
  // Predicated region
  $region6: #{bidaf_forward.11} parent=0 // pred_check
    _
  $region7: #{bidaf_forward.11} parent=0 // pred_check_branch
    %16 = sbr.rel (0) target = $region9
  $region8: #{bidaf_forward.11} parent=0 // pred_region
    _
  $region9: #{bidaf_forward.11} parent=0 // pred_fallthru
    _
  // Predicated region
  $region10: #{bidaf_forward.11} parent=0 // pred_check
    _
  $region11: #{bidaf_forward.11} parent=0 // pred_check_branch
    %18 = sbr.rel (0) target = $region13
  $region12: #{bidaf_forward.11} parent=0 // pred_region
    _
  $region13: #{bidaf_forward.11} parent=0 // pred_fallthru
    _
  // Predicated region
  $region14: #{bidaf_forward.11} parent=0 // pred_check
    _
  $region15: #{bidaf_forward.11} parent=0 // pred_check_branch
    %20 = sbr.rel (0) target = $region17
  $region16: #{bidaf_forward.11} parent=0 // pred_region
    _
  $region17: #{bidaf_forward.11} parent=0 // pred_fallthru
    _
  // Predicated region
  $region18: #{bidaf_forward.11} parent=0 // pred_check
    _
  $region19: #{bidaf_forward.11} parent=0 // pred_check_branch
    %22 = sbr.rel (0) target = $region21
  $region20: #{bidaf_forward.11} parent=0 // pred_region
    _
  $region21: #{bidaf_forward.11} parent=0 // pred_fallthru
    _
  // Predicated region
  $region22: #{bidaf_forward.11} parent=0 // pred_check
    _
  $region23: #{bidaf_forward.11} parent=0 // pred_check_branch
    %24 = sbr.rel (0) target = $region25
  $region24: #{bidaf_forward.11} parent=0 // pred_region
    _
  $region25: #{bidaf_forward.11} parent=0 // pred_fallthru
    _
  // Predicated region
  $region26: #{bidaf_forward.11} parent=0 // pred_check
    _
  $region27: #{bidaf_forward.11} parent=0 // pred_check_branch
    %26 = sbr.rel (0) target = $region29
  $region28: #{bidaf_forward.11} parent=0 // pred_region
    _
  $region29: #{bidaf_forward.11} parent=0 // pred_fallthru
    _
  // Predicated region
  $region30: #{bidaf_forward.11} parent=0 // pred_check
    _
  $region31: #{bidaf_forward.11} parent=0 // pred_check_branch
    %28 = sbr.rel (0) target = $region33
  $region32: #{bidaf_forward.11} parent=0 // pred_region
    _
  $region33: #{bidaf_forward.11} parent=0 // pred_fallthru
    _
  %v29 = vld [vmem:[%s0] sm:$0xff]
  %v30 = vld [vmem:[%s0 + $0x8] sm:$0xff]
  %v31 = vld [vmem:[%s0 + $0x10] sm:$0xff]
  %v32 = vld [vmem:[%s0 + $0x18] sm:$0xff]
  %v33 = vld [vmem:[%s1] sm:$0xff]
  %v34 = vld [vmem:[%s1 + $0x8] sm:$0xff]
  %v35 = vld [vmem:[%s1 + $0x10] sm:$0xff]
  %v36 = vld [vmem:[%s1 + $0x18] sm:$0xff]
  %v37 = vld [vmem:[%s2] sm:$0x1]
  %v39 = vperm.slane %v37, 0
  %vm41 = vcmask 261120
  %v43 = vsel %vm41, %v29, 0
  %v46 = vsel %vm41, %v30, 0
  %v49 = vsel %vm41, %v31, 0
  %v52 = vsel %vm41, %v32, 0
  %54 = vmatpush.msra.mxu0 0.0
  %55 = vmatpush.msra.mxu0 0.0
  %56 = vmatpush.msra.mxu0 0.0
  %57 = vmatpush.msra.mxu0 0.0
  %58 = vmatpush.msra.mxu0 0.0
  %59 = vmatpush.msra.mxu0 0.0
  %60 = vmatpush.msra.mxu0 0.0
  %61 = vmatpush.msra.mxu0 0.0
  %62 = vmatpush.msra.mxu0 0.0
  %63 = vmatpush.msra.mxu0 0.0
  %64 = vmatpush.msra.mxu0 0.0
  %65 = vmatpush.msra.mxu0 0.0
  %66 = vmatpush.msra.mxu0 %v36
  %67 = vmatpush.msra.mxu0 %v35
  %68 = vmatpush.msra.mxu0 %v34
  %69 = vmatpush.msra.mxu0 %v33
  %70 = vmatmul.f32.gmra.mxu0 %v43
  %v71 = vpop.f32.mrf.mxu0
  %v72 = vadd.f32 %v39, %v71
  %73 = vmatmul.f32.gmra.mxu0 %v46
  %v74 = vpop.f32.mrf.mxu0
  %v75 = vadd.f32 %v39, %v74
  %76 = vmatmul.f32.gmra.mxu0 %v49
  %v77 = vpop.f32.mrf.mxu0
  %v78 = vadd.f32 %v39, %v77
  %79 = vmatmul.f32.gmra.mxu0 %v52
  %v80 = vpop.f32.mrf.mxu0
  %v81 = vadd.f32 %v39, %v80
  %82 = vdwg.mxu0
  %83 = vst [vmem:[#allocation2] sm:$0xff] %v72
  %84 = vst [vmem:[#allocation2 + $0x8] sm:$0xff] %v75
  %85 = vst [vmem:[#allocation2 + $0x10] sm:$0xff] %v78
  %86 = vst [vmem:[#allocation2 + $0x18] sm:$0xff] %v81
  %v87 = vld [vmem:[%s4] sm:$0xff]
  %v88 = vld [vmem:[%s4 + $0x8] sm:$0xff]
  %v89 = vld [vmem:[%s4 + $0x10] sm:$0xff]
  %v90 = vld [vmem:[%s4 + $0x18] sm:$0xff]
  %v91 = vld [vmem:[%s5] sm:$0x1]
  %v93 = vperm.slane %v91, 0
  %95 = vmatpush.msra.mxu0 0.0
  %96 = vmatpush.msra.mxu0 0.0
  %97 = vmatpush.msra.mxu0 0.0
  %98 = vmatpush.msra.mxu0 0.0
  %99 = vmatpush.msra.mxu0 0.0
  %100 = vmatpush.msra.mxu0 0.0
  %101 = vmatpush.msra.mxu0 0.0
  %102 = vmatpush.msra.mxu0 0.0
  %103 = vmatpush.msra.mxu0 0.0
  %104 = vmatpush.msra.mxu0 0.0
  %105 = vmatpush.msra.mxu0 0.0
  %106 = vmatpush.msra.mxu0 0.0
  %107 = vmatpush.msra.mxu0 %v90
  %108 = vmatpush.msra.mxu0 %v89
  %109 = vmatpush.msra.mxu0 %v88
  %110 = vmatpush.msra.mxu0 %v87
  %111 = vmatmul.f32.gmra.mxu0 %v43
  %v112 = vpop.f32.mrf.mxu0
  %v113 = vadd.f32 %v93, %v112
  %114 = vmatmul.f32.gmra.mxu0 %v46
  %v115 = vpop.f32.mrf.mxu0
  %v116 = vadd.f32 %v93, %v115
  %117 = vmatmul.f32.gmra.mxu0 %v49
  %v118 = vpop.f32.mrf.mxu0
  %v119 = vadd.f32 %v93, %v118
  %120 = vmatmul.f32.gmra.mxu0 %v52
  %v121 = vpop.f32.mrf.mxu0
  %v122 = vadd.f32 %v93, %v121
  %123 = vdwg.mxu0
  %124 = vst [vmem:[#allocation3] sm:$0xff] %v113
  %125 = vst [vmem:[#allocation3 + $0x8] sm:$0xff] %v116
  %126 = vst [vmem:[#allocation3 + $0x10] sm:$0xff] %v119
  %127 = vst [vmem:[#allocation3 + $0x18] sm:$0xff] %v122
  %v128 = vld [vmem:[%s3] sm:$0xff]
  %v129 = vld [vmem:[%s3 + $0x8] sm:$0xff]
  %v130 = vld [vmem:[%s3 + $0x10] sm:$0xff]
  %v131 = vld [vmem:[%s3 + $0x18] sm:$0xff]
  %v132 = vld [vmem:[%s6] sm:$0xff]
  %v133 = vld [vmem:[%s6 + $0x8] sm:$0xff]
  %v134 = vld [vmem:[%s6 + $0x10] sm:$0xff]
  %v135 = vld [vmem:[%s6 + $0x18] sm:$0xff]
  loop: start=0, step=1, limit=16
  $region34: #{bidaf_forward.11} parent=0 // loop_pre_header
    _
  $region35: #{bidaf_forward.11} parent=0 // loop_header
    %s137 = sphi 0, %s141
    %p138 = scmp.ge.s32.totalorder %s137, 16
    %v142 = vphi 0.0, %v316
    %v143 = vphi 0.0, %v319
    %v144 = vphi 0.0, %v327
    %v145 = vphi 0.0, %v330
  $region36: #{bidaf_forward.11} parent=0 // loop_header_branch
    %140 = sbr.rel (%p138) target = $region40
  $region37: #{bidaf_forward.11} parent=0 // loop_body
    %s146 = smul.u32 %s137, 2
    %s147 = ssub.s32 15, %s137
    %s148 = smul.u32 %s147, 2
    %s149 = scalar_lea.vmem [#allocation2], %s146
    %v150 = vld [vmem:[%s149] sm:$0x3]
    %152 = vrot.lane.b32.xlu0 %v142, 32
    %v153 = vpop.permute.xlu0 %152
    %v154 = vsel %vm41, %v153, 0
    %156 = vmatpush.msra.mxu0 0.0
    %157 = vmatpush.msra.mxu0 0.0
    %158 = vmatpush.msra.mxu0 0.0
    %159 = vmatpush.msra.mxu0 0.0
    %160 = vmatpush.msra.mxu0 0.0
    %161 = vmatpush.msra.mxu0 0.0
    %162 = vmatpush.msra.mxu0 0.0
    %163 = vmatpush.msra.mxu0 0.0
    %164 = vmatpush.msra.mxu0 0.0
    %165 = vmatpush.msra.mxu0 0.0
    %166 = vmatpush.msra.mxu0 0.0
    %167 = vmatpush.msra.mxu0 0.0
    %168 = vmatpush.msra.mxu0 %v131
    %169 = vmatpush.msra.mxu0 %v130
    %170 = vmatpush.msra.mxu0 %v129
    %171 = vmatpush.msra.mxu0 %v128
    %172 = vmatmul.f32.gmra.mxu0 %v154
    %v173 = vpop.f32.mrf.mxu0
    %v174 = vadd.f32 0.0, %v173
    %175 = vdwg.mxu0
    %v176 = vadd.f32 %v150, %v174
    %v177 = vxor.u32 %v176, 2147483648
    %v178 = vmul.f32 %v177, 1.442695
    %v179 = vpow.pop %v178
    %v180 = vadd.f32 %v179, 1.0
    %v181 = vrcp.pop %v180
    %v182 = vmul.f32 %v180, %v181
    %v183 = vsub.f32 1.0, %v182
    %v184 = vmul.f32 %v181, %v183
    %v185 = vadd.f32 %v181, %v184
    %vm186 = vweird.f32 %v180
    %vm187 = vweird.f32 %v181
    %vm188 = vmor %vm186, %vm187
    %v189 = vsel %vm188, %v181, %v185
    %v190 = vand.u32 2147483647, %v180
    %vm191 = vcmp.eq.f32.partialorder %v190, 8.507059e+37
    %v192 = vand.u32 %v180, 2147483648
    %v193 = vor.u32 1.1754944e-38, %v192
    %v194 = vsel %vm191, %v193, %v189
    %v195 = vmul.f32 1.0, %v194
    %v196 = vtanh.pop %v176
    %v197 = vmul.f32 %v195, %v143
    %199 = vrot.lane.b32.xlu0 %v196, 64
    %v200 = vpop.permute.xlu0 %199
    %v202 = vmul.f32 %v195, %v200
    %204 = vrot.lane.b32.xlu0 %v202, 32
    %v205 = vpop.permute.xlu0 %204
    %v207 = vadd.f32 %v197, %v205
    %v208 = vtanh.pop %v207
    %210 = vrot.lane.b32.xlu0 %v208, 64
    %v211 = vpop.permute.xlu0 %210
    %v213 = vmul.f32 %v195, %v211
    %s214 = scalar_lea.vmem [#allocation3], %s148
    %v215 = vld [vmem:[%s214] sm:$0x3]
    %217 = vrot.lane.b32.xlu0 %v144, 32
    %v218 = vpop.permute.xlu0 %217
    %v219 = vsel %vm41, %v218, 0
    %221 = vmatpush.msra.mxu0 0.0
    %222 = vmatpush.msra.mxu0 0.0
    %223 = vmatpush.msra.mxu0 0.0
    %224 = vmatpush.msra.mxu0 0.0
    %225 = vmatpush.msra.mxu0 0.0
    %226 = vmatpush.msra.mxu0 0.0
    %227 = vmatpush.msra.mxu0 0.0
    %228 = vmatpush.msra.mxu0 0.0
    %229 = vmatpush.msra.mxu0 0.0
    %230 = vmatpush.msra.mxu0 0.0
    %231 = vmatpush.msra.mxu0 0.0
    %232 = vmatpush.msra.mxu0 0.0
    %233 = vmatpush.msra.mxu0 %v135
    %234 = vmatpush.msra.mxu0 %v134
    %235 = vmatpush.msra.mxu0 %v133
    %236 = vmatpush.msra.mxu0 %v132
    %237 = vmatmul.f32.gmra.mxu0 %v219
    %v238 = vpop.f32.mrf.mxu0
    %v239 = vadd.f32 0.0, %v238
    %240 = vdwg.mxu0
    %v241 = vadd.f32 %v215, %v239
    %v242 = vxor.u32 %v241, 2147483648
    %v243 = vmul.f32 %v242, 1.442695
    %v244 = vpow.pop %v243
    %v245 = vadd.f32 %v244, 1.0
    %v246 = vrcp.pop %v245
    %v247 = vmul.f32 %v245, %v246
    %v248 = vsub.f32 1.0, %v247
    %v249 = vmul.f32 %v246, %v248
    %v250 = vadd.f32 %v246, %v249
    %vm251 = vweird.f32 %v245
    %vm252 = vweird.f32 %v246
    %vm253 = vmor %vm251, %vm252
    %v254 = vsel %vm253, %v246, %v250
    %v255 = vand.u32 2147483647, %v245
    %vm256 = vcmp.eq.f32.partialorder %v255, 8.507059e+37
    %v257 = vand.u32 %v245, 2147483648
    %v258 = vor.u32 1.1754944e-38, %v257
    %v259 = vsel %vm256, %v258, %v254
    %v260 = vmul.f32 1.0, %v259
    %v261 = vtanh.pop %v241
    %v262 = vmul.f32 %v260, %v145
    %264 = vrot.lane.b32.xlu0 %v261, 64
    %v265 = vpop.permute.xlu0 %264
    %v267 = vmul.f32 %v260, %v265
    %269 = vrot.lane.b32.xlu0 %v267, 32
    %v270 = vpop.permute.xlu0 %269
    %v272 = vadd.f32 %v262, %v270
    %v273 = vtanh.pop %v272
    %275 = vrot.lane.b32.xlu0 %v273, 64
    %v276 = vpop.permute.xlu0 %275
    %v278 = vmul.f32 %v260, %v276
    %s279 = scalar_lea.vmem %s7, %s146
    %v280 = vld [vmem:[%s279] sm:$0x3]
    %s281 = scalar_lea.vmem %s7, %s148
    %v282 = vld [vmem:[%s281] sm:$0x3]
    %284 = vset.pattern.permute.xlu0 0
    %285 = vperm.xlu0 %284, %v280
    %v286 = vpop.permute.xlu0 %285
    %v288 = vmul.f32 %v286, %v213
    %290 = vrot.lane.b32.xlu0 %v288, 32
    %v291 = vpop.permute.xlu0 %290
    %s293 = scalar_lea.vmem %s8, %s146
    %vm294 = vcmask 254976
    %295 = vst.msk [vmem:[%s293] sm:$0x3] %vm294, %v291
    %297 = vset.pattern.permute.xlu0 0
    %298 = vperm.xlu0 %297, %v282
    %v299 = vpop.permute.xlu0 %298
    %v301 = vmul.f32 %v299, %v278
    %303 = vrot.lane.b32.xlu0 %v301, 64
    %v304 = vpop.permute.xlu0 %303
    %s306 = scalar_lea.vmem %s8, %s148
    %vm307 = vcmask 517376
    %308 = vst.msk [vmem:[%s306] sm:$0x3] %vm307, %v304
    %v309 = vsub.f32 1.0, %v280
    %311 = vset.pattern.permute.xlu0 0
    %312 = vperm.xlu0 %311, %v309
    %v313 = vpop.permute.xlu0 %312
    %v315 = vmul.f32 %v313, %v142
    %v316 = vadd.f32 %v288, %v315
    %v317 = vmul.f32 %v286, %v207
    %v318 = vmul.f32 %v313, %v143
    %v319 = vadd.f32 %v317, %v318
    %v320 = vsub.f32 1.0, %v282
    %322 = vset.pattern.permute.xlu0 0
    %323 = vperm.xlu0 %322, %v320
    %v324 = vpop.permute.xlu0 %323
    %v326 = vmul.f32 %v324, %v144
    %v327 = vadd.f32 %v301, %v326
    %v328 = vmul.f32 %v299, %v272
    %v329 = vmul.f32 %v324, %v145
    %v330 = vadd.f32 %v328, %v329
  $region38: #{bidaf_forward.11} parent=0 // loop_footer
    %s141 = sadd.s32 1, %s137
  $region39: #{bidaf_forward.11} parent=0 // loop_footer_branch
    %136 = sbr.rel target = $region35
  $region40: #{bidaf_forward.11} parent=0 // loop_exit
    _
  // Predicated region
  $region41: #{bidaf_forward.11} parent=0 // pred_check
    _
  $region42: #{bidaf_forward.11} parent=0 // pred_check_branch
    %332 = sbr.rel (0) target = $region44
  $region43: #{bidaf_forward.11} parent=0 // pred_region
    _
  $region44: #{bidaf_forward.11} parent=0 // pred_fallthru
    _
  // Predicated region
  $region45: #{bidaf_forward.11} parent=0 // pred_check
    _
  $region46: #{bidaf_forward.11} parent=0 // pred_check_branch
    %334 = sbr.rel (0) target = $region48
  $region47: #{bidaf_forward.11} parent=0 // pred_region
    _
  $region48: #{bidaf_forward.11} parent=0 // pred_fallthru
    _

// kernel: bidaf_forward.10
$region0: #{bidaf_forward.10}
  #allocation0 [shape = 'u32[]', space=smem, size = 0x4, offset = 0x4, fixed_abs, tag = 'smem constant byte address 0x4 - core index']
  #allocation1 [shape = 'u32[72,128]{1,0:T(1,128)}', space=vmem, size = 0x9000, scoped, tag = 'internal scratch']
  %s0 = inlined_call_operand.vmem [shape: f32[16,64], index: 0, kind: input, shape index: {}]
  %s1 = inlined_call_operand.vmem [shape: f32[64,32], index: 1, kind: input, shape index: {}]
  %s2 = inlined_call_operand.vmem [shape: f32[32,32], index: 2, kind: input, shape index: {}]
  %s3 = inlined_call_operand.vmem [shape: f32[1,32], index: 3, kind: input, shape index: {}]
  %s4 = inlined_call_operand.vmem [shape: f32[32,32], index: 4, kind: input, shape index: {}]
  %s5 = inlined_call_operand.vmem [shape: f32[1,32], index: 5, kind: input, shape index: {}]
  %s6 = inlined_call_operand.vmem [shape: f32[32,32], index: 6, kind: input, shape index: {}]
  %s7 = inlined_call_operand.vmem [shape: f32[1,32], index: 7, kind: input, shape index: {}]
  %s8 = inlined_call_operand.vmem [shape: f32[32,32], index: 8, kind: input, shape index: {}]
  %s9 = inlined_call_operand.vmem [shape: f32[1,32], index: 9, kind: input, shape index: {}]
  %s10 = inlined_call_operand.vmem [shape: f32[16,32], index: 10, kind: output, shape index: {}]
  %s11 = sld [smem:[#allocation0]]
  $region50: #{bidaf_forward.10} parent=0
    _
  %s13 = ssub.s32 1, %s11
  %s14 = scalar_select 0, %s13, %s11
  // Predicated region
  $region2: #{bidaf_forward.10} parent=0 // pred_check
    _
  $region3: #{bidaf_forward.10} parent=0 // pred_check_branch
    %16 = sbr.rel (0) target = $region5
  $region4: #{bidaf_forward.10} parent=0 // pred_region
    _
  $region5: #{bidaf_forward.10} parent=0 // pred_fallthru
    _
  // Predicated region
  $region6: #{bidaf_forward.10} parent=0 // pred_check
    _
  $region7: #{bidaf_forward.10} parent=0 // pred_check_branch
    %18 = sbr.rel (0) target = $region9
  $region8: #{bidaf_forward.10} parent=0 // pred_region
    _
  $region9: #{bidaf_forward.10} parent=0 // pred_fallthru
    _
  // Predicated region
  $region10: #{bidaf_forward.10} parent=0 // pred_check
    _
  $region11: #{bidaf_forward.10} parent=0 // pred_check_branch
    %20 = sbr.rel (0) target = $region13
  $region12: #{bidaf_forward.10} parent=0 // pred_region
    _
  $region13: #{bidaf_forward.10} parent=0 // pred_fallthru
    _
  // Predicated region
  $region14: #{bidaf_forward.10} parent=0 // pred_check
    _
  $region15: #{bidaf_forward.10} parent=0 // pred_check_branch
    %22 = sbr.rel (0) target = $region17
  $region16: #{bidaf_forward.10} parent=0 // pred_region
    _
  $region17: #{bidaf_forward.10} parent=0 // pred_fallthru
    _
  // Predicated region
  $region18: #{bidaf_forward.10} parent=0 // pred_check
    _
  $region19: #{bidaf_forward.10} parent=0 // pred_check_branch
    %24 = sbr.rel (0) target = $region21
  $region20: #{bidaf_forward.10} parent=0 // pred_region
    _
  $region21: #{bidaf_forward.10} parent=0 // pred_fallthru
    _
  // Predicated region
  $region22: #{bidaf_forward.10} parent=0 // pred_check
    _
  $region23: #{bidaf_forward.10} parent=0 // pred_check_branch
    %26 = sbr.rel (0) target = $region25
  $region24: #{bidaf_forward.10} parent=0 // pred_region
    _
  $region25: #{bidaf_forward.10} parent=0 // pred_fallthru
    _
  // Predicated region
  $region26: #{bidaf_forward.10} parent=0 // pred_check
    _
  $region27: #{bidaf_forward.10} parent=0 // pred_check_branch
    %28 = sbr.rel (0) target = $region29
  $region28: #{bidaf_forward.10} parent=0 // pred_region
    _
  $region29: #{bidaf_forward.10} parent=0 // pred_fallthru
    _
  // Predicated region
  $region30: #{bidaf_forward.10} parent=0 // pred_check
    _
  $region31: #{bidaf_forward.10} parent=0 // pred_check_branch
    %30 = sbr.rel (0) target = $region33
  $region32: #{bidaf_forward.10} parent=0 // pred_region
    _
  $region33: #{bidaf_forward.10} parent=0 // pred_fallthru
    _
  // Predicated region
  $region34: #{bidaf_forward.10} parent=0 // pred_check
    _
  $region35: #{bidaf_forward.10} parent=0 // pred_check_branch
    %32 = sbr.rel (0) target = $region37
  $region36: #{bidaf_forward.10} parent=0 // pred_region
    _
  $region37: #{bidaf_forward.10} parent=0 // pred_fallthru
    _
  // Predicated region
  $region38: #{bidaf_forward.10} parent=0 // pred_check
    _
  $region39: #{bidaf_forward.10} parent=0 // pred_check_branch
    %34 = sbr.rel (0) target = $region41
  $region40: #{bidaf_forward.10} parent=0 // pred_region
    _
  $region41: #{bidaf_forward.10} parent=0 // pred_fallthru
    _
  %v35 = vld [vmem:[%s0] sm:$0xff]
  %v36 = vld [vmem:[%s0 + $0x8] sm:$0xff]
  %v37 = vld [vmem:[%s1] sm:$0xff]
  %v38 = vld [vmem:[%s1 + $0x8] sm:$0xff]
  %v39 = vld [vmem:[%s1 + $0x10] sm:$0xff]
  %v40 = vld [vmem:[%s1 + $0x18] sm:$0xff]
  %v41 = vld [vmem:[%s1 + $0x20] sm:$0xff]
  %v42 = vld [vmem:[%s1 + $0x28] sm:$0xff]
  %v43 = vld [vmem:[%s1 + $0x30] sm:$0xff]
  %v44 = vld [vmem:[%s1 + $0x38] sm:$0xff]
  %vm45 = vcmask 523264
  %v47 = vsel %vm45, %v35, 0
  %v50 = vsel %vm45, %v36, 0
  %52 = vmatpush.msra.mxu0 0.0
  %53 = vmatpush.msra.mxu0 0.0
  %54 = vmatpush.msra.mxu0 0.0
  %55 = vmatpush.msra.mxu0 0.0
  %56 = vmatpush.msra.mxu0 0.0
  %57 = vmatpush.msra.mxu0 0.0
  %58 = vmatpush.msra.mxu0 0.0
  %59 = vmatpush.msra.mxu0 0.0
  %60 = vmatpush.msra.mxu0 %v44
  %61 = vmatpush.msra.mxu0 %v43
  %62 = vmatpush.msra.mxu0 %v42
  %63 = vmatpush.msra.mxu0 %v41
  %64 = vmatpush.msra.mxu0 %v40
  %65 = vmatpush.msra.mxu0 %v39
  %66 = vmatpush.msra.mxu0 %v38
  %67 = vmatpush.msra.mxu0 %v37
  %68 = vmatmul.f32.gmra.mxu0 %v47
  %v69 = vpop.f32.mrf.mxu0
  %v70 = vadd.f32 0.0, %v69
  %71 = vmatmul.f32.gmra.mxu0 %v50
  %v72 = vpop.f32.mrf.mxu0
  %v73 = vadd.f32 0.0, %v72
  %74 = vdwg.mxu0
  %v75 = vld [vmem:[%s2] sm:$0xff]
  %v76 = vld [vmem:[%s2 + $0x8] sm:$0xff]
  %v77 = vld [vmem:[%s2 + $0x10] sm:$0xff]
  %v78 = vld [vmem:[%s2 + $0x18] sm:$0xff]
  %v79 = vld [vmem:[%s3] sm:$0x1]
  %v81 = vperm.slane %v79, 0
  %vm83 = vcmask 261120
  %v85 = vsel %vm83, %v70, 0
  %v88 = vsel %vm83, %v73, 0
  %90 = vmatpush.msra.mxu0 0.0
  %91 = vmatpush.msra.mxu0 0.0
  %92 = vmatpush.msra.mxu0 0.0
  %93 = vmatpush.msra.mxu0 0.0
  %94 = vmatpush.msra.mxu0 0.0
  %95 = vmatpush.msra.mxu0 0.0
  %96 = vmatpush.msra.mxu0 0.0
  %97 = vmatpush.msra.mxu0 0.0
  %98 = vmatpush.msra.mxu0 0.0
  %99 = vmatpush.msra.mxu0 0.0
  %100 = vmatpush.msra.mxu0 0.0
  %101 = vmatpush.msra.mxu0 0.0
  %102 = vmatpush.msra.mxu0 %v78
  %103 = vmatpush.msra.mxu0 %v77
  %104 = vmatpush.msra.mxu0 %v76
  %105 = vmatpush.msra.mxu0 %v75
  %106 = vmatmul.f32.gmra.mxu0 %v85
  %v107 = vpop.f32.mrf.mxu0
  %v108 = vadd.f32 %v81, %v107
  %109 = vmatmul.f32.gmra.mxu0 %v88
  %v110 = vpop.f32.mrf.mxu0
  %v111 = vadd.f32 %v81, %v110
  %112 = vdwg.mxu0
  %v113 = vmax.f32 %v108, 0.0
  %v114 = vmax.f32 %v111, 0.0
  %v115 = vld [vmem:[%s4] sm:$0xff]
  %v116 = vld [vmem:[%s4 + $0x8] sm:$0xff]
  %v117 = vld [vmem:[%s4 + $0x10] sm:$0xff]
  %v118 = vld [vmem:[%s4 + $0x18] sm:$0xff]
  %v119 = vld [vmem:[%s5] sm:$0x1]
  %v121 = vperm.slane %v119, 0
  %123 = vmatpush.msra.mxu0 0.0
  %124 = vmatpush.msra.mxu0 0.0
  %125 = vmatpush.msra.mxu0 0.0
  %126 = vmatpush.msra.mxu0 0.0
  %127 = vmatpush.msra.mxu0 0.0
  %128 = vmatpush.msra.mxu0 0.0
  %129 = vmatpush.msra.mxu0 0.0
  %130 = vmatpush.msra.mxu0 0.0
  %131 = vmatpush.msra.mxu0 0.0
  %132 = vmatpush.msra.mxu0 0.0
  %133 = vmatpush.msra.mxu0 0.0
  %134 = vmatpush.msra.mxu0 0.0
  %135 = vmatpush.msra.mxu0 %v118
  %136 = vmatpush.msra.mxu0 %v117
  %137 = vmatpush.msra.mxu0 %v116
  %138 = vmatpush.msra.mxu0 %v115
  %139 = vmatmul.f32.gmra.mxu0 %v85
  %v140 = vpop.f32.mrf.mxu0
  %v141 = vadd.f32 %v121, %v140
  %142 = vmatmul.f32.gmra.mxu0 %v88
  %v143 = vpop.f32.mrf.mxu0
  %v144 = vadd.f32 %v121, %v143
  %145 = vdwg.mxu0
  %v146 = vxor.u32 %v141, 2147483648
  %v147 = vxor.u32 %v144, 2147483648
  %v148 = vmul.f32 %v146, 1.442695
  %v149 = vpow.pop %v148
  %v150 = vmul.f32 %v147, 1.442695
  %v151 = vpow.pop %v150
  %v152 = vadd.f32 %v149, 1.0
  %v153 = vadd.f32 %v151, 1.0
  %v154 = vrcp.pop %v152
  %v155 = vmul.f32 %v152, %v154
  %v156 = vsub.f32 1.0, %v155
  %v157 = vmul.f32 %v154, %v156
  %v158 = vadd.f32 %v154, %v157
  %vm159 = vweird.f32 %v152
  %vm160 = vweird.f32 %v154
  %vm161 = vmor %vm159, %vm160
  %v162 = vsel %vm161, %v154, %v158
  %v163 = vand.u32 2147483647, %v152
  %vm164 = vcmp.eq.f32.partialorder %v163, 8.507059e+37
  %v165 = vand.u32 %v152, 2147483648
  %v166 = vor.u32 1.1754944e-38, %v165
  %v167 = vsel %vm164, %v166, %v162
  %v168 = vmul.f32 1.0, %v167
  %v169 = vrcp.pop %v153
  %v170 = vmul.f32 %v153, %v169
  %v171 = vsub.f32 1.0, %v170
  %v172 = vmul.f32 %v169, %v171
  %v173 = vadd.f32 %v169, %v172
  %vm174 = vweird.f32 %v153
  %vm175 = vweird.f32 %v169
  %vm176 = vmor %vm174, %vm175
  %v177 = vsel %vm176, %v169, %v173
  %v178 = vand.u32 2147483647, %v153
  %vm179 = vcmp.eq.f32.partialorder %v178, 8.507059e+37
  %v180 = vand.u32 %v153, 2147483648
  %v181 = vor.u32 1.1754944e-38, %v180
  %v182 = vsel %vm179, %v181, %v177
  %v183 = vmul.f32 1.0, %v182
  %v184 = vmul.f32 %v168, %v113
  %v185 = vmul.f32 %v183, %v114
  %v186 = vsub.f32 1.0, %v168
  %v187 = vsub.f32 1.0, %v183
  %v188 = vmul.f32 %v186, %v70
  %v189 = vmul.f32 %v187, %v73
  %v190 = vadd.f32 %v184, %v188
  %v191 = vadd.f32 %v185, %v189
  %v192 = vld [vmem:[%s6] sm:$0xff]
  %v193 = vld [vmem:[%s6 + $0x8] sm:$0xff]
  %v194 = vld [vmem:[%s6 + $0x10] sm:$0xff]
  %v195 = vld [vmem:[%s6 + $0x18] sm:$0xff]
  %v196 = vld [vmem:[%s7] sm:$0x1]
  %v198 = vperm.slane %v196, 0
  %v201 = vsel %vm83, %v190, 0
  %v204 = vsel %vm83, %v191, 0
  %206 = vmatpush.msra.mxu0 0.0
  %207 = vmatpush.msra.mxu0 0.0
  %208 = vmatpush.msra.mxu0 0.0
  %209 = vmatpush.msra.mxu0 0.0
  %210 = vmatpush.msra.mxu0 0.0
  %211 = vmatpush.msra.mxu0 0.0
  %212 = vmatpush.msra.mxu0 0.0
  %213 = vmatpush.msra.mxu0 0.0
  %214 = vmatpush.msra.mxu0 0.0
  %215 = vmatpush.msra.mxu0 0.0
  %216 = vmatpush.msra.mxu0 0.0
  %217 = vmatpush.msra.mxu0 0.0
  %218 = vmatpush.msra.mxu0 %v195
  %219 = vmatpush.msra.mxu0 %v194
  %220 = vmatpush.msra.mxu0 %v193
  %221 = vmatpush.msra.mxu0 %v192
  %222 = vmatmul.f32.gmra.mxu0 %v201
  %v223 = vpop.f32.mrf.mxu0
  %v224 = vadd.f32 %v198, %v223
  %225 = vmatmul.f32.gmra.mxu0 %v204
  %v226 = vpop.f32.mrf.mxu0
  %v227 = vadd.f32 %v198, %v226
  %228 = vdwg.mxu0
  %v229 = vmax.f32 %v224, 0.0
  %v230 = vmax.f32 %v227, 0.0
  %v231 = vld [vmem:[%s8] sm:$0xff]
  %v232 = vld [vmem:[%s8 + $0x8] sm:$0xff]
  %v233 = vld [vmem:[%s8 + $0x10] sm:$0xff]
  %v234 = vld [vmem:[%s8 + $0x18] sm:$0xff]
  %v235 = vld [vmem:[%s9] sm:$0x1]
  %v237 = vperm.slane %v235, 0
  %239 = vmatpush.msra.mxu0 0.0
  %240 = vmatpush.msra.mxu0 0.0
  %241 = vmatpush.msra.mxu0 0.0
  %242 = vmatpush.msra.mxu0 0.0
  %243 = vmatpush.msra.mxu0 0.0
  %244 = vmatpush.msra.mxu0 0.0
  %245 = vmatpush.msra.mxu0 0.0
  %246 = vmatpush.msra.mxu0 0.0
  %247 = vmatpush.msra.mxu0 0.0
  %248 = vmatpush.msra.mxu0 0.0
  %249 = vmatpush.msra.mxu0 0.0
  %250 = vmatpush.msra.mxu0 0.0
  %251 = vmatpush.msra.mxu0 %v234
  %252 = vmatpush.msra.mxu0 %v233
  %253 = vmatpush.msra.mxu0 %v232
  %254 = vmatpush.msra.mxu0 %v231
  %255 = vmatmul.f32.gmra.mxu0 %v201
  %v256 = vpop.f32.mrf.mxu0
  %v257 = vadd.f32 %v237, %v256
  %258 = vmatmul.f32.gmra.mxu0 %v204
  %v259 = vpop.f32.mrf.mxu0
  %v260 = vadd.f32 %v237, %v259
  %261 = vdwg.mxu0
  %v262 = vxor.u32 %v257, 2147483648
  %v263 = vxor.u32 %v260, 2147483648
  %v264 = vmul.f32 %v262, 1.442695
  %v265 = vpow.pop %v264
  %v266 = vmul.f32 %v263, 1.442695
  %v267 = vpow.pop %v266
  %v268 = vadd.f32 %v265, 1.0
  %v269 = vadd.f32 %v267, 1.0
  %v270 = vrcp.pop %v268
  %v271 = vmul.f32 %v268, %v270
  %v272 = vsub.f32 1.0, %v271
  %v273 = vmul.f32 %v270, %v272
  %v274 = vadd.f32 %v270, %v273
  %vm275 = vweird.f32 %v268
  %vm276 = vweird.f32 %v270
  %vm277 = vmor %vm275, %vm276
  %v278 = vsel %vm277, %v270, %v274
  %v279 = vand.u32 2147483647, %v268
  %vm280 = vcmp.eq.f32.partialorder %v279, 8.507059e+37
  %v281 = vand.u32 %v268, 2147483648
  %v282 = vor.u32 1.1754944e-38, %v281
  %v283 = vsel %vm280, %v282, %v278
  %v284 = vmul.f32 1.0, %v283
  %v285 = vrcp.pop %v269
  %v286 = vmul.f32 %v269, %v285
  %v287 = vsub.f32 1.0, %v286
  %v288 = vmul.f32 %v285, %v287
  %v289 = vadd.f32 %v285, %v288
  %vm290 = vweird.f32 %v269
  %vm291 = vweird.f32 %v285
  %vm292 = vmor %vm290, %vm291
  %v293 = vsel %vm292, %v285, %v289
  %v294 = vand.u32 2147483647, %v269
  %vm295 = vcmp.eq.f32.partialorder %v294, 8.507059e+37
  %v296 = vand.u32 %v269, 2147483648
  %v297 = vor.u32 1.1754944e-38, %v296
  %v298 = vsel %vm295, %v297, %v293
  %v299 = vmul.f32 1.0, %v298
  %v300 = vmul.f32 %v284, %v229
  %v301 = vmul.f32 %v299, %v230
  %v302 = vsub.f32 1.0, %v284
  %v303 = vsub.f32 1.0, %v299
  %v304 = vmul.f32 %v302, %v190
  %v305 = vmul.f32 %v303, %v191
  %v306 = vadd.f32 %v300, %v304
  %v307 = vadd.f32 %v301, %v305
  %308 = vst.msk [vmem:[%s10] sm:$0xff] %vm83, %v306
  %309 = vst.msk [vmem:[%s10 + $0x8] sm:$0xff] %vm83, %v307
  // Predicated region
  $region42: #{bidaf_forward.10} parent=0 // pred_check
    _
  $region43: #{bidaf_forward.10} parent=0 // pred_check_branch
    %311 = sbr.rel (0) target = $region45
  $region44: #{bidaf_forward.10} parent=0 // pred_region
    _
  $region45: #{bidaf_forward.10} parent=0 // pred_fallthru
    _
  // Predicated region
  $region46: #{bidaf_forward.10} parent=0 // pred_check
    _
  $region47: #{bidaf_forward.10} parent=0 // pred_check_branch
    %313 = sbr.rel (0) target = $region49
  $region48: #{bidaf_forward.10} parent=0 // pred_region
    _
  $region49: #{bidaf_forward.10} parent=0 // pred_fallthru
    _

// kernel: bidaf_forward.12
$region0: #{bidaf_forward.12}
  #allocation0 [shape = 'u32[]', space=smem, size = 0x4, offset = 0x4, fixed_abs, tag = 'smem constant byte address 0x4 - core index']
  #allocation1 [shape = 'u32[72,128]{1,0:T(1,128)}', space=vmem, size = 0x9000, scoped, tag = 'internal scratch']
  #allocation2 [shape = 'f32[16,128]{1,0:T(8,128)}', space=vmem, size = 0x2000, scoped, tag = 'scratch operand']
  #allocation3 [shape = 'f32[16,128]{1,0:T(8,128)}', space=vmem, size = 0x2000, scoped, tag = 'scratch operand']
  %s0 = inlined_call_operand.vmem [shape: f32[16,32], index: 0, kind: input, shape index: {}]
  %s1 = inlined_call_operand.vmem [shape: f32[32,128], index: 1, kind: input, shape index: {}]
  %s2 = inlined_call_operand.vmem [shape: f32[1,128], index: 2, kind: input, shape index: {}]
  %s3 = inlined_call_operand.vmem [shape: f32[32,128], index: 3, kind: input, shape index: {}]
  %s4 = inlined_call_operand.vmem [shape: f32[32,128], index: 4, kind: input, shape index: {}]
  %s5 = inlined_call_operand.vmem [shape: f32[1,128], index: 5, kind: input, shape index: {}]
  %s6 = inlined_call_operand.vmem [shape: f32[32,128], index: 6, kind: input, shape index: {}]
  %s7 = inlined_call_operand.vmem [shape: f32[16,1], index: 7, kind: input, shape index: {}]
  %s8 = inlined_call_operand.vmem [shape: f32[16,64], index: 8, kind: output, shape index: {}]
  %s9 = sld [smem:[#allocation0]]
  $region49: #{bidaf_forward.12} parent=0
    _
  %s11 = ssub.s32 1, %s9
  %s12 = scalar_select 0, %s11, %s9
  // Predicated region
  $region2: #{bidaf_forward.12} parent=0 // pred_check
    _
  $region3: #{bidaf_forward.12} parent=0 // pred_check_branch
    %14 = sbr.rel (0) target = $region5
  $region4: #{bidaf_forward.12} parent=0 // pred_region
    _
  $region5: #{bidaf_forward.12} parent=0 // pred_fallthru
    _
  // Predicated region
  $region6: #{bidaf_forward.12} parent=0 // pred_check
    _
  $region7: #{bidaf_forward.12} parent=0 // pred_check_branch
    %16 = sbr.rel (0) target = $region9
  $region8: #{bidaf_forward.12} parent=0 // pred_region
    _
  $region9: #{bidaf_forward.12} parent=0 // pred_fallthru
    _
  // Predicated region
  $region10: #{bidaf_forward.12} parent=0 // pred_check
    _
  $region11: #{bidaf_forward.12} parent=0 // pred_check_branch
    %18 = sbr.rel (0) target = $region13
  $region12: #{bidaf_forward.12} parent=0 // pred_region
    _
  $region13: #{bidaf_forward.12} parent=0 // pred_fallthru
    _
  // Predicated region
  $region14: #{bidaf_forward.12} parent=0 // pred_check
    _
  $region15: #{bidaf_forward.12} parent=0 // pred_check_branch
    %20 = sbr.rel (0) target = $region17
  $region16: #{bidaf_forward.12} parent=0 // pred_region
    _
  $region17: #{bidaf_forward.12} parent=0 // pred_fallthru
    _
  // Predicated region
  $region18: #{bidaf_forward.12} parent=0 // pred_check
    _
  $region19: #{bidaf_forward.12} parent=0 // pred_check_branch
    %22 = sbr.rel (0) target = $region21
  $region20: #{bidaf_forward.12} parent=0 // pred_region
    _
  $region21: #{bidaf_forward.12} parent=0 // pred_fallthru
    _
  // Predicated region
  $region22: #{bidaf_forward.12} parent=0 // pred_check
    _
  $region23: #{bidaf_forward.12} parent=0 // pred_check_branch
    %24 = sbr.rel (0) target = $region25
  $region24: #{bidaf_forward.12} parent=0 // pred_region
    _
  $region25: #{bidaf_forward.12} parent=0 // pred_fallthru
    _
  // Predicated region
  $region26: #{bidaf_forward.12} parent=0 // pred_check
    _
  $region27: #{bidaf_forward.12} parent=0 // pred_check_branch
    %26 = sbr.rel (0) target = $region29
  $region28: #{bidaf_forward.12} parent=0 // pred_region
    _
  $region29: #{bidaf_forward.12} parent=0 // pred_fallthru
    _
  // Predicated region
  $region30: #{bidaf_forward.12} parent=0 // pred_check
    _
  $region31: #{bidaf_forward.12} parent=0 // pred_check_branch
    %28 = sbr.rel (0) target = $region33
  $region32: #{bidaf_forward.12} parent=0 // pred_region
    _
  $region33: #{bidaf_forward.12} parent=0 // pred_fallthru
    _
  %v29 = vld [vmem:[%s0] sm:$0xff]
  %v30 = vld [vmem:[%s0 + $0x8] sm:$0xff]
  %v31 = vld [vmem:[%s1] sm:$0xff]
  %v32 = vld [vmem:[%s1 + $0x8] sm:$0xff]
  %v33 = vld [vmem:[%s1 + $0x10] sm:$0xff]
  %v34 = vld [vmem:[%s1 + $0x18] sm:$0xff]
  %v35 = vld [vmem:[%s2] sm:$0x1]
  %v37 = vperm.slane %v35, 0
  %vm39 = vcmask 261120
  %v41 = vsel %vm39, %v29, 0
  %v44 = vsel %vm39, %v30, 0
  %46 = vmatpush.msra.mxu0 0.0
  %47 = vmatpush.msra.mxu0 0.0
  %48 = vmatpush.msra.mxu0 0.0
  %49 = vmatpush.msra.mxu0 0.0
  %50 = vmatpush.msra.mxu0 0.0
  %51 = vmatpush.msra.mxu0 0.0
  %52 = vmatpush.msra.mxu0 0.0
  %53 = vmatpush.msra.mxu0 0.0
  %54 = vmatpush.msra.mxu0 0.0
  %55 = vmatpush.msra.mxu0 0.0
  %56 = vmatpush.msra.mxu0 0.0
  %57 = vmatpush.msra.mxu0 0.0
  %58 = vmatpush.msra.mxu0 %v34
  %59 = vmatpush.msra.mxu0 %v33
  %60 = vmatpush.msra.mxu0 %v32
  %61 = vmatpush.msra.mxu0 %v31
  %62 = vmatmul.f32.gmra.mxu0 %v41
  %v63 = vpop.f32.mrf.mxu0
  %v64 = vadd.f32 %v37, %v63
  %65 = vmatmul.f32.gmra.mxu0 %v44
  %v66 = vpop.f32.mrf.mxu0
  %v67 = vadd.f32 %v37, %v66
  %68 = vdwg.mxu0
  %69 = vst [vmem:[#allocation2] sm:$0xff] %v64
  %70 = vst [vmem:[#allocation2 + $0x8] sm:$0xff] %v67
  %v71 = vld [vmem:[%s4] sm:$0xff]
  %v72 = vld [vmem:[%s4 + $0x8] sm:$0xff]
  %v73 = vld [vmem:[%s4 + $0x10] sm:$0xff]
  %v74 = vld [vmem:[%s4 + $0x18] sm:$0xff]
  %v75 = vld [vmem:[%s5] sm:$0x1]
  %v77 = vperm.slane %v75, 0
  %79 = vmatpush.msra.mxu0 0.0
  %80 = vmatpush.msra.mxu0 0.0
  %81 = vmatpush.msra.mxu0 0.0
  %82 = vmatpush.msra.mxu0 0.0
  %83 = vmatpush.msra.mxu0 0.0
  %84 = vmatpush.msra.mxu0 0.0
  %85 = vmatpush.msra.mxu0 0.0
  %86 = vmatpush.msra.mxu0 0.0
  %87 = vmatpush.msra.mxu0 0.0
  %88 = vmatpush.msra.mxu0 0.0
  %89 = vmatpush.msra.mxu0 0.0
  %90 = vmatpush.msra.mxu0 0.0
  %91 = vmatpush.msra.mxu0 %v74
  %92 = vmatpush.msra.mxu0 %v73
  %93 = vmatpush.msra.mxu0 %v72
  %94 = vmatpush.msra.mxu0 %v71
  %95 = vmatmul.f32.gmra.mxu0 %v41
  %v96 = vpop.f32.mrf.mxu0
  %v97 = vadd.f32 %v77, %v96
  %98 = vmatmul.f32.gmra.mxu0 %v44
  %v99 = vpop.f32.mrf.mxu0
  %v100 = vadd.f32 %v77, %v99
  %101 = vdwg.mxu0
  %102 = vst [vmem:[#allocation3] sm:$0xff] %v97
  %103 = vst [vmem:[#allocation3 + $0x8] sm:$0xff] %v100
  %v104 = vld [vmem:[%s3] sm:$0xff]
  %v105 = vld [vmem:[%s3 + $0x8] sm:$0xff]
  %v106 = vld [vmem:[%s3 + $0x10] sm:$0xff]
  %v107 = vld [vmem:[%s3 + $0x18] sm:$0xff]
  %v108 = vld [vmem:[%s6] sm:$0xff]
  %v109 = vld [vmem:[%s6 + $0x8] sm:$0xff]
  %v110 = vld [vmem:[%s6 + $0x10] sm:$0xff]
  %v111 = vld [vmem:[%s6 + $0x18] sm:$0xff]
  loop: start=0, step=1, limit=8
  $region34: #{bidaf_forward.12} parent=0 // loop_pre_header
    _
  $region35: #{bidaf_forward.12} parent=0 // loop_header
    %s113 = sphi 0, %s117
    %p114 = scmp.ge.s32.totalorder %s113, 8
    %v118 = vphi 0.0, %v292
    %v119 = vphi 0.0, %v295
    %v120 = vphi 0.0, %v303
    %v121 = vphi 0.0, %v306
  $region36: #{bidaf_forward.12} parent=0 // loop_header_branch
    %116 = sbr.rel (%p114) target = $region40
  $region37: #{bidaf_forward.12} parent=0 // loop_body
    %s122 = smul.u32 %s113, 2
    %s123 = ssub.s32 7, %s113
    %s124 = smul.u32 %s123, 2
    %s125 = scalar_lea.vmem [#allocation2], %s122
    %v126 = vld [vmem:[%s125] sm:$0x3]
    %128 = vrot.lane.b32.xlu0 %v118, 32
    %v129 = vpop.permute.xlu0 %128
    %v130 = vsel %vm39, %v129, 0
    %132 = vmatpush.msra.mxu0 0.0
    %133 = vmatpush.msra.mxu0 0.0
    %134 = vmatpush.msra.mxu0 0.0
    %135 = vmatpush.msra.mxu0 0.0
    %136 = vmatpush.msra.mxu0 0.0
    %137 = vmatpush.msra.mxu0 0.0
    %138 = vmatpush.msra.mxu0 0.0
    %139 = vmatpush.msra.mxu0 0.0
    %140 = vmatpush.msra.mxu0 0.0
    %141 = vmatpush.msra.mxu0 0.0
    %142 = vmatpush.msra.mxu0 0.0
    %143 = vmatpush.msra.mxu0 0.0
    %144 = vmatpush.msra.mxu0 %v107
    %145 = vmatpush.msra.mxu0 %v106
    %146 = vmatpush.msra.mxu0 %v105
    %147 = vmatpush.msra.mxu0 %v104
    %148 = vmatmul.f32.gmra.mxu0 %v130
    %v149 = vpop.f32.mrf.mxu0
    %v150 = vadd.f32 0.0, %v149
    %151 = vdwg.mxu0
    %v152 = vadd.f32 %v126, %v150
    %v153 = vxor.u32 %v152, 2147483648
    %v154 = vmul.f32 %v153, 1.442695
    %v155 = vpow.pop %v154
    %v156 = vadd.f32 %v155, 1.0
    %v157 = vrcp.pop %v156
    %v158 = vmul.f32 %v156, %v157
    %v159 = vsub.f32 1.0, %v158
    %v160 = vmul.f32 %v157, %v159
    %v161 = vadd.f32 %v157, %v160
    %vm162 = vweird.f32 %v156
    %vm163 = vweird.f32 %v157
    %vm164 = vmor %vm162, %vm163
    %v165 = vsel %vm164, %v157, %v161
    %v166 = vand.u32 2147483647, %v156
    %vm167 = vcmp.eq.f32.partialorder %v166, 8.507059e+37
    %v168 = vand.u32 %v156, 2147483648
    %v169 = vor.u32 1.1754944e-38, %v168
    %v170 = vsel %vm167, %v169, %v165
    %v171 = vmul.f32 1.0, %v170
    %v172 = vtanh.pop %v152
    %v173 = vmul.f32 %v171, %v119
    %175 = vrot.lane.b32.xlu0 %v172, 64
    %v176 = vpop.permute.xlu0 %175
    %v178 = vmul.f32 %v171, %v176
    %180 = vrot.lane.b32.xlu0 %v178, 32
    %v181 = vpop.permute.xlu0 %180
    %v183 = vadd.f32 %v173, %v181
    %v184 = vtanh.pop %v183
    %186 = vrot.lane.b32.xlu0 %v184, 64
    %v187 = vpop.permute.xlu0 %186
    %v189 = vmul.f32 %v171, %v187
    %s190 = scalar_lea.vmem [#allocation3], %s124
    %v191 = vld [vmem:[%s190] sm:$0x3]
    %193 = vrot.lane.b32.xlu0 %v120, 32
    %v194 = vpop.permute.xlu0 %193
    %v195 = vsel %vm39, %v194, 0
    %197 = vmatpush.msra.mxu0 0.0
    %198 = vmatpush.msra.mxu0 0.0
    %199 = vmatpush.msra.mxu0 0.0
    %200 = vmatpush.msra.mxu0 0.0
    %201 = vmatpush.msra.mxu0 0.0
    %202 = vmatpush.msra.mxu0 0.0
    %203 = vmatpush.msra.mxu0 0.0
    %204 = vmatpush.msra.mxu0 0.0
    %205 = vmatpush.msra.mxu0 0.0
    %206 = vmatpush.msra.mxu0 0.0
    %207 = vmatpush.msra.mxu0 0.0
    %208 = vmatpush.msra.mxu0 0.0
    %209 = vmatpush.msra.mxu0 %v111
    %210 = vmatpush.msra.mxu0 %v110
    %211 = vmatpush.msra.mxu0 %v109
    %212 = vmatpush.msra.mxu0 %v108
    %213 = vmatmul.f32.gmra.mxu0 %v195
    %v214 = vpop.f32.mrf.mxu0
    %v215 = vadd.f32 0.0, %v214
    %216 = vdwg.mxu0
    %v217 = vadd.f32 %v191, %v215
    %v218 = vxor.u32 %v217, 2147483648
    %v219 = vmul.f32 %v218, 1.442695
    %v220 = vpow.pop %v219
    %v221 = vadd.f32 %v220, 1.0
    %v222 = vrcp.pop %v221
    %v223 = vmul.f32 %v221, %v222
    %v224 = vsub.f32 1.0, %v223
    %v225 = vmul.f32 %v222, %v224
    %v226 = vadd.f32 %v222, %v225
    %vm227 = vweird.f32 %v221
    %vm228 = vweird.f32 %v222
    %vm229 = vmor %vm227, %vm228
    %v230 = vsel %vm229, %v222, %v226
    %v231 = vand.u32 2147483647, %v221
    %vm232 = vcmp.eq.f32.partialorder %v231, 8.507059e+37
    %v233 = vand.u32 %v221, 2147483648
    %v234 = vor.u32 1.1754944e-38, %v233
    %v235 = vsel %vm232, %v234, %v230
    %v236 = vmul.f32 1.0, %v235
    %v237 = vtanh.pop %v217
    %v238 = vmul.f32 %v236, %v121
    %240 = vrot.lane.b32.xlu0 %v237, 64
    %v241 = vpop.permute.xlu0 %240
    %v243 = vmul.f32 %v236, %v241
    %245 = vrot.lane.b32.xlu0 %v243, 32
    %v246 = vpop.permute.xlu0 %245
    %v248 = vadd.f32 %v238, %v246
    %v249 = vtanh.pop %v248
    %251 = vrot.lane.b32.xlu0 %v249, 64
    %v252 = vpop.permute.xlu0 %251
    %v254 = vmul.f32 %v236, %v252
    %s255 = scalar_lea.vmem %s7, %s122
    %v256 = vld [vmem:[%s255] sm:$0x3]
    %s257 = scalar_lea.vmem %s7, %s124
    %v258 = vld [vmem:[%s257] sm:$0x3]
    %260 = vset.pattern.permute.xlu0 0
    %261 = vperm.xlu0 %260, %v256
    %v262 = vpop.permute.xlu0 %261
    %v264 = vmul.f32 %v262, %v189
    %266 = vrot.lane.b32.xlu0 %v264, 32
    %v267 = vpop.permute.xlu0 %266
    %s269 = scalar_lea.vmem %s8, %s122
    %vm270 = vcmask 254976
    %271 = vst.msk [vmem:[%s269] sm:$0x3] %vm270, %v267
    %273 = vset.pattern.permute.xlu0 0
    %274 = vperm.xlu0 %273, %v258
    %v275 = vpop.permute.xlu0 %274
    %v277 = vmul.f32 %v275, %v254
    %279 = vrot.lane.b32.xlu0 %v277, 64
    %v280 = vpop.permute.xlu0 %279
    %s282 = scalar_lea.vmem %s8, %s124
    %vm283 = vcmask 517376
    %284 = vst.msk [vmem:[%s282] sm:$0x3] %vm283, %v280
    %v285 = vsub.f32 1.0, %v256
    %287 = vset.pattern.permute.xlu0 0
    %288 = vperm.xlu0 %287, %v285
    %v289 = vpop.permute.xlu0 %288
    %v291 = vmul.f32 %v289, %v118
    %v292 = vadd.f32 %v264, %v291
    %v293 = vmul.f32 %v262, %v183
    %v294 = vmul.f32 %v289, %v119
    %v295 = vadd.f32 %v293, %v294
    %v296 = vsub.f32 1.0, %v258
    %298 = vset.pattern.permute.xlu0 0
    %299 = vperm.xlu0 %298, %v296
    %v300 = vpop.permute.xlu0 %299
    %v302 = vmul.f32 %v300, %v120
    %v303 = vadd.f32 %v277, %v302
    %v304 = vmul.f32 %v275, %v248
    %v305 = vmul.f32 %v300, %v121
    %v306 = vadd.f32 %v304, %v305
  $region38: #{bidaf_forward.12} parent=0 // loop_footer
    %s117 = sadd.s32 1, %s113
  $region39: #{bidaf_forward.12} parent=0 // loop_footer_branch
    %112 = sbr.rel target = $region35
  $region40: #{bidaf_forward.12} parent=0 // loop_exit
    _
  // Predicated region
  $region41: #{bidaf_forward.12} parent=0 // pred_check
    _
  $region42: #{bidaf_forward.12} parent=0 // pred_check_branch
    %308 = sbr.rel (0) target = $region44
  $region43: #{bidaf_forward.12} parent=0 // pred_region
    _
  $region44: #{bidaf_forward.12} parent=0 // pred_fallthru
    _
  // Predicated region
  $region45: #{bidaf_forward.12} parent=0 // pred_check
    _
  $region46: #{bidaf_forward.12} parent=0 // pred_check_branch
    %310 = sbr.rel (0) target = $region48
  $region47: #{bidaf_forward.12} parent=0 // pred_region
    _
  $region48: #{bidaf_forward.12} parent=0 // pred_fallthru
    _

// kernel: bidaf_forward.13
$region0: #{bidaf_forward.13}
  #allocation0 [shape = 'u32[]', space=smem, size = 0x4, offset = 0x4, fixed_abs, tag = 'smem constant byte address 0x4 - core index']
  #allocation1 [shape = 'u32[72,128]{1,0:T(1,128)}', space=vmem, size = 0x9000, scoped, tag = 'internal scratch']
  #allocation2 [shape = 'f32[1,1]{1,0:T(1,128)S(1)}', space=vmem, size = 0x200, scoped, tag = 'scoped memory for bidaf_forward.13']
  %s0 = inlined_call_operand.vmem [shape: f32[2,16,64], index: 0, kind: input, shape index: {}]
  %s1 = inlined_call_operand.vmem [shape: f32[2,64,8], index: 1, kind: input, shape index: {}]
  %s2 = inlined_call_operand.vmem [shape: f32[2,16,1], index: 2, kind: input, shape index: {}]
  %s3 = inlined_call_operand.vmem [shape: f32[2,1,8], index: 3, kind: input, shape index: {}]
  %s4 = inlined_call_operand.vmem [shape: f32[64,1], index: 4, kind: input, shape index: {}]
  %s5 = inlined_call_operand.vmem [shape: f32[1,64], index: 5, kind: input, shape index: {}]
  %s6 = inlined_call_operand.vmem [shape: f32[1,64], index: 6, kind: input, shape index: {}]
  %s7 = inlined_call_operand.<no memory space> [shape: f32[1,1], index: 7, kind: input, shape index: {}]
  %s8 = inlined_call_operand.vmem [shape: f32[2,16,256], index: 8, kind: output, shape index: {}]
  %s9 = sld [smem:[#allocation0]]
  $region65: #{bidaf_forward.13} parent=0
    _
  %s11 = ssub.s32 1, %s9
  %s12 = scalar_select 0, %s11, %s9
  %v13 = vstv %s7
  %14 = vst [vmem:[#allocation2] sm:$0x1] %v13
  loop: start=0, step=1, limit=4
  $region2: #{bidaf_forward.13} parent=0 // loop_pre_header
    _
  $region3: #{bidaf_forward.13} parent=0 // loop_header
    %s16 = sphi 0, %s20
    %p17 = scmp.ge.s32.totalorder %s16, 4
    %s26 = sphi 0, %s28
    %s29 = sphi 0, %s26
    %s30 = sphi 0, %s29
    %s46 = sphi 0, %s30
    %s52 = sphi 0, %s54
    %s55 = sphi 0, %s52
    %s56 = sphi 0, %s55
    %s72 = sphi 0, %s56
    %s78 = sphi 0, %s80
    %s81 = sphi 0, %s78
    %s82 = sphi 0, %s81
    %s98 = sphi 0, %s82
    %s104 = sphi 0, %s106
    %s107 = sphi 0, %s104
    %s108 = sphi 0, %s107
    %s124 = sphi 0, %s108
    %s128 = sphi 0, %s128
    %s130 = sphi 0, %s128
    %s131 = sphi 0, %s130
    %s145 = sphi 0, %s131
    %s149 = sphi 0, %s149
    %s151 = sphi 0, %s149
    %s152 = sphi 0, %s151
    %s166 = sphi 0, %s152
    %s170 = sphi 0, %s170
    %s172 = sphi 0, %s170
    %s173 = sphi 0, %s172
    %s187 = sphi 0, %s173
    %s191 = sphi 0, %s191
    %s193 = sphi 0, %s191
    %s194 = sphi 0, %s193
    %s208 = sphi 0, %s194
    %s214 = sphi 0, %s216
    %s217 = sphi 0, %s214
    %s218 = sphi 0, %s217
    %s234 = sphi 0, %s218
  $region4: #{bidaf_forward.13} parent=0 // loop_header_branch
    %19 = sbr.rel (%p17) target = $region8
  $region5: #{bidaf_forward.13} parent=0 // loop_body
    %s21 = ssub.s32 %s16, 1
    %s22 = ssub.s32 %s16, 2
    %s23 = sadd.s32 %s16, 1
    %s24 = ssub.s32 %s16, %s23
    %p25 = scmp.eq.s32.totalorder %s24, 0
    %s27 = sadd.s32 %s26, 1
    %s28 = scalar_select %p25, %s26, %s27
    %p31 = pneg %p25
    %p32 = scmp.eq.s32.totalorder %s16, 1
    %p33 = por %p31, %p32
    %p34 = scmp.ne.s32.totalorder %s26, %s29
    %p35 = scmp.eq.s32.totalorder %s16, 0
    %p36 = por %p34, %p35
    %p37 = scmp.ne.s32.totalorder %s26, %s29
    %p38 = scmp.eq.s32.totalorder %s21, 1
    %p39 = por %p37, %p38
    %p40 = scmp.ne.s32.totalorder %s29, %s30
    %p41 = scmp.eq.s32.totalorder %s21, 0
    %p42 = por %p40, %p41
    %p43 = scmp.ne.s32.totalorder %s29, %s30
    %p44 = scmp.eq.s32.totalorder %s22, 1
    %p45 = por %p43, %p44
    %p47 = scmp.ne.s32.totalorder %s30, %s46
    %p48 = scmp.eq.s32.totalorder %s22, 0
    %p49 = por %p47, %p48
    %s50 = ssub.s32 %s16, %s23
    %p51 = scmp.eq.s32.totalorder %s50, 0
    %s53 = sadd.s32 %s52, 1
    %s54 = scalar_select %p51, %s52, %s53
    %p57 = pneg %p51
    %p58 = scmp.eq.s32.totalorder %s16, 1
    %p59 = por %p57, %p58
    %p60 = scmp.ne.s32.totalorder %s52, %s55
    %p61 = scmp.eq.s32.totalorder %s16, 0
    %p62 = por %p60, %p61
    %p63 = scmp.ne.s32.totalorder %s52, %s55
    %p64 = scmp.eq.s32.totalorder %s21, 1
    %p65 = por %p63, %p64
    %p66 = scmp.ne.s32.totalorder %s55, %s56
    %p67 = scmp.eq.s32.totalorder %s21, 0
    %p68 = por %p66, %p67
    %p69 = scmp.ne.s32.totalorder %s55, %s56
    %p70 = scmp.eq.s32.totalorder %s22, 1
    %p71 = por %p69, %p70
    %p73 = scmp.ne.s32.totalorder %s56, %s72
    %p74 = scmp.eq.s32.totalorder %s22, 0
    %p75 = por %p73, %p74
    %s76 = ssub.s32 %s16, %s23
    %p77 = scmp.eq.s32.totalorder %s76, 0
    %s79 = sadd.s32 %s78, 1
    %s80 = scalar_select %p77, %s78, %s79
    %p83 = pneg %p77
    %p84 = scmp.eq.s32.totalorder %s16, 1
    %p85 = por %p83, %p84
    %p86 = scmp.ne.s32.totalorder %s78, %s81
    %p87 = scmp.eq.s32.totalorder %s16, 0
    %p88 = por %p86, %p87
    %p89 = scmp.ne.s32.totalorder %s78, %s81
    %p90 = scmp.eq.s32.totalorder %s21, 1
    %p91 = por %p89, %p90
    %p92 = scmp.ne.s32.totalorder %s81, %s82
    %p93 = scmp.eq.s32.totalorder %s21, 0
    %p94 = por %p92, %p93
    %p95 = scmp.ne.s32.totalorder %s81, %s82
    %p96 = scmp.eq.s32.totalorder %s22, 1
    %p97 = por %p95, %p96
    %p99 = scmp.ne.s32.totalorder %s82, %s98
    %p100 = scmp.eq.s32.totalorder %s22, 0
    %p101 = por %p99, %p100
    %s102 = ssub.s32 %s16, %s23
    %p103 = scmp.eq.s32.totalorder %s102, 0
    %s105 = sadd.s32 %s104, 1
    %s106 = scalar_select %p103, %s104, %s105
    %p109 = pneg %p103
    %p110 = scmp.eq.s32.totalorder %s16, 1
    %p111 = por %p109, %p110
    %p112 = scmp.ne.s32.totalorder %s104, %s107
    %p113 = scmp.eq.s32.totalorder %s16, 0
    %p114 = por %p112, %p113
    %p115 = scmp.ne.s32.totalorder %s104, %s107
    %p116 = scmp.eq.s32.totalorder %s21, 1
    %p117 = por %p115, %p116
    %p118 = scmp.ne.s32.totalorder %s107, %s108
    %p119 = scmp.eq.s32.totalorder %s21, 0
    %p120 = por %p118, %p119
    %p121 = scmp.ne.s32.totalorder %s107, %s108
    %p122 = scmp.eq.s32.totalorder %s22, 1
    %p123 = por %p121, %p122
    %p125 = scmp.ne.s32.totalorder %s108, %s124
    %p126 = scmp.eq.s32.totalorder %s22, 0
    %p127 = por %p125, %p126
    %s129 = sadd.s32 %s128, 1
    %p132 = scmp.eq.s32.totalorder %s16, 1
    %p133 = scmp.ne.s32.totalorder %s128, %s130
    %p134 = scmp.eq.s32.totalorder %s16, 0
    %p135 = por %p133, %p134
    %p136 = scmp.ne.s32.totalorder %s128, %s130
    %p137 = scmp.eq.s32.totalorder %s21, 1
    %p138 = por %p136, %p137
    %p139 = scmp.ne.s32.totalorder %s130, %s131
    %p140 = scmp.eq.s32.totalorder %s21, 0
    %p141 = por %p139, %p140
    %p142 = scmp.ne.s32.totalorder %s130, %s131
    %p143 = scmp.eq.s32.totalorder %s22, 1
    %p144 = por %p142, %p143
    %p146 = scmp.ne.s32.totalorder %s131, %s145
    %p147 = scmp.eq.s32.totalorder %s22, 0
    %p148 = por %p146, %p147
    %s150 = sadd.s32 %s149, 1
    %p153 = scmp.eq.s32.totalorder %s16, 1
    %p154 = scmp.ne.s32.totalorder %s149, %s151
    %p155 = scmp.eq.s32.totalorder %s16, 0
    %p156 = por %p154, %p155
    %p157 = scmp.ne.s32.totalorder %s149, %s151
    %p158 = scmp.eq.s32.totalorder %s21, 1
    %p159 = por %p157, %p158
    %p160 = scmp.ne.s32.totalorder %s151, %s152
    %p161 = scmp.eq.s32.totalorder %s21, 0
    %p162 = por %p160, %p161
    %p163 = scmp.ne.s32.totalorder %s151, %s152
    %p164 = scmp.eq.s32.totalorder %s22, 1
    %p165 = por %p163, %p164
    %p167 = scmp.ne.s32.totalorder %s152, %s166
    %p168 = scmp.eq.s32.totalorder %s22, 0
    %p169 = por %p167, %p168
    %s171 = sadd.s32 %s170, 1
    %p174 = scmp.eq.s32.totalorder %s16, 1
    %p175 = scmp.ne.s32.totalorder %s170, %s172
    %p176 = scmp.eq.s32.totalorder %s16, 0
    %p177 = por %p175, %p176
    %p178 = scmp.ne.s32.totalorder %s170, %s172
    %p179 = scmp.eq.s32.totalorder %s21, 1
    %p180 = por %p178, %p179
    %p181 = scmp.ne.s32.totalorder %s172, %s173
    %p182 = scmp.eq.s32.totalorder %s21, 0
    %p183 = por %p181, %p182
    %p184 = scmp.ne.s32.totalorder %s172, %s173
    %p185 = scmp.eq.s32.totalorder %s22, 1
    %p186 = por %p184, %p185
    %p188 = scmp.ne.s32.totalorder %s173, %s187
    %p189 = scmp.eq.s32.totalorder %s22, 0
    %p190 = por %p188, %p189
    %s192 = sadd.s32 %s191, 1
    %p195 = scmp.eq.s32.totalorder %s16, 1
    %p196 = scmp.ne.s32.totalorder %s191, %s193
    %p197 = scmp.eq.s32.totalorder %s16, 0
    %p198 = por %p196, %p197
    %p199 = scmp.ne.s32.totalorder %s191, %s193
    %p200 = scmp.eq.s32.totalorder %s21, 1
    %p201 = por %p199, %p200
    %p202 = scmp.ne.s32.totalorder %s193, %s194
    %p203 = scmp.eq.s32.totalorder %s21, 0
    %p204 = por %p202, %p203
    %p205 = scmp.ne.s32.totalorder %s193, %s194
    %p206 = scmp.eq.s32.totalorder %s22, 1
    %p207 = por %p205, %p206
    %p209 = scmp.ne.s32.totalorder %s194, %s208
    %p210 = scmp.eq.s32.totalorder %s22, 0
    %p211 = por %p209, %p210
    %s212 = ssub.s32 %s16, %s23
    %p213 = scmp.eq.s32.totalorder %s212, 0
    %s215 = sadd.s32 %s214, 1
    %s216 = scalar_select %p213, %s214, %s215
    %p219 = pneg %p213
    %p220 = scmp.eq.s32.totalorder %s16, 1
    %p221 = por %p219, %p220
    %p222 = scmp.ne.s32.totalorder %s214, %s217
    %p223 = scmp.eq.s32.totalorder %s16, 0
    %p224 = por %p222, %p223
    %p225 = scmp.ne.s32.totalorder %s214, %s217
    %p226 = scmp.eq.s32.totalorder %s21, 1
    %p227 = por %p225, %p226
    %p228 = scmp.ne.s32.totalorder %s217, %s218
    %p229 = scmp.eq.s32.totalorder %s21, 0
    %p230 = por %p228, %p229
    %p231 = scmp.ne.s32.totalorder %s217, %s218
    %p232 = scmp.eq.s32.totalorder %s22, 1
    %p233 = por %p231, %p232
    %p235 = scmp.ne.s32.totalorder %s218, %s234
    %p236 = scmp.eq.s32.totalorder %s22, 0
    %p237 = por %p235, %p236
    %p238 = scmp.le.s32.totalorder 1, %s16
    %p239 = scmp.lt.s32.totalorder %s16, 3
    %p240 = pnand %p238, %p239
    %p241 = pneg %p240
    // Predicated region
    $region9: #{bidaf_forward.13} parent=5 // pred_check
      _
    $region10: #{bidaf_forward.13} parent=5 // pred_check_branch
      %243 = sbr.rel (%p240) target = $region12
    $region11: #{bidaf_forward.13} parent=5 // pred_region
      %s244 = ssub.s32 %s16, 1
      // Predicated region
      $region13: #{bidaf_forward.13} parent=11 // pred_check
        %p245 = pneg %p141
      $region14: #{bidaf_forward.13} parent=11 // pred_check_branch
        %247 = sbr.rel (%p245) target = $region16
      $region15: #{bidaf_forward.13} parent=11 // pred_region
        _
      $region16: #{bidaf_forward.13} parent=11 // pred_fallthru
        _
      // Predicated region
      $region17: #{bidaf_forward.13} parent=11 // pred_check
        %p248 = pneg %p162
      $region18: #{bidaf_forward.13} parent=11 // pred_check_branch
        %250 = sbr.rel (%p248) target = $region20
      $region19: #{bidaf_forward.13} parent=11 // pred_region
        _
      $region20: #{bidaf_forward.13} parent=11 // pred_fallthru
        _
      // Predicated region
      $region21: #{bidaf_forward.13} parent=11 // pred_check
        %p251 = pneg %p183
      $region22: #{bidaf_forward.13} parent=11 // pred_check_branch
        %253 = sbr.rel (%p251) target = $region24
      $region23: #{bidaf_forward.13} parent=11 // pred_region
        _
      $region24: #{bidaf_forward.13} parent=11 // pred_fallthru
        _
      // Predicated region
      $region25: #{bidaf_forward.13} parent=11 // pred_check
        %p254 = pneg %p204
      $region26: #{bidaf_forward.13} parent=11 // pred_check_branch
        %256 = sbr.rel (%p254) target = $region28
      $region27: #{bidaf_forward.13} parent=11 // pred_region
        _
      $region28: #{bidaf_forward.13} parent=11 // pred_fallthru
        _
    $region12: #{bidaf_forward.13} parent=5 // pred_fallthru
      _
    %p257 = scmp.lt.s32.totalorder %s16, 2
    // Predicated region
    $region29: #{bidaf_forward.13} parent=5 // pred_check
      %p258 = pneg %p257
    $region30: #{bidaf_forward.13} parent=5 // pred_check_branch
      %260 = sbr.rel (%p258) target = $region32
    $region31: #{bidaf_forward.13} parent=5 // pred_region
      // Predicated region
      $region33: #{bidaf_forward.13} parent=31 // pred_check
        %p261 = pneg %p36
      $region34: #{bidaf_forward.13} parent=31 // pred_check_branch
        %263 = sbr.rel (%p261) target = $region36
      $region35: #{bidaf_forward.13} parent=31 // pred_region
        %p264 = scmp.lt.s32.totalorder %s16, 1
        %s265 = scalar_select %p264, %s16, 1
        %s266 = smul.addr %s265, 2
        %s267 = smul.addr %s266, 8
        %s268 = scalar_lea.vmem %s0, %s267
      $region36: #{bidaf_forward.13} parent=31 // pred_fallthru
        _
      // Predicated region
      $region37: #{bidaf_forward.13} parent=31 // pred_check
        %p269 = pneg %p62
      $region38: #{bidaf_forward.13} parent=31 // pred_check_branch
        %271 = sbr.rel (%p269) target = $region40
      $region39: #{bidaf_forward.13} parent=31 // pred_region
        %p272 = scmp.lt.s32.totalorder %s16, 1
        %s273 = scalar_select %p272, %s16, 1
        %s274 = smul.addr %s273, 8
        %s275 = smul.addr %s274, 8
        %s276 = scalar_lea.vmem %s1, %s275
      $region40: #{bidaf_forward.13} parent=31 // pred_fallthru
        _
      // Predicated region
      $region41: #{bidaf_forward.13} parent=31 // pred_check
        %p277 = pneg %p88
      $region42: #{bidaf_forward.13} parent=31 // pred_check_branch
        %279 = sbr.rel (%p277) target = $region44
      $region43: #{bidaf_forward.13} parent=31 // pred_region
        %p280 = scmp.lt.s32.totalorder %s16, 1
        %s281 = scalar_select %p280, %s16, 1
        %s282 = smul.addr %s281, 2
        %s283 = smul.addr %s282, 8
        %s284 = scalar_lea.vmem %s2, %s283
      $region44: #{bidaf_forward.13} parent=31 // pred_fallthru
        _
      // Predicated region
      $region45: #{bidaf_forward.13} parent=31 // pred_check
        %p285 = pneg %p114
      $region46: #{bidaf_forward.13} parent=31 // pred_check_branch
        %287 = sbr.rel (%p285) target = $region48
      $region47: #{bidaf_forward.13} parent=31 // pred_region
        %p288 = scmp.lt.s32.totalorder %s16, 1
        %s289 = scalar_select %p288, %s16, 1
        %s290 = scalar_lea.vmem %s3, %s289
      $region48: #{bidaf_forward.13} parent=31 // pred_fallthru
        _
    $region32: #{bidaf_forward.13} parent=5 // pred_fallthru
      _
    %p291 = scmp.le.s32.totalorder 1, %s16
    %p292 = scmp.lt.s32.totalorder %s16, 3
    %p293 = pnand %p291, %p292
    %p294 = pneg %p293
    // Predicated region
    $region49: #{bidaf_forward.13} parent=5 // pred_check
      _
    $region50: #{bidaf_forward.13} parent=5 // pred_check_branch
      %296 = sbr.rel (%p293) target = $region52
    $region51: #{bidaf_forward.13} parent=5 // pred_region
      %s297 = ssub.s32 %s16, 1
      %p298 = scmp.lt.s32.totalorder %s21, 1
      %s299 = scalar_select %p298, %s21, 1
      %s300 = smul.addr %s299, 2
      %s301 = smul.addr %s300, 8
      %s302 = scalar_lea.vmem %s0, %s301
      %p303 = pneg %p42
      %p304 = pneg %p39
      %p305 = scmp.lt.s32.totalorder %s21, 1
      %s306 = scalar_select %p305, %s21, 1
      %s307 = smul.addr %s306, 8
      %s308 = smul.addr %s307, 8
      %s309 = scalar_lea.vmem %s1, %s308
      %p310 = pneg %p68
      %p311 = pneg %p65
      %p312 = scmp.lt.s32.totalorder %s21, 1
      %s313 = scalar_select %p312, %s21, 1
      %s314 = smul.addr %s313, 2
      %s315 = smul.addr %s314, 8
      %s316 = scalar_lea.vmem %s2, %s315
      %p317 = pneg %p94
      %p318 = pneg %p91
      %p319 = scmp.lt.s32.totalorder %s21, 1
      %s320 = scalar_select %p319, %s21, 1
      %s321 = scalar_lea.vmem %s3, %s320
      %p322 = pneg %p120
      %p323 = pneg %p117
      %p324 = pneg %p141
      %p325 = pneg %p138
      %p326 = pneg %p162
      %p327 = pneg %p159
      %p328 = pneg %p183
      %p329 = pneg %p180
      %p330 = pneg %p204
      %p331 = pneg %p201
      %p332 = pneg %p230
      %p333 = pneg %p227
      %p334 = scmp.lt.s32.totalorder %s21, 1
      %s335 = scalar_select %p334, %s21, 1
      %s336 = smul.addr %s335, 4
      %s337 = smul.addr %s336, 8
      %s338 = scalar_lea.vmem %s8, %s337
      %p339 = scmp.lt.s32.totalorder %s21, 1
      %s340 = scalar_select %p339, %s21, 1
      %s341 = smul.addr %s340, 2
      %s342 = smul.addr %s341, 8
      %s343 = scalar_lea.vmem %s0, %s342
      %p344 = scmp.lt.s32.totalorder %s21, 1
      %s345 = scalar_select %p344, %s21, 1
      %s346 = smul.addr %s345, 8
      %s347 = smul.addr %s346, 8
      %s348 = scalar_lea.vmem %s1, %s347
      %p349 = scmp.lt.s32.totalorder %s21, 1
      %s350 = scalar_select %p349, %s21, 1
      %s351 = smul.addr %s350, 2
      %s352 = smul.addr %s351, 8
      %s353 = scalar_lea.vmem %s2, %s352
      %p354 = scmp.lt.s32.totalorder %s21, 1
      %s355 = scalar_select %p354, %s21, 1
      %s356 = scalar_lea.vmem %s3, %s355
      %p357 = scmp.lt.s32.totalorder %s21, 1
      %s358 = scalar_select %p357, %s21, 1
      %s359 = smul.addr %s358, 4
      %s360 = smul.addr %s359, 8
      %s361 = scalar_lea.vmem %s8, %s360
      %v362 = vld [vmem:[%s343] sm:$0xff]
      %v363 = vld [vmem:[%s343 + $0x8] sm:$0xff]
      %v364 = vld [vmem:[%s348] sm:$0xff]
      %v365 = vld [vmem:[%s348 + $0x8] sm:$0xff]
      %v366 = vld [vmem:[%s348 + $0x10] sm:$0xff]
      %v367 = vld [vmem:[%s348 + $0x18] sm:$0xff]
      %v368 = vld [vmem:[%s348 + $0x20] sm:$0xff]
      %v369 = vld [vmem:[%s348 + $0x28] sm:$0xff]
      %v370 = vld [vmem:[%s348 + $0x30] sm:$0xff]
      %v371 = vld [vmem:[%s348 + $0x38] sm:$0xff]
      %v372 = vld [vmem:[%s353] sm:$0xff]
      %v373 = vld [vmem:[%s353 + $0x8] sm:$0xff]
      %v374 = vld [vmem:[%s356] sm:$0x1]
      %v375 = vld [vmem:[%s4] sm:$0xff]
      %v376 = vld [vmem:[%s4 + $0x8] sm:$0xff]
      %v377 = vld [vmem:[%s4 + $0x10] sm:$0xff]
      %v378 = vld [vmem:[%s4 + $0x18] sm:$0xff]
      %v379 = vld [vmem:[%s4 + $0x20] sm:$0xff]
      %v380 = vld [vmem:[%s4 + $0x28] sm:$0xff]
      %v381 = vld [vmem:[%s4 + $0x30] sm:$0xff]
      %v382 = vld [vmem:[%s4 + $0x38] sm:$0xff]
      %vm383 = vcmask 523264
      %v385 = vsel %vm383, %v362, 0
      %v388 = vsel %vm383, %v363, 0
      %390 = vmatpush.msra.mxu0 0.0
      %391 = vmatpush.msra.mxu0 0.0
      %392 = vmatpush.msra.mxu0 0.0
      %393 = vmatpush.msra.mxu0 0.0
      %394 = vmatpush.msra.mxu0 0.0
      %395 = vmatpush.msra.mxu0 0.0
      %396 = vmatpush.msra.mxu0 0.0
      %397 = vmatpush.msra.mxu0 0.0
      %398 = vmatpush.msra.mxu0 %v382
      %399 = vmatpush.msra.mxu0 %v381
      %400 = vmatpush.msra.mxu0 %v380
      %401 = vmatpush.msra.mxu0 %v379
      %402 = vmatpush.msra.mxu0 %v378
      %403 = vmatpush.msra.mxu0 %v377
      %404 = vmatpush.msra.mxu0 %v376
      %405 = vmatpush.msra.mxu0 %v375
      %406 = vmatmul.f32.gmra.mxu0 %v385
      %v407 = vpop.f32.mrf.mxu0
      %v408 = vadd.f32 0.0, %v407
      %409 = vmatmul.f32.gmra.mxu0 %v388
      %v410 = vpop.f32.mrf.mxu0
      %v411 = vadd.f32 0.0, %v410
      %412 = vdwg.mxu0
      %v413 = vld [vmem:[%s5] sm:$0x1]
      %v415 = vsel %vm383, %v413, 0
      %417 = vmatpush.msra.mxu0 0.0
      %418 = vmatpush.msra.mxu0 0.0
      %419 = vmatpush.msra.mxu0 0.0
      %420 = vmatpush.msra.mxu0 0.0
      %421 = vmatpush.msra.mxu0 0.0
      %422 = vmatpush.msra.mxu0 0.0
      %423 = vmatpush.msra.mxu0 0.0
      %424 = vmatpush.msra.mxu0 0.0
      %425 = vmatpush.msra.mxu0 %v371
      %426 = vmatpush.msra.mxu0 %v370
      %427 = vmatpush.msra.mxu0 %v369
      %428 = vmatpush.msra.mxu0 %v368
      %429 = vmatpush.msra.mxu0 %v367
      %430 = vmatpush.msra.mxu0 %v366
      %431 = vmatpush.msra.mxu0 %v365
      %432 = vmatpush.msra.mxu0 %v364
      %433 = vmatmul.f32.gmra.mxu0 %v415
      %v434 = vpop.f32.mrf.mxu0
      %v435 = vadd.f32 0.0, %v434
      %436 = vdwg.mxu0
      %v437 = vld [vmem:[%s6] sm:$0x1]
      %v439 = vperm.slane %v437, 0
      %v441 = vmul.f32 %v362, %v439
      %v442 = vmul.f32 %v363, %v439
      %v444 = vsel %vm383, %v441, 0
      %v447 = vsel %vm383, %v442, 0
      %449 = vmatpush.msra.mxu0 0.0
      %450 = vmatpush.msra.mxu0 0.0
      %451 = vmatpush.msra.mxu0 0.0
      %452 = vmatpush.msra.mxu0 0.0
      %453 = vmatpush.msra.mxu0 0.0
      %454 = vmatpush.msra.mxu0 0.0
      %455 = vmatpush.msra.mxu0 0.0
      %456 = vmatpush.msra.mxu0 0.0
      %457 = vmatpush.msra.mxu0 %v371
      %458 = vmatpush.msra.mxu0 %v370
      %459 = vmatpush.msra.mxu0 %v369
      %460 = vmatpush.msra.mxu0 %v368
      %461 = vmatpush.msra.mxu0 %v367
      %462 = vmatpush.msra.mxu0 %v366
      %463 = vmatpush.msra.mxu0 %v365
      %464 = vmatpush.msra.mxu0 %v364
      %465 = vmatmul.f32.gmra.mxu0 %v444
      %v466 = vpop.f32.mrf.mxu0
      %v467 = vadd.f32 0.0, %v466
      %468 = vmatmul.f32.gmra.mxu0 %v447
      %v469 = vpop.f32.mrf.mxu0
      %v470 = vadd.f32 0.0, %v469
      %471 = vdwg.mxu0
      %473 = vset.pattern.permute.xlu0 0
      %474 = vperm.xlu0 %473, %v408
      %v475 = vpop.permute.xlu0 %474
      %478 = vset.pattern.permute.xlu0 0
      %479 = vperm.xlu0 %478, %v411
      %v480 = vpop.permute.xlu0 %479
      %v482 = vperm.slane %v435, 0
      %v483 = vadd.f32 %v475, %v482
      %v484 = vadd.f32 %v480, %v482
      %v485 = vadd.f32 %v483, %v467
      %v486 = vadd.f32 %v484, %v470
      %v487 = vld [vmem:[#allocation2] sm:$0x1]
      %v489 = vperm.slane %v487, 0
      %490 = vset.pattern.permute.xlu0 0
      %491 = vperm.xlu0 %490, %v489
      %v492 = vpop.permute.xlu0 %491
      %v494 = vadd.f32 %v485, %v492
      %v495 = vadd.f32 %v486, %v492
      %v497 = vperm.slane %v374, 0
      %v499 = vmul.f32 %v497, %v494
      %v500 = vmul.f32 %v497, %v495
      %v501 = vsub.f32 1.0, %v374
      %v502 = vmul.f32 %v501, -1e+30
      %v504 = vperm.slane %v502, 0
      %v506 = vadd.f32 %v499, %v504
      %v507 = vadd.f32 %v500, %v504
      %vm508 = vcmask 64512
      %v509 = vsel %vm508, %v506, -inf
      %510 = vmax.xlane.f32.xlu0 %v509
      %v511 = vpop.xlane.xlu0 %510
      %v512 = vsel %vm508, %v507, -inf
      %513 = vmax.xlane.f32.xlu0 %v512
      %v514 = vpop.xlane.xlu0 %513
      %v515 = vsub.f32 %v506, %v511
      %v516 = vsub.f32 %v507, %v514
      %v517 = vmul.f32 %v515, 1.442695
      %v518 = vpow.pop %v517
      %v519 = vmul.f32 %v516, 1.442695
      %v520 = vpow.pop %v519
      %v521 = vsel %vm508, %v518, 0.0
      %522 = vadd.xlane.f32.xlu0 %v521
      %v523 = vpop.xlane.xlu0 %522
      %v524 = vsel %vm508, %v520, 0.0
      %525 = vadd.xlane.f32.xlu0 %v524
      %v526 = vpop.xlane.xlu0 %525
      %v527 = vrcp.pop %v523
      %v528 = vmul.f32 %v523, %v527
      %v529 = vsub.f32 1.0, %v528
      %v530 = vmul.f32 %v527, %v529
      %v531 = vadd.f32 %v527, %v530
      %vm532 = vweird.f32 %v523
      %vm533 = vweird.f32 %v527
      %vm534 = vmor %vm532, %vm533
      %v535 = vsel %vm534, %v527, %v531
      %v536 = vand.u32 2147483647, %v523
      %vm537 = vcmp.eq.f32.partialorder %v536, 8.507059e+37
      %v538 = vand.u32 %v523, 2147483648
      %v539 = vor.u32 1.1754944e-38, %v538
      %v540 = vsel %vm537, %v539, %v535
      %v541 = vmul.f32 %v518, %v540
      %v542 = vrcp.pop %v526
      %v543 = vmul.f32 %v526, %v542
      %v544 = vsub.f32 1.0, %v543
      %v545 = vmul.f32 %v542, %v544
      %v546 = vadd.f32 %v542, %v545
      %vm547 = vweird.f32 %v526
      %vm548 = vweird.f32 %v542
      %vm549 = vmor %vm547, %vm548
      %v550 = vsel %vm549, %v542, %v546
      %v551 = vand.u32 2147483647, %v526
      %vm552 = vcmp.eq.f32.partialorder %v551, 8.507059e+37
      %v553 = vand.u32 %v526, 2147483648
      %v554 = vor.u32 1.1754944e-38, %v553
      %v555 = vsel %vm552, %v554, %v550
      %v556 = vmul.f32 %v520, %v555
      %558 = vset.pattern.permute.xlu0 0
      %559 = vperm.xlu0 %558, %v372
      %v560 = vpop.permute.xlu0 %559
      %563 = vset.pattern.permute.xlu0 0
      %564 = vperm.xlu0 %563, %v373
      %v565 = vpop.permute.xlu0 %564
      %v567 = vmul.f32 %v560, %v494
      %v568 = vmul.f32 %v565, %v495
      %v569 = vsub.f32 1.0, %v372
      %v570 = vsub.f32 1.0, %v373
      %v571 = vmul.f32 %v569, -1e+30
      %v572 = vmul.f32 %v570, -1e+30
      %574 = vset.pattern.permute.xlu0 0
      %575 = vperm.xlu0 %574, %v571
      %v576 = vpop.permute.xlu0 %575
      %579 = vset.pattern.permute.xlu0 0
      %580 = vperm.xlu0 %579, %v572
      %v581 = vpop.permute.xlu0 %580
      %v583 = vadd.f32 %v567, %v576
      %v584 = vadd.f32 %v568, %v581
      %v585 = vsel %vm508, %v583, -inf
      %v586 = vsel %vm508, %v584, -inf
      %v587 = vmax.f32 %v585, %v586
      %v588 = vrot.slane %v587, 4
      %v589 = vmax.f32 %v587, %v588
      %v590 = vrot.slane %v589, 2
      %v591 = vmax.f32 %v589, %v590
      %v592 = vrot.slane %v591, 1
      %v593 = vmax.f32 %v591, %v592
      %v594 = vsub.f32 %v583, %v593
      %v595 = vsub.f32 %v584, %v593
      %v596 = vmul.f32 %v594, 1.442695
      %v597 = vpow.pop %v596
      %v598 = vmul.f32 %v595, 1.442695
      %v599 = vpow.pop %v598
      %v600 = vsel %vm508, %v597, 0.0
      %v601 = vsel %vm508, %v599, 0.0
      %v602 = vadd.f32 %v600, %v601
      %v603 = vrot.slane %v602, 4
      %v604 = vadd.f32 %v602, %v603
      %v605 = vrot.slane %v604, 2
      %v606 = vadd.f32 %v604, %v605
      %v607 = vrot.slane %v606, 1
      %v608 = vadd.f32 %v606, %v607
      %v609 = vrcp.pop %v608
      %v610 = vmul.f32 %v608, %v609
      %v611 = vsub.f32 1.0, %v610
      %v612 = vmul.f32 %v609, %v611
      %v613 = vadd.f32 %v609, %v612
      %vm614 = vweird.f32 %v608
      %vm615 = vweird.f32 %v609
      %vm616 = vmor %vm614, %vm615
      %v617 = vsel %vm616, %v609, %v613
      %v618 = vand.u32 2147483647, %v608
      %vm619 = vcmp.eq.f32.partialorder %v618, 8.507059e+37
      %v620 = vand.u32 %v608, 2147483648
      %v621 = vor.u32 1.1754944e-38, %v620
      %v622 = vsel %vm619, %v621, %v617
      %v623 = vmul.f32 %v597, %v622
      %v624 = vmul.f32 %v599, %v622
      %v626 = vsel %vm508, %v541, 0
      %v629 = vsel %vm508, %v556, 0
      %v632 = vsel %vm508, %v364, 0
      %v635 = vsel %vm508, %v365, 0
      %v638 = vsel %vm508, %v366, 0
      %v641 = vsel %vm508, %v367, 0
      %v644 = vsel %vm508, %v368, 0
      %v647 = vsel %vm508, %v369, 0
      %v650 = vsel %vm508, %v370, 0
      %v653 = vsel %vm508, %v371, 0
      %655 = vmatpush.xpose.msra.mxu0 0.0
      %656 = vmatpush.xpose.msra.mxu0 0.0
      %657 = vmatpush.xpose.msra.mxu0 0.0
      %658 = vmatpush.xpose.msra.mxu0 0.0
      %659 = vmatpush.xpose.msra.mxu0 0.0
      %660 = vmatpush.xpose.msra.mxu0 0.0
      %661 = vmatpush.xpose.msra.mxu0 0.0
      %662 = vmatpush.xpose.msra.mxu0 0.0
      %663 = vmatpush.xpose.msra.mxu0 %v653
      %664 = vmatpush.xpose.msra.mxu0 %v650
      %665 = vmatpush.xpose.msra.mxu0 %v647
      %666 = vmatpush.xpose.msra.mxu0 %v644
      %667 = vmatpush.xpose.msra.mxu0 %v641
      %668 = vmatpush.xpose.msra.mxu0 %v638
      %669 = vmatpush.xpose.msra.mxu0 %v635
      %670 = vmatpush.xpose.msra.mxu0 %v632
      %671 = vmatmul.f32.gmra.mxu0 %v626
      %v672 = vpop.f32.mrf.mxu0
      %v673 = vadd.f32 0.0, %v672
      %674 = vmatmul.f32.gmra.mxu0 %v629
      %v675 = vpop.f32.mrf.mxu0
      %v676 = vadd.f32 0.0, %v675
      %677 = vdwg.mxu0
      %678 = vxpose.xlu0.b32.start [1/16] %v623, 128
      %679 = vxpose.xlu0.b32.cont [2/16] %v624, 128
      %680 = vxpose.xlu0.b32.cont [3/16] 0.0, 128
      %681 = vxpose.xlu0.b32.cont [4/16] 0.0, 128
      %682 = vxpose.xlu0.b32.cont [5/16] 0.0, 128
      %683 = vxpose.xlu0.b32.cont [6/16] 0.0, 128
      %684 = vxpose.xlu0.b32.cont [7/16] 0.0, 128
      %685 = vxpose.xlu0.b32.cont [8/16] 0.0, 128
      %686 = vxpose.xlu0.b32.cont [9/16] 0.0, 128
      %687 = vxpose.xlu0.b32.cont [10/16] 0.0, 128
      %688 = vxpose.xlu0.b32.cont [11/16] 0.0, 128
      %689 = vxpose.xlu0.b32.cont [12/16] 0.0, 128
      %690 = vxpose.xlu0.b32.cont [13/16] 0.0, 128
      %691 = vxpose.xlu0.b32.cont [14/16] 0.0, 128
      %692 = vxpose.xlu0.b32.cont [15/16] 0.0, 128
      %693 = vxpose.xlu0.b32.end [16/16] 0.0, 128
      %v694 = vpop.trf.xlu0
      %v695 = vpop.trf.xlu0
      %v696 = vpop.trf.xlu0
      %v697 = vpop.trf.xlu0
      %v698 = vpop.trf.xlu0
      %v699 = vpop.trf.xlu0
      %v700 = vpop.trf.xlu0
      %v701 = vpop.trf.xlu0
      %v702 = vpop.trf.xlu0
      %v703 = vpop.trf.xlu0
      %v704 = vpop.trf.xlu0
      %v705 = vpop.trf.xlu0
      %v706 = vpop.trf.xlu0
      %v707 = vpop.trf.xlu0
      %v708 = vpop.trf.xlu0
      %v709 = vpop.trf.xlu0
      %vm710 = vcmask 130048
      %v712 = vsel %vm710, %v694, 0
      %714 = vmatpush.msra.mxu0 0.0
      %715 = vmatpush.msra.mxu0 0.0
      %716 = vmatpush.msra.mxu0 0.0
      %717 = vmatpush.msra.mxu0 0.0
      %718 = vmatpush.msra.mxu0 0.0
      %719 = vmatpush.msra.mxu0 0.0
      %720 = vmatpush.msra.mxu0 0.0
      %721 = vmatpush.msra.mxu0 0.0
      %722 = vmatpush.msra.mxu0 0.0
      %723 = vmatpush.msra.mxu0 0.0
      %724 = vmatpush.msra.mxu0 0.0
      %725 = vmatpush.msra.mxu0 0.0
      %726 = vmatpush.msra.mxu0 0.0
      %727 = vmatpush.msra.mxu0 0.0
      %728 = vmatpush.msra.mxu0 %v363
      %729 = vmatpush.msra.mxu0 %v362
      %730 = vmatmul.f32.gmra.mxu0 %v712
      %v731 = vpop.f32.mrf.mxu0
      %v732 = vadd.f32 0.0, %v731
      %733 = vdwg.mxu0
      %734 = vmatpush.msra.mxu0 0.0
      %735 = vmatpush.msra.mxu0 0.0
      %736 = vmatpush.msra.mxu0 0.0
      %737 = vmatpush.msra.mxu0 0.0
      %738 = vmatpush.msra.mxu0 0.0
      %739 = vmatpush.msra.mxu0 0.0
      %740 = vmatpush.msra.mxu0 0.0
      %741 = vmatpush.msra.mxu0 0.0
      %742 = vmatpush.msra.mxu0 0.0
      %743 = vmatpush.msra.mxu0 0.0
      %744 = vmatpush.msra.mxu0 0.0
      %745 = vmatpush.msra.mxu0 0.0
      %746 = vmatpush.msra.mxu0 0.0
      %747 = vmatpush.msra.mxu0 0.0
      %748 = vmatpush.msra.mxu0 0.0
      %749 = vmatpush.msra.mxu0 %v732
      %750 = vmatmul.f32.gmra.mxu0 %v626
      %v751 = vpop.f32.mrf.mxu0
      %v752 = vadd.f32 0.0, %v751
      %753 = vmatmul.f32.gmra.mxu0 %v629
      %v754 = vpop.f32.mrf.mxu0
      %v755 = vadd.f32 0.0, %v754
      %756 = vdwg.mxu0
      %757 = vst.msk [vmem:[%s361] sm:$0xff] %vm383, %v362
      %758 = vst.msk [vmem:[%s361 + $0x10] sm:$0xff] %vm383, %v363
      %761 = vrot.lane.b32.xlu0 %v673, 64
      %v762 = vpop.permute.xlu0 %761
      %763 = vrot.lane.b32.xlu0 %v676, 64
      %v764 = vpop.permute.xlu0 %763
      %vm767 = vcmask 1048064
      %768 = vst.msk [vmem:[%s361] sm:$0xff] %vm767, %v762
      %769 = vst.msk [vmem:[%s361 + $0x10] sm:$0xff] %vm767, %v764
      %v770 = vmul.f32 %v362, %v673
      %v771 = vmul.f32 %v363, %v676
      %772 = vst.msk [vmem:[%s361 + $0x8] sm:$0xff] %vm383, %v770
      %773 = vst.msk [vmem:[%s361 + $0x18] sm:$0xff] %vm383, %v771
      %v774 = vmul.f32 %v362, %v752
      %v775 = vmul.f32 %v363, %v755
      %778 = vrot.lane.b32.xlu0 %v774, 64
      %v779 = vpop.permute.xlu0 %778
      %780 = vrot.lane.b32.xlu0 %v775, 64
      %v781 = vpop.permute.xlu0 %780
      %784 = vst.msk [vmem:[%s361 + $0x8] sm:$0xff] %vm767, %v779
      %785 = vst.msk [vmem:[%s361 + $0x18] sm:$0xff] %vm767, %v781
      %p786 = scmp.lt.s32.totalorder %s21, 1
      %s787 = scalar_select %p786, %s21, 1
      %s788 = smul.addr %s787, 4
      %s789 = smul.addr %s788, 8
      %s790 = scalar_lea.vmem %s8, %s789
      // Predicated region
      $region53: #{bidaf_forward.13} parent=51 // pred_check
        %p791 = pneg %p227
      $region54: #{bidaf_forward.13} parent=51 // pred_check_branch
        %793 = sbr.rel (%p791) target = $region56
      $region55: #{bidaf_forward.13} parent=51 // pred_region
        _
      $region56: #{bidaf_forward.13} parent=51 // pred_fallthru
        _
    $region52: #{bidaf_forward.13} parent=5 // pred_fallthru
      _
    %p794 = scmp.le.s32.totalorder 2, %s16
    // Predicated region
    $region57: #{bidaf_forward.13} parent=5 // pred_check
      %p795 = pneg %p794
    $region58: #{bidaf_forward.13} parent=5 // pred_check_branch
      %797 = sbr.rel (%p795) target = $region60
    $region59: #{bidaf_forward.13} parent=5 // pred_region
      %s798 = ssub.s32 %s16, 2
      // Predicated region
      $region61: #{bidaf_forward.13} parent=59 // pred_check
        %p799 = pneg %p233
      $region62: #{bidaf_forward.13} parent=59 // pred_check_branch
        %801 = sbr.rel (%p799) target = $region64
      $region63: #{bidaf_forward.13} parent=59 // pred_region
        %p802 = scmp.lt.s32.totalorder %s22, 1
        %s803 = scalar_select %p802, %s22, 1
        %s804 = smul.addr %s803, 4
        %s805 = smul.addr %s804, 8
        %s806 = scalar_lea.vmem %s8, %s805
      $region64: #{bidaf_forward.13} parent=59 // pred_fallthru
        _
    $region60: #{bidaf_forward.13} parent=5 // pred_fallthru
      _
  $region6: #{bidaf_forward.13} parent=0 // loop_footer
    %s20 = sadd.s32 1, %s16
  $region7: #{bidaf_forward.13} parent=0 // loop_footer_branch
    %15 = sbr.rel target = $region3
  $region8: #{bidaf_forward.13} parent=0 // loop_exit
    _

// kernel: bidaf_forward.15
$region0: #{bidaf_forward.15}
  #allocation0 [shape = 'u32[]', space=smem, size = 0x4, offset = 0x4, fixed_abs, tag = 'smem constant byte address 0x4 - core index']
  #allocation1 [shape = 'u32[72,128]{1,0:T(1,128)}', space=vmem, size = 0x9000, scoped, tag = 'internal scratch']
  #allocation2 [shape = 'f32[32,128]{1,0:T(8,128)}', space=vmem, size = 0x4000, scoped, tag = 'scratch operand']
  #allocation3 [shape = 'f32[32,128]{1,0:T(8,128)}', space=vmem, size = 0x4000, scoped, tag = 'scratch operand']
  %s0 = inlined_call_operand.vmem [shape: f32[32,64], index: 0, kind: input, shape index: {}]
  %s1 = inlined_call_operand.vmem [shape: f32[64,128], index: 1, kind: input, shape index: {}]
  %s2 = inlined_call_operand.vmem [shape: f32[1,128], index: 2, kind: input, shape index: {}]
  %s3 = inlined_call_operand.vmem [shape: f32[32,128], index: 3, kind: input, shape index: {}]
  %s4 = inlined_call_operand.vmem [shape: f32[64,128], index: 4, kind: input, shape index: {}]
  %s5 = inlined_call_operand.vmem [shape: f32[1,128], index: 5, kind: input, shape index: {}]
  %s6 = inlined_call_operand.vmem [shape: f32[32,128], index: 6, kind: input, shape index: {}]
  %s7 = inlined_call_operand.vmem [shape: f32[32,1], index: 7, kind: input, shape index: {}]
  %s8 = inlined_call_operand.vmem [shape: f32[32,64], index: 8, kind: output, shape index: {}]
  %s9 = sld [smem:[#allocation0]]
  $region49: #{bidaf_forward.15} parent=0
    _
  %s11 = ssub.s32 1, %s9
  %s12 = scalar_select 0, %s11, %s9
  // Predicated region
  $region2: #{bidaf_forward.15} parent=0 // pred_check
    _
  $region3: #{bidaf_forward.15} parent=0 // pred_check_branch
    %14 = sbr.rel (0) target = $region5
  $region4: #{bidaf_forward.15} parent=0 // pred_region
    _
  $region5: #{bidaf_forward.15} parent=0 // pred_fallthru
    _
  // Predicated region
  $region6: #{bidaf_forward.15} parent=0 // pred_check
    _
  $region7: #{bidaf_forward.15} parent=0 // pred_check_branch
    %16 = sbr.rel (0) target = $region9
  $region8: #{bidaf_forward.15} parent=0 // pred_region
    _
  $region9: #{bidaf_forward.15} parent=0 // pred_fallthru
    _
  // Predicated region
  $region10: #{bidaf_forward.15} parent=0 // pred_check
    _
  $region11: #{bidaf_forward.15} parent=0 // pred_check_branch
    %18 = sbr.rel (0) target = $region13
  $region12: #{bidaf_forward.15} parent=0 // pred_region
    _
  $region13: #{bidaf_forward.15} parent=0 // pred_fallthru
    _
  // Predicated region
  $region14: #{bidaf_forward.15} parent=0 // pred_check
    _
  $region15: #{bidaf_forward.15} parent=0 // pred_check_branch
    %20 = sbr.rel (0) target = $region17
  $region16: #{bidaf_forward.15} parent=0 // pred_region
    _
  $region17: #{bidaf_forward.15} parent=0 // pred_fallthru
    _
  // Predicated region
  $region18: #{bidaf_forward.15} parent=0 // pred_check
    _
  $region19: #{bidaf_forward.15} parent=0 // pred_check_branch
    %22 = sbr.rel (0) target = $region21
  $region20: #{bidaf_forward.15} parent=0 // pred_region
    _
  $region21: #{bidaf_forward.15} parent=0 // pred_fallthru
    _
  // Predicated region
  $region22: #{bidaf_forward.15} parent=0 // pred_check
    _
  $region23: #{bidaf_forward.15} parent=0 // pred_check_branch
    %24 = sbr.rel (0) target = $region25
  $region24: #{bidaf_forward.15} parent=0 // pred_region
    _
  $region25: #{bidaf_forward.15} parent=0 // pred_fallthru
    _
  // Predicated region
  $region26: #{bidaf_forward.15} parent=0 // pred_check
    _
  $region27: #{bidaf_forward.15} parent=0 // pred_check_branch
    %26 = sbr.rel (0) target = $region29
  $region28: #{bidaf_forward.15} parent=0 // pred_region
    _
  $region29: #{bidaf_forward.15} parent=0 // pred_fallthru
    _
  // Predicated region
  $region30: #{bidaf_forward.15} parent=0 // pred_check
    _
  $region31: #{bidaf_forward.15} parent=0 // pred_check_branch
    %28 = sbr.rel (0) target = $region33
  $region32: #{bidaf_forward.15} parent=0 // pred_region
    _
  $region33: #{bidaf_forward.15} parent=0 // pred_fallthru
    _
  %v29 = vld [vmem:[%s0] sm:$0xff]
  %v30 = vld [vmem:[%s0 + $0x8] sm:$0xff]
  %v31 = vld [vmem:[%s0 + $0x10] sm:$0xff]
  %v32 = vld [vmem:[%s0 + $0x18] sm:$0xff]
  %v33 = vld [vmem:[%s1] sm:$0xff]
  %v34 = vld [vmem:[%s1 + $0x8] sm:$0xff]
  %v35 = vld [vmem:[%s1 + $0x10] sm:$0xff]
  %v36 = vld [vmem:[%s1 + $0x18] sm:$0xff]
  %v37 = vld [vmem:[%s1 + $0x20] sm:$0xff]
  %v38 = vld [vmem:[%s1 + $0x28] sm:$0xff]
  %v39 = vld [vmem:[%s1 + $0x30] sm:$0xff]
  %v40 = vld [vmem:[%s1 + $0x38] sm:$0xff]
  %v41 = vld [vmem:[%s2] sm:$0x1]
  %v43 = vperm.slane %v41, 0
  %vm45 = vcmask 523264
  %v47 = vsel %vm45, %v29, 0
  %v50 = vsel %vm45, %v30, 0
  %v53 = vsel %vm45, %v31, 0
  %v56 = vsel %vm45, %v32, 0
  %58 = vmatpush.msra.mxu0 0.0
  %59 = vmatpush.msra.mxu0 0.0
  %60 = vmatpush.msra.mxu0 0.0
  %61 = vmatpush.msra.mxu0 0.0
  %62 = vmatpush.msra.mxu0 0.0
  %63 = vmatpush.msra.mxu0 0.0
  %64 = vmatpush.msra.mxu0 0.0
  %65 = vmatpush.msra.mxu0 0.0
  %66 = vmatpush.msra.mxu0 %v40
  %67 = vmatpush.msra.mxu0 %v39
  %68 = vmatpush.msra.mxu0 %v38
  %69 = vmatpush.msra.mxu0 %v37
  %70 = vmatpush.msra.mxu0 %v36
  %71 = vmatpush.msra.mxu0 %v35
  %72 = vmatpush.msra.mxu0 %v34
  %73 = vmatpush.msra.mxu0 %v33
  %74 = vmatmul.f32.gmra.mxu0 %v47
  %v75 = vpop.f32.mrf.mxu0
  %v76 = vadd.f32 %v43, %v75
  %77 = vmatmul.f32.gmra.mxu0 %v50
  %v78 = vpop.f32.mrf.mxu0
  %v79 = vadd.f32 %v43, %v78
  %80 = vmatmul.f32.gmra.mxu0 %v53
  %v81 = vpop.f32.mrf.mxu0
  %v82 = vadd.f32 %v43, %v81
  %83 = vmatmul.f32.gmra.mxu0 %v56
  %v84 = vpop.f32.mrf.mxu0
  %v85 = vadd.f32 %v43, %v84
  %86 = vdwg.mxu0
  %87 = vst [vmem:[#allocation2] sm:$0xff] %v76
  %88 = vst [vmem:[#allocation2 + $0x8] sm:$0xff] %v79
  %89 = vst [vmem:[#allocation2 + $0x10] sm:$0xff] %v82
  %90 = vst [vmem:[#allocation2 + $0x18] sm:$0xff] %v85
  %v91 = vld [vmem:[%s4] sm:$0xff]
  %v92 = vld [vmem:[%s4 + $0x8] sm:$0xff]
  %v93 = vld [vmem:[%s4 + $0x10] sm:$0xff]
  %v94 = vld [vmem:[%s4 + $0x18] sm:$0xff]
  %v95 = vld [vmem:[%s4 + $0x20] sm:$0xff]
  %v96 = vld [vmem:[%s4 + $0x28] sm:$0xff]
  %v97 = vld [vmem:[%s4 + $0x30] sm:$0xff]
  %v98 = vld [vmem:[%s4 + $0x38] sm:$0xff]
  %v99 = vld [vmem:[%s5] sm:$0x1]
  %v101 = vperm.slane %v99, 0
  %103 = vmatpush.msra.mxu0 0.0
  %104 = vmatpush.msra.mxu0 0.0
  %105 = vmatpush.msra.mxu0 0.0
  %106 = vmatpush.msra.mxu0 0.0
  %107 = vmatpush.msra.mxu0 0.0
  %108 = vmatpush.msra.mxu0 0.0
  %109 = vmatpush.msra.mxu0 0.0
  %110 = vmatpush.msra.mxu0 0.0
  %111 = vmatpush.msra.mxu0 %v98
  %112 = vmatpush.msra.mxu0 %v97
  %113 = vmatpush.msra.mxu0 %v96
  %114 = vmatpush.msra.mxu0 %v95
  %115 = vmatpush.msra.mxu0 %v94
  %116 = vmatpush.msra.mxu0 %v93
  %117 = vmatpush.msra.mxu0 %v92
  %118 = vmatpush.msra.mxu0 %v91
  %119 = vmatmul.f32.gmra.mxu0 %v47
  %v120 = vpop.f32.mrf.mxu0
  %v121 = vadd.f32 %v101, %v120
  %122 = vmatmul.f32.gmra.mxu0 %v50
  %v123 = vpop.f32.mrf.mxu0
  %v124 = vadd.f32 %v101, %v123
  %125 = vmatmul.f32.gmra.mxu0 %v53
  %v126 = vpop.f32.mrf.mxu0
  %v127 = vadd.f32 %v101, %v126
  %128 = vmatmul.f32.gmra.mxu0 %v56
  %v129 = vpop.f32.mrf.mxu0
  %v130 = vadd.f32 %v101, %v129
  %131 = vdwg.mxu0
  %132 = vst [vmem:[#allocation3] sm:$0xff] %v121
  %133 = vst [vmem:[#allocation3 + $0x8] sm:$0xff] %v124
  %134 = vst [vmem:[#allocation3 + $0x10] sm:$0xff] %v127
  %135 = vst [vmem:[#allocation3 + $0x18] sm:$0xff] %v130
  %v136 = vld [vmem:[%s3] sm:$0xff]
  %v137 = vld [vmem:[%s3 + $0x8] sm:$0xff]
  %v138 = vld [vmem:[%s3 + $0x10] sm:$0xff]
  %v139 = vld [vmem:[%s3 + $0x18] sm:$0xff]
  %v140 = vld [vmem:[%s6] sm:$0xff]
  %v141 = vld [vmem:[%s6 + $0x8] sm:$0xff]
  %v142 = vld [vmem:[%s6 + $0x10] sm:$0xff]
  %v143 = vld [vmem:[%s6 + $0x18] sm:$0xff]
  loop: start=0, step=1, limit=16
  $region34: #{bidaf_forward.15} parent=0 // loop_pre_header
    _
  $region35: #{bidaf_forward.15} parent=0 // loop_header
    %s145 = sphi 0, %s149
    %p146 = scmp.ge.s32.totalorder %s145, 16
    %v150 = vphi 0.0, %v325
    %v151 = vphi 0.0, %v328
    %v152 = vphi 0.0, %v336
    %v153 = vphi 0.0, %v339
  $region36: #{bidaf_forward.15} parent=0 // loop_header_branch
    %148 = sbr.rel (%p146) target = $region40
  $region37: #{bidaf_forward.15} parent=0 // loop_body
    %s154 = smul.u32 %s145, 2
    %s155 = ssub.s32 15, %s145
    %s156 = smul.u32 %s155, 2
    %s157 = scalar_lea.vmem [#allocation2], %s154
    %v158 = vld [vmem:[%s157] sm:$0x3]
    %160 = vrot.lane.b32.xlu0 %v150, 32
    %v161 = vpop.permute.xlu0 %160
    %vm162 = vcmask 261120
    %v163 = vsel %vm162, %v161, 0
    %165 = vmatpush.msra.mxu0 0.0
    %166 = vmatpush.msra.mxu0 0.0
    %167 = vmatpush.msra.mxu0 0.0
    %168 = vmatpush.msra.mxu0 0.0
    %169 = vmatpush.msra.mxu0 0.0
    %170 = vmatpush.msra.mxu0 0.0
    %171 = vmatpush.msra.mxu0 0.0
    %172 = vmatpush.msra.mxu0 0.0
    %173 = vmatpush.msra.mxu0 0.0
    %174 = vmatpush.msra.mxu0 0.0
    %175 = vmatpush.msra.mxu0 0.0
    %176 = vmatpush.msra.mxu0 0.0
    %177 = vmatpush.msra.mxu0 %v139
    %178 = vmatpush.msra.mxu0 %v138
    %179 = vmatpush.msra.mxu0 %v137
    %180 = vmatpush.msra.mxu0 %v136
    %181 = vmatmul.f32.gmra.mxu0 %v163
    %v182 = vpop.f32.mrf.mxu0
    %v183 = vadd.f32 0.0, %v182
    %184 = vdwg.mxu0
    %v185 = vadd.f32 %v158, %v183
    %v186 = vxor.u32 %v185, 2147483648
    %v187 = vmul.f32 %v186, 1.442695
    %v188 = vpow.pop %v187
    %v189 = vadd.f32 %v188, 1.0
    %v190 = vrcp.pop %v189
    %v191 = vmul.f32 %v189, %v190
    %v192 = vsub.f32 1.0, %v191
    %v193 = vmul.f32 %v190, %v192
    %v194 = vadd.f32 %v190, %v193
    %vm195 = vweird.f32 %v189
    %vm196 = vweird.f32 %v190
    %vm197 = vmor %vm195, %vm196
    %v198 = vsel %vm197, %v190, %v194
    %v199 = vand.u32 2147483647, %v189
    %vm200 = vcmp.eq.f32.partialorder %v199, 8.507059e+37
    %v201 = vand.u32 %v189, 2147483648
    %v202 = vor.u32 1.1754944e-38, %v201
    %v203 = vsel %vm200, %v202, %v198
    %v204 = vmul.f32 1.0, %v203
    %v205 = vtanh.pop %v185
    %v206 = vmul.f32 %v204, %v151
    %208 = vrot.lane.b32.xlu0 %v205, 64
    %v209 = vpop.permute.xlu0 %208
    %v211 = vmul.f32 %v204, %v209
    %213 = vrot.lane.b32.xlu0 %v211, 32
    %v214 = vpop.permute.xlu0 %213
    %v216 = vadd.f32 %v206, %v214
    %v217 = vtanh.pop %v216
    %219 = vrot.lane.b32.xlu0 %v217, 64
    %v220 = vpop.permute.xlu0 %219
    %v222 = vmul.f32 %v204, %v220
    %s223 = scalar_lea.vmem [#allocation3], %s156
    %v224 = vld [vmem:[%s223] sm:$0x3]
    %226 = vrot.lane.b32.xlu0 %v152, 32
    %v227 = vpop.permute.xlu0 %226
    %v228 = vsel %vm162, %v227, 0
    %230 = vmatpush.msra.mxu0 0.0
    %231 = vmatpush.msra.mxu0 0.0
    %232 = vmatpush.msra.mxu0 0.0
    %233 = vmatpush.msra.mxu0 0.0
    %234 = vmatpush.msra.mxu0 0.0
    %235 = vmatpush.msra.mxu0 0.0
    %236 = vmatpush.msra.mxu0 0.0
    %237 = vmatpush.msra.mxu0 0.0
    %238 = vmatpush.msra.mxu0 0.0
    %239 = vmatpush.msra.mxu0 0.0
    %240 = vmatpush.msra.mxu0 0.0
    %241 = vmatpush.msra.mxu0 0.0
    %242 = vmatpush.msra.mxu0 %v143
    %243 = vmatpush.msra.mxu0 %v142
    %244 = vmatpush.msra.mxu0 %v141
    %245 = vmatpush.msra.mxu0 %v140
    %246 = vmatmul.f32.gmra.mxu0 %v228
    %v247 = vpop.f32.mrf.mxu0
    %v248 = vadd.f32 0.0, %v247
    %249 = vdwg.mxu0
    %v250 = vadd.f32 %v224, %v248
    %v251 = vxor.u32 %v250, 2147483648
    %v252 = vmul.f32 %v251, 1.442695
    %v253 = vpow.pop %v252
    %v254 = vadd.f32 %v253, 1.0
    %v255 = vrcp.pop %v254
    %v256 = vmul.f32 %v254, %v255
    %v257 = vsub.f32 1.0, %v256
    %v258 = vmul.f32 %v255, %v257
    %v259 = vadd.f32 %v255, %v258
    %vm260 = vweird.f32 %v254
    %vm261 = vweird.f32 %v255
    %vm262 = vmor %vm260, %vm261
    %v263 = vsel %vm262, %v255, %v259
    %v264 = vand.u32 2147483647, %v254
    %vm265 = vcmp.eq.f32.partialorder %v264, 8.507059e+37
    %v266 = vand.u32 %v254, 2147483648
    %v267 = vor.u32 1.1754944e-38, %v266
    %v268 = vsel %vm265, %v267, %v263
    %v269 = vmul.f32 1.0, %v268
    %v270 = vtanh.pop %v250
    %v271 = vmul.f32 %v269, %v153
    %273 = vrot.lane.b32.xlu0 %v270, 64
    %v274 = vpop.permute.xlu0 %273
    %v276 = vmul.f32 %v269, %v274
    %278 = vrot.lane.b32.xlu0 %v276, 32
    %v279 = vpop.permute.xlu0 %278
    %v281 = vadd.f32 %v271, %v279
    %v282 = vtanh.pop %v281
    %284 = vrot.lane.b32.xlu0 %v282, 64
    %v285 = vpop.permute.xlu0 %284
    %v287 = vmul.f32 %v269, %v285
    %s288 = scalar_lea.vmem %s7, %s154
    %v289 = vld [vmem:[%s288] sm:$0x3]
    %s290 = scalar_lea.vmem %s7, %s156
    %v291 = vld [vmem:[%s290] sm:$0x3]
    %293 = vset.pattern.permute.xlu0 0
    %294 = vperm.xlu0 %293, %v289
    %v295 = vpop.permute.xlu0 %294
    %v297 = vmul.f32 %v295, %v222
    %299 = vrot.lane.b32.xlu0 %v297, 32
    %v300 = vpop.permute.xlu0 %299
    %s302 = scalar_lea.vmem %s8, %s154
    %vm303 = vcmask 254976
    %304 = vst.msk [vmem:[%s302] sm:$0x3] %vm303, %v300
    %306 = vset.pattern.permute.xlu0 0
    %307 = vperm.xlu0 %306, %v291
    %v308 = vpop.permute.xlu0 %307
    %v310 = vmul.f32 %v308, %v287
    %312 = vrot.lane.b32.xlu0 %v310, 64
    %v313 = vpop.permute.xlu0 %312
    %s315 = scalar_lea.vmem %s8, %s156
    %vm316 = vcmask 517376
    %317 = vst.msk [vmem:[%s315] sm:$0x3] %vm316, %v313
    %v318 = vsub.f32 1.0, %v289
    %320 = vset.pattern.permute.xlu0 0
    %321 = vperm.xlu0 %320, %v318
    %v322 = vpop.permute.xlu0 %321
    %v324 = vmul.f32 %v322, %v150
    %v325 = vadd.f32 %v297, %v324
    %v326 = vmul.f32 %v295, %v216
    %v327 = vmul.f32 %v322, %v151
    %v328 = vadd.f32 %v326, %v327
    %v329 = vsub.f32 1.0, %v291
    %331 = vset.pattern.permute.xlu0 0
    %332 = vperm.xlu0 %331, %v329
    %v333 = vpop.permute.xlu0 %332
    %v335 = vmul.f32 %v333, %v152
    %v336 = vadd.f32 %v310, %v335
    %v337 = vmul.f32 %v308, %v281
    %v338 = vmul.f32 %v333, %v153
    %v339 = vadd.f32 %v337, %v338
  $region38: #{bidaf_forward.15} parent=0 // loop_footer
    %s149 = sadd.s32 1, %s145
  $region39: #{bidaf_forward.15} parent=0 // loop_footer_branch
    %144 = sbr.rel target = $region35
  $region40: #{bidaf_forward.15} parent=0 // loop_exit
    _
  // Predicated region
  $region41: #{bidaf_forward.15} parent=0 // pred_check
    _
  $region42: #{bidaf_forward.15} parent=0 // pred_check_branch
    %341 = sbr.rel (0) target = $region44
  $region43: #{bidaf_forward.15} parent=0 // pred_region
    _
  $region44: #{bidaf_forward.15} parent=0 // pred_fallthru
    _
  // Predicated region
  $region45: #{bidaf_forward.15} parent=0 // pred_check
    _
  $region46: #{bidaf_forward.15} parent=0 // pred_check_branch
    %343 = sbr.rel (0) target = $region48
  $region47: #{bidaf_forward.15} parent=0 // pred_region
    _
  $region48: #{bidaf_forward.15} parent=0 // pred_fallthru
    _

// kernel: bidaf_forward.17
$region0: #{bidaf_forward.17}
  #allocation0 [shape = 'u32[]', space=smem, size = 0x4, offset = 0x4, fixed_abs, tag = 'smem constant byte address 0x4 - core index']
  #allocation1 [shape = 'u32[72,128]{1,0:T(1,128)}', space=vmem, size = 0x9000, scoped, tag = 'internal scratch']
  #allocation2 [shape = 'f32[1,1]{1,0:T(1,128)S(1)}', space=vmem, size = 0x200, scoped, tag = 'scoped memory for bidaf_forward.17']
  #allocation3 [shape = 'f32[1,1]{1,0:T(1,128)S(1)}', space=vmem, size = 0x200, scoped, tag = 'scoped memory for bidaf_forward.17']
  %s0 = inlined_call_operand.vmem [shape: f32[2,16,256], index: 0, kind: input, shape index: {}]
  %s1 = inlined_call_operand.vmem [shape: f32[2,16,64], index: 1, kind: input, shape index: {}]
  %s2 = inlined_call_operand.vmem [shape: f32[2,16,64], index: 2, kind: input, shape index: {}]
  %s3 = inlined_call_operand.vmem [shape: f32[2,16,1], index: 3, kind: input, shape index: {}]
  %s4 = inlined_call_operand.vmem [shape: f32[1,256], index: 4, kind: input, shape index: {}]
  %s5 = inlined_call_operand.vmem [shape: f32[1,64], index: 5, kind: input, shape index: {}]
  %s6 = inlined_call_operand.<no memory space> [shape: f32[1,1], index: 6, kind: input, shape index: {}]
  %s7 = inlined_call_operand.vmem [shape: f32[1,256], index: 7, kind: input, shape index: {}]
  %s8 = inlined_call_operand.vmem [shape: f32[1,64], index: 8, kind: input, shape index: {}]
  %s9 = inlined_call_operand.<no memory space> [shape: f32[1,1], index: 9, kind: input, shape index: {}]
  %s10 = inlined_call_operand.vmem [shape: f32[2,16,1], index: 10, kind: output, shape index: {0}]
  %s11 = inlined_call_operand.vmem [shape: f32[2,16,1], index: 11, kind: output, shape index: {1}]
  %12 = xla_tuple %s10, %s11
  %s13 = sld [smem:[#allocation0]]
  $region81: #{bidaf_forward.17} parent=0
    _
  %s15 = ssub.s32 1, %s13
  %s16 = scalar_select 0, %s15, %s13
  %v17 = vstv %s6
  %18 = vst [vmem:[#allocation2] sm:$0x1] %v17
  %v19 = vstv %s9
  %20 = vst [vmem:[#allocation3] sm:$0x1] %v19
  loop: start=0, step=1, limit=4
  $region2: #{bidaf_forward.17} parent=0 // loop_pre_header
    _
  $region3: #{bidaf_forward.17} parent=0 // loop_header
    %s22 = sphi 0, %s26
    %p23 = scmp.ge.s32.totalorder %s22, 4
    %s32 = sphi 0, %s34
    %s35 = sphi 0, %s32
    %s36 = sphi 0, %s35
    %s52 = sphi 0, %s36
    %s58 = sphi 0, %s60
    %s61 = sphi 0, %s58
    %s62 = sphi 0, %s61
    %s78 = sphi 0, %s62
    %s84 = sphi 0, %s86
    %s87 = sphi 0, %s84
    %s88 = sphi 0, %s87
    %s104 = sphi 0, %s88
    %s110 = sphi 0, %s112
    %s113 = sphi 0, %s110
    %s114 = sphi 0, %s113
    %s130 = sphi 0, %s114
    %s134 = sphi 0, %s134
    %s136 = sphi 0, %s134
    %s137 = sphi 0, %s136
    %s151 = sphi 0, %s137
    %s155 = sphi 0, %s155
    %s157 = sphi 0, %s155
    %s158 = sphi 0, %s157
    %s172 = sphi 0, %s158
    %s176 = sphi 0, %s176
    %s178 = sphi 0, %s176
    %s179 = sphi 0, %s178
    %s193 = sphi 0, %s179
    %s197 = sphi 0, %s197
    %s199 = sphi 0, %s197
    %s200 = sphi 0, %s199
    %s214 = sphi 0, %s200
    %s218 = sphi 0, %s218
    %s220 = sphi 0, %s218
    %s221 = sphi 0, %s220
    %s235 = sphi 0, %s221
    %s239 = sphi 0, %s239
    %s241 = sphi 0, %s239
    %s242 = sphi 0, %s241
    %s256 = sphi 0, %s242
    %s262 = sphi 0, %s264
    %s265 = sphi 0, %s262
    %s266 = sphi 0, %s265
    %s282 = sphi 0, %s266
    %s288 = sphi 0, %s290
    %s291 = sphi 0, %s288
    %s292 = sphi 0, %s291
    %s308 = sphi 0, %s292
  $region4: #{bidaf_forward.17} parent=0 // loop_header_branch
    %25 = sbr.rel (%p23) target = $region8
  $region5: #{bidaf_forward.17} parent=0 // loop_body
    %s27 = ssub.s32 %s22, 1
    %s28 = ssub.s32 %s22, 2
    %s29 = sadd.s32 %s22, 1
    %s30 = ssub.s32 %s22, %s29
    %p31 = scmp.eq.s32.totalorder %s30, 0
    %s33 = sadd.s32 %s32, 1
    %s34 = scalar_select %p31, %s32, %s33
    %p37 = pneg %p31
    %p38 = scmp.eq.s32.totalorder %s22, 1
    %p39 = por %p37, %p38
    %p40 = scmp.ne.s32.totalorder %s32, %s35
    %p41 = scmp.eq.s32.totalorder %s22, 0
    %p42 = por %p40, %p41
    %p43 = scmp.ne.s32.totalorder %s32, %s35
    %p44 = scmp.eq.s32.totalorder %s27, 1
    %p45 = por %p43, %p44
    %p46 = scmp.ne.s32.totalorder %s35, %s36
    %p47 = scmp.eq.s32.totalorder %s27, 0
    %p48 = por %p46, %p47
    %p49 = scmp.ne.s32.totalorder %s35, %s36
    %p50 = scmp.eq.s32.totalorder %s28, 1
    %p51 = por %p49, %p50
    %p53 = scmp.ne.s32.totalorder %s36, %s52
    %p54 = scmp.eq.s32.totalorder %s28, 0
    %p55 = por %p53, %p54
    %s56 = ssub.s32 %s22, %s29
    %p57 = scmp.eq.s32.totalorder %s56, 0
    %s59 = sadd.s32 %s58, 1
    %s60 = scalar_select %p57, %s58, %s59
    %p63 = pneg %p57
    %p64 = scmp.eq.s32.totalorder %s22, 1
    %p65 = por %p63, %p64
    %p66 = scmp.ne.s32.totalorder %s58, %s61
    %p67 = scmp.eq.s32.totalorder %s22, 0
    %p68 = por %p66, %p67
    %p69 = scmp.ne.s32.totalorder %s58, %s61
    %p70 = scmp.eq.s32.totalorder %s27, 1
    %p71 = por %p69, %p70
    %p72 = scmp.ne.s32.totalorder %s61, %s62
    %p73 = scmp.eq.s32.totalorder %s27, 0
    %p74 = por %p72, %p73
    %p75 = scmp.ne.s32.totalorder %s61, %s62
    %p76 = scmp.eq.s32.totalorder %s28, 1
    %p77 = por %p75, %p76
    %p79 = scmp.ne.s32.totalorder %s62, %s78
    %p80 = scmp.eq.s32.totalorder %s28, 0
    %p81 = por %p79, %p80
    %s82 = ssub.s32 %s22, %s29
    %p83 = scmp.eq.s32.totalorder %s82, 0
    %s85 = sadd.s32 %s84, 1
    %s86 = scalar_select %p83, %s84, %s85
    %p89 = pneg %p83
    %p90 = scmp.eq.s32.totalorder %s22, 1
    %p91 = por %p89, %p90
    %p92 = scmp.ne.s32.totalorder %s84, %s87
    %p93 = scmp.eq.s32.totalorder %s22, 0
    %p94 = por %p92, %p93
    %p95 = scmp.ne.s32.totalorder %s84, %s87
    %p96 = scmp.eq.s32.totalorder %s27, 1
    %p97 = por %p95, %p96
    %p98 = scmp.ne.s32.totalorder %s87, %s88
    %p99 = scmp.eq.s32.totalorder %s27, 0
    %p100 = por %p98, %p99
    %p101 = scmp.ne.s32.totalorder %s87, %s88
    %p102 = scmp.eq.s32.totalorder %s28, 1
    %p103 = por %p101, %p102
    %p105 = scmp.ne.s32.totalorder %s88, %s104
    %p106 = scmp.eq.s32.totalorder %s28, 0
    %p107 = por %p105, %p106
    %s108 = ssub.s32 %s22, %s29
    %p109 = scmp.eq.s32.totalorder %s108, 0
    %s111 = sadd.s32 %s110, 1
    %s112 = scalar_select %p109, %s110, %s111
    %p115 = pneg %p109
    %p116 = scmp.eq.s32.totalorder %s22, 1
    %p117 = por %p115, %p116
    %p118 = scmp.ne.s32.totalorder %s110, %s113
    %p119 = scmp.eq.s32.totalorder %s22, 0
    %p120 = por %p118, %p119
    %p121 = scmp.ne.s32.totalorder %s110, %s113
    %p122 = scmp.eq.s32.totalorder %s27, 1
    %p123 = por %p121, %p122
    %p124 = scmp.ne.s32.totalorder %s113, %s114
    %p125 = scmp.eq.s32.totalorder %s27, 0
    %p126 = por %p124, %p125
    %p127 = scmp.ne.s32.totalorder %s113, %s114
    %p128 = scmp.eq.s32.totalorder %s28, 1
    %p129 = por %p127, %p128
    %p131 = scmp.ne.s32.totalorder %s114, %s130
    %p132 = scmp.eq.s32.totalorder %s28, 0
    %p133 = por %p131, %p132
    %s135 = sadd.s32 %s134, 1
    %p138 = scmp.eq.s32.totalorder %s22, 1
    %p139 = scmp.ne.s32.totalorder %s134, %s136
    %p140 = scmp.eq.s32.totalorder %s22, 0
    %p141 = por %p139, %p140
    %p142 = scmp.ne.s32.totalorder %s134, %s136
    %p143 = scmp.eq.s32.totalorder %s27, 1
    %p144 = por %p142, %p143
    %p145 = scmp.ne.s32.totalorder %s136, %s137
    %p146 = scmp.eq.s32.totalorder %s27, 0
    %p147 = por %p145, %p146
    %p148 = scmp.ne.s32.totalorder %s136, %s137
    %p149 = scmp.eq.s32.totalorder %s28, 1
    %p150 = por %p148, %p149
    %p152 = scmp.ne.s32.totalorder %s137, %s151
    %p153 = scmp.eq.s32.totalorder %s28, 0
    %p154 = por %p152, %p153
    %s156 = sadd.s32 %s155, 1
    %p159 = scmp.eq.s32.totalorder %s22, 1
    %p160 = scmp.ne.s32.totalorder %s155, %s157
    %p161 = scmp.eq.s32.totalorder %s22, 0
    %p162 = por %p160, %p161
    %p163 = scmp.ne.s32.totalorder %s155, %s157
    %p164 = scmp.eq.s32.totalorder %s27, 1
    %p165 = por %p163, %p164
    %p166 = scmp.ne.s32.totalorder %s157, %s158
    %p167 = scmp.eq.s32.totalorder %s27, 0
    %p168 = por %p166, %p167
    %p169 = scmp.ne.s32.totalorder %s157, %s158
    %p170 = scmp.eq.s32.totalorder %s28, 1
    %p171 = por %p169, %p170
    %p173 = scmp.ne.s32.totalorder %s158, %s172
    %p174 = scmp.eq.s32.totalorder %s28, 0
    %p175 = por %p173, %p174
    %s177 = sadd.s32 %s176, 1
    %p180 = scmp.eq.s32.totalorder %s22, 1
    %p181 = scmp.ne.s32.totalorder %s176, %s178
    %p182 = scmp.eq.s32.totalorder %s22, 0
    %p183 = por %p181, %p182
    %p184 = scmp.ne.s32.totalorder %s176, %s178
    %p185 = scmp.eq.s32.totalorder %s27, 1
    %p186 = por %p184, %p185
    %p187 = scmp.ne.s32.totalorder %s178, %s179
    %p188 = scmp.eq.s32.totalorder %s27, 0
    %p189 = por %p187, %p188
    %p190 = scmp.ne.s32.totalorder %s178, %s179
    %p191 = scmp.eq.s32.totalorder %s28, 1
    %p192 = por %p190, %p191
    %p194 = scmp.ne.s32.totalorder %s179, %s193
    %p195 = scmp.eq.s32.totalorder %s28, 0
    %p196 = por %p194, %p195
    %s198 = sadd.s32 %s197, 1
    %p201 = scmp.eq.s32.totalorder %s22, 1
    %p202 = scmp.ne.s32.totalorder %s197, %s199
    %p203 = scmp.eq.s32.totalorder %s22, 0
    %p204 = por %p202, %p203
    %p205 = scmp.ne.s32.totalorder %s197, %s199
    %p206 = scmp.eq.s32.totalorder %s27, 1
    %p207 = por %p205, %p206
    %p208 = scmp.ne.s32.totalorder %s199, %s200
    %p209 = scmp.eq.s32.totalorder %s27, 0
    %p210 = por %p208, %p209
    %p211 = scmp.ne.s32.totalorder %s199, %s200
    %p212 = scmp.eq.s32.totalorder %s28, 1
    %p213 = por %p211, %p212
    %p215 = scmp.ne.s32.totalorder %s200, %s214
    %p216 = scmp.eq.s32.totalorder %s28, 0
    %p217 = por %p215, %p216
    %s219 = sadd.s32 %s218, 1
    %p222 = scmp.eq.s32.totalorder %s22, 1
    %p223 = scmp.ne.s32.totalorder %s218, %s220
    %p224 = scmp.eq.s32.totalorder %s22, 0
    %p225 = por %p223, %p224
    %p226 = scmp.ne.s32.totalorder %s218, %s220
    %p227 = scmp.eq.s32.totalorder %s27, 1
    %p228 = por %p226, %p227
    %p229 = scmp.ne.s32.totalorder %s220, %s221
    %p230 = scmp.eq.s32.totalorder %s27, 0
    %p231 = por %p229, %p230
    %p232 = scmp.ne.s32.totalorder %s220, %s221
    %p233 = scmp.eq.s32.totalorder %s28, 1
    %p234 = por %p232, %p233
    %p236 = scmp.ne.s32.totalorder %s221, %s235
    %p237 = scmp.eq.s32.totalorder %s28, 0
    %p238 = por %p236, %p237
    %s240 = sadd.s32 %s239, 1
    %p243 = scmp.eq.s32.totalorder %s22, 1
    %p244 = scmp.ne.s32.totalorder %s239, %s241
    %p245 = scmp.eq.s32.totalorder %s22, 0
    %p246 = por %p244, %p245
    %p247 = scmp.ne.s32.totalorder %s239, %s241
    %p248 = scmp.eq.s32.totalorder %s27, 1
    %p249 = por %p247, %p248
    %p250 = scmp.ne.s32.totalorder %s241, %s242
    %p251 = scmp.eq.s32.totalorder %s27, 0
    %p252 = por %p250, %p251
    %p253 = scmp.ne.s32.totalorder %s241, %s242
    %p254 = scmp.eq.s32.totalorder %s28, 1
    %p255 = por %p253, %p254
    %p257 = scmp.ne.s32.totalorder %s242, %s256
    %p258 = scmp.eq.s32.totalorder %s28, 0
    %p259 = por %p257, %p258
    %s260 = ssub.s32 %s22, %s29
    %p261 = scmp.eq.s32.totalorder %s260, 0
    %s263 = sadd.s32 %s262, 1
    %s264 = scalar_select %p261, %s262, %s263
    %p267 = pneg %p261
    %p268 = scmp.eq.s32.totalorder %s22, 1
    %p269 = por %p267, %p268
    %p270 = scmp.ne.s32.totalorder %s262, %s265
    %p271 = scmp.eq.s32.totalorder %s22, 0
    %p272 = por %p270, %p271
    %p273 = scmp.ne.s32.totalorder %s262, %s265
    %p274 = scmp.eq.s32.totalorder %s27, 1
    %p275 = por %p273, %p274
    %p276 = scmp.ne.s32.totalorder %s265, %s266
    %p277 = scmp.eq.s32.totalorder %s27, 0
    %p278 = por %p276, %p277
    %p279 = scmp.ne.s32.totalorder %s265, %s266
    %p280 = scmp.eq.s32.totalorder %s28, 1
    %p281 = por %p279, %p280
    %p283 = scmp.ne.s32.totalorder %s266, %s282
    %p284 = scmp.eq.s32.totalorder %s28, 0
    %p285 = por %p283, %p284
    %s286 = ssub.s32 %s22, %s29
    %p287 = scmp.eq.s32.totalorder %s286, 0
    %s289 = sadd.s32 %s288, 1
    %s290 = scalar_select %p287, %s288, %s289
    %p293 = pneg %p287
    %p294 = scmp.eq.s32.totalorder %s22, 1
    %p295 = por %p293, %p294
    %p296 = scmp.ne.s32.totalorder %s288, %s291
    %p297 = scmp.eq.s32.totalorder %s22, 0
    %p298 = por %p296, %p297
    %p299 = scmp.ne.s32.totalorder %s288, %s291
    %p300 = scmp.eq.s32.totalorder %s27, 1
    %p301 = por %p299, %p300
    %p302 = scmp.ne.s32.totalorder %s291, %s292
    %p303 = scmp.eq.s32.totalorder %s27, 0
    %p304 = por %p302, %p303
    %p305 = scmp.ne.s32.totalorder %s291, %s292
    %p306 = scmp.eq.s32.totalorder %s28, 1
    %p307 = por %p305, %p306
    %p309 = scmp.ne.s32.totalorder %s292, %s308
    %p310 = scmp.eq.s32.totalorder %s28, 0
    %p311 = por %p309, %p310
    %p312 = scmp.le.s32.totalorder 1, %s22
    %p313 = scmp.lt.s32.totalorder %s22, 3
    %p314 = pnand %p312, %p313
    %p315 = pneg %p314
    // Predicated region
    $region9: #{bidaf_forward.17} parent=5 // pred_check
      _
    $region10: #{bidaf_forward.17} parent=5 // pred_check_branch
      %317 = sbr.rel (%p314) target = $region12
    $region11: #{bidaf_forward.17} parent=5 // pred_region
      %s318 = ssub.s32 %s22, 1
      // Predicated region
      $region13: #{bidaf_forward.17} parent=11 // pred_check
        %p319 = pneg %p147
      $region14: #{bidaf_forward.17} parent=11 // pred_check_branch
        %321 = sbr.rel (%p319) target = $region16
      $region15: #{bidaf_forward.17} parent=11 // pred_region
        _
      $region16: #{bidaf_forward.17} parent=11 // pred_fallthru
        _
      // Predicated region
      $region17: #{bidaf_forward.17} parent=11 // pred_check
        %p322 = pneg %p168
      $region18: #{bidaf_forward.17} parent=11 // pred_check_branch
        %324 = sbr.rel (%p322) target = $region20
      $region19: #{bidaf_forward.17} parent=11 // pred_region
        _
      $region20: #{bidaf_forward.17} parent=11 // pred_fallthru
        _
      // Predicated region
      $region21: #{bidaf_forward.17} parent=11 // pred_check
        %p325 = pneg %p189
      $region22: #{bidaf_forward.17} parent=11 // pred_check_branch
        %327 = sbr.rel (%p325) target = $region24
      $region23: #{bidaf_forward.17} parent=11 // pred_region
        _
      $region24: #{bidaf_forward.17} parent=11 // pred_fallthru
        _
      // Predicated region
      $region25: #{bidaf_forward.17} parent=11 // pred_check
        %p328 = pneg %p210
      $region26: #{bidaf_forward.17} parent=11 // pred_check_branch
        %330 = sbr.rel (%p328) target = $region28
      $region27: #{bidaf_forward.17} parent=11 // pred_region
        _
      $region28: #{bidaf_forward.17} parent=11 // pred_fallthru
        _
      // Predicated region
      $region29: #{bidaf_forward.17} parent=11 // pred_check
        %p331 = pneg %p231
      $region30: #{bidaf_forward.17} parent=11 // pred_check_branch
        %333 = sbr.rel (%p331) target = $region32
      $region31: #{bidaf_forward.17} parent=11 // pred_region
        _
      $region32: #{bidaf_forward.17} parent=11 // pred_fallthru
        _
      // Predicated region
      $region33: #{bidaf_forward.17} parent=11 // pred_check
        %p334 = pneg %p252
      $region34: #{bidaf_forward.17} parent=11 // pred_check_branch
        %336 = sbr.rel (%p334) target = $region36
      $region35: #{bidaf_forward.17} parent=11 // pred_region
        _
      $region36: #{bidaf_forward.17} parent=11 // pred_fallthru
        _
    $region12: #{bidaf_forward.17} parent=5 // pred_fallthru
      _
    %p337 = scmp.lt.s32.totalorder %s22, 2
    // Predicated region
    $region37: #{bidaf_forward.17} parent=5 // pred_check
      %p338 = pneg %p337
    $region38: #{bidaf_forward.17} parent=5 // pred_check_branch
      %340 = sbr.rel (%p338) target = $region40
    $region39: #{bidaf_forward.17} parent=5 // pred_region
      // Predicated region
      $region41: #{bidaf_forward.17} parent=39 // pred_check
        %p341 = pneg %p42
      $region42: #{bidaf_forward.17} parent=39 // pred_check_branch
        %343 = sbr.rel (%p341) target = $region44
      $region43: #{bidaf_forward.17} parent=39 // pred_region
        %p344 = scmp.lt.s32.totalorder %s22, 1
        %s345 = scalar_select %p344, %s22, 1
        %s346 = smul.addr %s345, 4
        %s347 = smul.addr %s346, 8
        %s348 = scalar_lea.vmem %s0, %s347
      $region44: #{bidaf_forward.17} parent=39 // pred_fallthru
        _
      // Predicated region
      $region45: #{bidaf_forward.17} parent=39 // pred_check
        %p349 = pneg %p68
      $region46: #{bidaf_forward.17} parent=39 // pred_check_branch
        %351 = sbr.rel (%p349) target = $region48
      $region47: #{bidaf_forward.17} parent=39 // pred_region
        %p352 = scmp.lt.s32.totalorder %s22, 1
        %s353 = scalar_select %p352, %s22, 1
        %s354 = smul.addr %s353, 2
        %s355 = smul.addr %s354, 8
        %s356 = scalar_lea.vmem %s1, %s355
      $region48: #{bidaf_forward.17} parent=39 // pred_fallthru
        _
      // Predicated region
      $region49: #{bidaf_forward.17} parent=39 // pred_check
        %p357 = pneg %p94
      $region50: #{bidaf_forward.17} parent=39 // pred_check_branch
        %359 = sbr.rel (%p357) target = $region52
      $region51: #{bidaf_forward.17} parent=39 // pred_region
        %p360 = scmp.lt.s32.totalorder %s22, 1
        %s361 = scalar_select %p360, %s22, 1
        %s362 = smul.addr %s361, 2
        %s363 = smul.addr %s362, 8
        %s364 = scalar_lea.vmem %s2, %s363
      $region52: #{bidaf_forward.17} parent=39 // pred_fallthru
        _
      // Predicated region
      $region53: #{bidaf_forward.17} parent=39 // pred_check
        %p365 = pneg %p120
      $region54: #{bidaf_forward.17} parent=39 // pred_check_branch
        %367 = sbr.rel (%p365) target = $region56
      $region55: #{bidaf_forward.17} parent=39 // pred_region
        %p368 = scmp.lt.s32.totalorder %s22, 1
        %s369 = scalar_select %p368, %s22, 1
        %s370 = smul.addr %s369, 2
        %s371 = smul.addr %s370, 8
        %s372 = scalar_lea.vmem %s3, %s371
      $region56: #{bidaf_forward.17} parent=39 // pred_fallthru
        _
    $region40: #{bidaf_forward.17} parent=5 // pred_fallthru
      _
    %p373 = scmp.le.s32.totalorder 1, %s22
    %p374 = scmp.lt.s32.totalorder %s22, 3
    %p375 = pnand %p373, %p374
    %p376 = pneg %p375
    // Predicated region
    $region57: #{bidaf_forward.17} parent=5 // pred_check
      _
    $region58: #{bidaf_forward.17} parent=5 // pred_check_branch
      %378 = sbr.rel (%p375) target = $region60
    $region59: #{bidaf_forward.17} parent=5 // pred_region
      %s379 = ssub.s32 %s22, 1
      %p380 = scmp.lt.s32.totalorder %s27, 1
      %s381 = scalar_select %p380, %s27, 1
      %s382 = smul.addr %s381, 4
      %s383 = smul.addr %s382, 8
      %s384 = scalar_lea.vmem %s0, %s383
      %p385 = pneg %p48
      %p386 = pneg %p45
      %p387 = scmp.lt.s32.totalorder %s27, 1
      %s388 = scalar_select %p387, %s27, 1
      %s389 = smul.addr %s388, 2
      %s390 = smul.addr %s389, 8
      %s391 = scalar_lea.vmem %s1, %s390
      %p392 = pneg %p74
      %p393 = pneg %p71
      %p394 = scmp.lt.s32.totalorder %s27, 1
      %s395 = scalar_select %p394, %s27, 1
      %s396 = smul.addr %s395, 2
      %s397 = smul.addr %s396, 8
      %s398 = scalar_lea.vmem %s2, %s397
      %p399 = pneg %p100
      %p400 = pneg %p97
      %p401 = scmp.lt.s32.totalorder %s27, 1
      %s402 = scalar_select %p401, %s27, 1
      %s403 = smul.addr %s402, 2
      %s404 = smul.addr %s403, 8
      %s405 = scalar_lea.vmem %s3, %s404
      %p406 = pneg %p126
      %p407 = pneg %p123
      %p408 = pneg %p147
      %p409 = pneg %p144
      %p410 = pneg %p168
      %p411 = pneg %p165
      %p412 = pneg %p189
      %p413 = pneg %p186
      %p414 = pneg %p210
      %p415 = pneg %p207
      %p416 = pneg %p231
      %p417 = pneg %p228
      %p418 = pneg %p252
      %p419 = pneg %p249
      %p420 = pneg %p278
      %p421 = pneg %p275
      %p422 = scmp.lt.s32.totalorder %s27, 1
      %s423 = scalar_select %p422, %s27, 1
      %s424 = smul.addr %s423, 2
      %s425 = smul.addr %s424, 8
      %s426 = scalar_lea.vmem %s10, %s425
      %p427 = pneg %p304
      %p428 = pneg %p301
      %p429 = scmp.lt.s32.totalorder %s27, 1
      %s430 = scalar_select %p429, %s27, 1
      %s431 = smul.addr %s430, 2
      %s432 = smul.addr %s431, 8
      %s433 = scalar_lea.vmem %s11, %s432
      %p434 = scmp.lt.s32.totalorder %s27, 1
      %s435 = scalar_select %p434, %s27, 1
      %s436 = smul.addr %s435, 4
      %s437 = smul.addr %s436, 8
      %s438 = scalar_lea.vmem %s0, %s437
      %p439 = scmp.lt.s32.totalorder %s27, 1
      %s440 = scalar_select %p439, %s27, 1
      %s441 = smul.addr %s440, 2
      %s442 = smul.addr %s441, 8
      %s443 = scalar_lea.vmem %s1, %s442
      %p444 = scmp.lt.s32.totalorder %s27, 1
      %s445 = scalar_select %p444, %s27, 1
      %s446 = smul.addr %s445, 2
      %s447 = smul.addr %s446, 8
      %s448 = scalar_lea.vmem %s2, %s447
      %p449 = scmp.lt.s32.totalorder %s27, 1
      %s450 = scalar_select %p449, %s27, 1
      %s451 = smul.addr %s450, 2
      %s452 = smul.addr %s451, 8
      %s453 = scalar_lea.vmem %s3, %s452
      %p454 = scmp.lt.s32.totalorder %s27, 1
      %s455 = scalar_select %p454, %s27, 1
      %s456 = smul.addr %s455, 2
      %s457 = smul.addr %s456, 8
      %s458 = scalar_lea.vmem %s10, %s457
      %p459 = scmp.lt.s32.totalorder %s27, 1
      %s460 = scalar_select %p459, %s27, 1
      %s461 = smul.addr %s460, 2
      %s462 = smul.addr %s461, 8
      %s463 = scalar_lea.vmem %s11, %s462
      %v464 = vld [vmem:[%s438] sm:$0xff]
      %v465 = vld [vmem:[%s438 + $0x8] sm:$0xff]
      %v466 = vld [vmem:[%s438 + $0x10] sm:$0xff]
      %v467 = vld [vmem:[%s438 + $0x18] sm:$0xff]
      %v468 = vld [vmem:[%s443] sm:$0xff]
      %v469 = vld [vmem:[%s443 + $0x8] sm:$0xff]
      %v470 = vld [vmem:[%s448] sm:$0xff]
      %v471 = vld [vmem:[%s448 + $0x8] sm:$0xff]
      %v472 = vld [vmem:[%s453] sm:$0xff]
      %v473 = vld [vmem:[%s453 + $0x8] sm:$0xff]
      %v474 = vld [vmem:[%s4] sm:$0x3]
      %v476 = vperm.slane %v474, 0
      %v477 = vperm.slane %v474, 1
      %v480 = vmul.f32 %v464, %v476
      %v481 = vmul.f32 %v465, %v477
      %v482 = vmul.f32 %v466, %v476
      %v483 = vmul.f32 %v467, %v477
      %v484 = vadd.f32 %v480, %v481
      %485 = vadd.xlane.f32.xlu0 %v484
      %v486 = vpop.xlane.xlu0 %485
      %v487 = vadd.f32 %v482, %v483
      %488 = vadd.xlane.f32.xlu0 %v487
      %v489 = vpop.xlane.xlu0 %488
      %v490 = vld [vmem:[%s5] sm:$0x1]
      %v492 = vperm.slane %v490, 0
      %v494 = vmul.f32 %v468, %v492
      %v495 = vmul.f32 %v469, %v492
      %vm496 = vcmask 523264
      %v497 = vsel %vm496, %v494, 0.0
      %498 = vadd.xlane.f32.xlu0 %v497
      %v499 = vpop.xlane.xlu0 %498
      %v500 = vsel %vm496, %v495, 0.0
      %501 = vadd.xlane.f32.xlu0 %v500
      %v502 = vpop.xlane.xlu0 %501
      %v503 = vadd.f32 %v486, %v499
      %v504 = vadd.f32 %v489, %v502
      %v505 = vld [vmem:[#allocation2] sm:$0x1]
      %v507 = vperm.slane %v505, 0
      %v509 = vadd.f32 %v503, %v507
      %v510 = vadd.f32 %v504, %v507
      %v511 = vld [vmem:[%s7] sm:$0x3]
      %v513 = vperm.slane %v511, 0
      %v514 = vperm.slane %v511, 1
      %v517 = vmul.f32 %v464, %v513
      %v518 = vmul.f32 %v465, %v514
      %v519 = vmul.f32 %v466, %v513
      %v520 = vmul.f32 %v467, %v514
      %v521 = vadd.f32 %v517, %v518
      %522 = vadd.xlane.f32.xlu0 %v521
      %v523 = vpop.xlane.xlu0 %522
      %v524 = vadd.f32 %v519, %v520
      %525 = vadd.xlane.f32.xlu0 %v524
      %v526 = vpop.xlane.xlu0 %525
      %v527 = vld [vmem:[%s8] sm:$0x1]
      %v529 = vperm.slane %v527, 0
      %v531 = vmul.f32 %v470, %v529
      %v532 = vmul.f32 %v471, %v529
      %v533 = vsel %vm496, %v531, 0.0
      %534 = vadd.xlane.f32.xlu0 %v533
      %v535 = vpop.xlane.xlu0 %534
      %v536 = vsel %vm496, %v532, 0.0
      %537 = vadd.xlane.f32.xlu0 %v536
      %v538 = vpop.xlane.xlu0 %537
      %v539 = vadd.f32 %v523, %v535
      %v540 = vadd.f32 %v526, %v538
      %v541 = vld [vmem:[#allocation3] sm:$0x1]
      %v543 = vperm.slane %v541, 0
      %v545 = vadd.f32 %v539, %v543
      %v546 = vadd.f32 %v540, %v543
      %v547 = vmul.f32 %v472, %v509
      %v548 = vmul.f32 %v473, %v510
      %v549 = vsub.f32 1.0, %v472
      %v550 = vsub.f32 1.0, %v473
      %v551 = vmul.f32 %v549, -1e+30
      %v552 = vmul.f32 %v550, -1e+30
      %v553 = vadd.f32 %v547, %v551
      %v554 = vadd.f32 %v548, %v552
      %vm555 = vcmask 7168
      %v556 = vsel %vm555, %v553, -inf
      %v557 = vsel %vm555, %v554, -inf
      %v558 = vmax.f32 %v556, %v557
      %v559 = vrot.slane %v558, 4
      %v560 = vmax.f32 %v558, %v559
      %v561 = vrot.slane %v560, 2
      %v562 = vmax.f32 %v560, %v561
      %v563 = vrot.slane %v562, 1
      %v564 = vmax.f32 %v562, %v563
      %v565 = vsub.f32 %v553, %v564
      %v566 = vsub.f32 %v554, %v564
      %v567 = vmul.f32 %v565, 1.442695
      %v568 = vpow.pop %v567
      %v569 = vmul.f32 %v566, 1.442695
      %v570 = vpow.pop %v569
      %v571 = vsel %vm555, %v568, 0.0
      %v572 = vsel %vm555, %v570, 0.0
      %v573 = vadd.f32 %v571, %v572
      %v574 = vrot.slane %v573, 4
      %v575 = vadd.f32 %v573, %v574
      %v576 = vrot.slane %v575, 2
      %v577 = vadd.f32 %v575, %v576
      %v578 = vrot.slane %v577, 1
      %v579 = vadd.f32 %v577, %v578
      %v580 = vlog2.pop %v579
      %v581 = vmul.f32 %v580, 0.6931472
      %v582 = vsub.f32 %v565, %v581
      %v583 = vsub.f32 %v566, %v581
      %584 = vst.msk [vmem:[%s458] sm:$0xff] %vm555, %v582
      %585 = vst.msk [vmem:[%s458 + $0x8] sm:$0xff] %vm555, %v583
      %v586 = vmul.f32 %v472, %v545
      %v587 = vmul.f32 %v473, %v546
      %v588 = vadd.f32 %v586, %v551
      %v589 = vadd.f32 %v587, %v552
      %v590 = vsel %vm555, %v588, -inf
      %v591 = vsel %vm555, %v589, -inf
      %v592 = vmax.f32 %v590, %v591
      %v593 = vrot.slane %v592, 4
      %v594 = vmax.f32 %v592, %v593
      %v595 = vrot.slane %v594, 2
      %v596 = vmax.f32 %v594, %v595
      %v597 = vrot.slane %v596, 1
      %v598 = vmax.f32 %v596, %v597
      %v599 = vsub.f32 %v588, %v598
      %v600 = vsub.f32 %v589, %v598
      %v601 = vmul.f32 %v599, 1.442695
      %v602 = vpow.pop %v601
      %v603 = vmul.f32 %v600, 1.442695
      %v604 = vpow.pop %v603
      %v605 = vsel %vm555, %v602, 0.0
      %v606 = vsel %vm555, %v604, 0.0
      %v607 = vadd.f32 %v605, %v606
      %v608 = vrot.slane %v607, 4
      %v609 = vadd.f32 %v607, %v608
      %v610 = vrot.slane %v609, 2
      %v611 = vadd.f32 %v609, %v610
      %v612 = vrot.slane %v611, 1
      %v613 = vadd.f32 %v611, %v612
      %v614 = vlog2.pop %v613
      %v615 = vmul.f32 %v614, 0.6931472
      %v616 = vsub.f32 %v599, %v615
      %v617 = vsub.f32 %v600, %v615
      %618 = vst.msk [vmem:[%s463] sm:$0xff] %vm555, %v616
      %619 = vst.msk [vmem:[%s463 + $0x8] sm:$0xff] %vm555, %v617
      %p620 = scmp.lt.s32.totalorder %s27, 1
      %s621 = scalar_select %p620, %s27, 1
      %s622 = smul.addr %s621, 2
      %s623 = smul.addr %s622, 8
      %s624 = scalar_lea.vmem %s10, %s623
      %p625 = scmp.lt.s32.totalorder %s27, 1
      %s626 = scalar_select %p625, %s27, 1
      %s627 = smul.addr %s626, 2
      %s628 = smul.addr %s627, 8
      %s629 = scalar_lea.vmem %s11, %s628
      // Predicated region
      $region61: #{bidaf_forward.17} parent=59 // pred_check
        %p630 = pneg %p275
      $region62: #{bidaf_forward.17} parent=59 // pred_check_branch
        %632 = sbr.rel (%p630) target = $region64
      $region63: #{bidaf_forward.17} parent=59 // pred_region
        _
      $region64: #{bidaf_forward.17} parent=59 // pred_fallthru
        _
      // Predicated region
      $region65: #{bidaf_forward.17} parent=59 // pred_check
        %p633 = pneg %p301
      $region66: #{bidaf_forward.17} parent=59 // pred_check_branch
        %635 = sbr.rel (%p633) target = $region68
      $region67: #{bidaf_forward.17} parent=59 // pred_region
        _
      $region68: #{bidaf_forward.17} parent=59 // pred_fallthru
        _
    $region60: #{bidaf_forward.17} parent=5 // pred_fallthru
      _
    %p636 = scmp.le.s32.totalorder 2, %s22
    // Predicated region
    $region69: #{bidaf_forward.17} parent=5 // pred_check
      %p637 = pneg %p636
    $region70: #{bidaf_forward.17} parent=5 // pred_check_branch
      %639 = sbr.rel (%p637) target = $region72
    $region71: #{bidaf_forward.17} parent=5 // pred_region
      %s640 = ssub.s32 %s22, 2
      // Predicated region
      $region73: #{bidaf_forward.17} parent=71 // pred_check
        %p641 = pneg %p281
      $region74: #{bidaf_forward.17} parent=71 // pred_check_branch
        %643 = sbr.rel (%p641) target = $region76
      $region75: #{bidaf_forward.17} parent=71 // pred_region
        %p644 = scmp.lt.s32.totalorder %s28, 1
        %s645 = scalar_select %p644, %s28, 1
        %s646 = smul.addr %s645, 2
        %s647 = smul.addr %s646, 8
        %s648 = scalar_lea.vmem %s10, %s647
      $region76: #{bidaf_forward.17} parent=71 // pred_fallthru
        _
      // Predicated region
      $region77: #{bidaf_forward.17} parent=71 // pred_check
        %p649 = pneg %p307
      $region78: #{bidaf_forward.17} parent=71 // pred_check_branch
        %651 = sbr.rel (%p649) target = $region80
      $region79: #{bidaf_forward.17} parent=71 // pred_region
        %p652 = scmp.lt.s32.totalorder %s28, 1
        %s653 = scalar_select %p652, %s28, 1
        %s654 = smul.addr %s653, 2
        %s655 = smul.addr %s654, 8
        %s656 = scalar_lea.vmem %s11, %s655
      $region80: #{bidaf_forward.17} parent=71 // pred_fallthru
        _
    $region72: #{bidaf_forward.17} parent=5 // pred_fallthru
      _
  $region6: #{bidaf_forward.17} parent=0 // loop_footer
    %s26 = sadd.s32 1, %s22
  $region7: #{bidaf_forward.17} parent=0 // loop_footer_branch
    %21 = sbr.rel target = $region3
  $region8: #{bidaf_forward.17} parent=0 // loop_exit
    _

// kernel: bidaf_forward.14
$region0: #{bidaf_forward.14}
  #allocation0 [shape = 'u32[]', space=smem, size = 0x4, offset = 0x4, fixed_abs, tag = 'smem constant byte address 0x4 - core index']
  #allocation1 [shape = 'u32[72,128]{1,0:T(1,128)}', space=vmem, size = 0x9000, scoped, tag = 'internal scratch']
  #allocation2 [shape = 'f32[32,128]{1,0:T(8,128)}', space=vmem, size = 0x4000, scoped, tag = 'scratch operand']
  #allocation3 [shape = 'f32[32,128]{1,0:T(8,128)}', space=vmem, size = 0x4000, scoped, tag = 'scratch operand']
  %s0 = inlined_call_operand.vmem [shape: f32[32,256], index: 0, kind: input, shape index: {}]
  %s1 = inlined_call_operand.vmem [shape: f32[256,128], index: 1, kind: input, shape index: {}]
  %s2 = inlined_call_operand.vmem [shape: f32[1,128], index: 2, kind: input, shape index: {}]
  %s3 = inlined_call_operand.vmem [shape: f32[32,128], index: 3, kind: input, shape index: {}]
  %s4 = inlined_call_operand.vmem [shape: f32[256,128], index: 4, kind: input, shape index: {}]
  %s5 = inlined_call_operand.vmem [shape: f32[1,128], index: 5, kind: input, shape index: {}]
  %s6 = inlined_call_operand.vmem [shape: f32[32,128], index: 6, kind: input, shape index: {}]
  %s7 = inlined_call_operand.vmem [shape: f32[32,1], index: 7, kind: input, shape index: {}]
  %s8 = inlined_call_operand.vmem [shape: f32[32,64], index: 8, kind: output, shape index: {}]
  %s9 = sld [smem:[#allocation0]]
  $region49: #{bidaf_forward.14} parent=0
    _
  %s11 = ssub.s32 1, %s9
  %s12 = scalar_select 0, %s11, %s9
  // Predicated region
  $region2: #{bidaf_forward.14} parent=0 // pred_check
    _
  $region3: #{bidaf_forward.14} parent=0 // pred_check_branch
    %14 = sbr.rel (0) target = $region5
  $region4: #{bidaf_forward.14} parent=0 // pred_region
    _
  $region5: #{bidaf_forward.14} parent=0 // pred_fallthru
    _
  // Predicated region
  $region6: #{bidaf_forward.14} parent=0 // pred_check
    _
  $region7: #{bidaf_forward.14} parent=0 // pred_check_branch
    %16 = sbr.rel (0) target = $region9
  $region8: #{bidaf_forward.14} parent=0 // pred_region
    _
  $region9: #{bidaf_forward.14} parent=0 // pred_fallthru
    _
  // Predicated region
  $region10: #{bidaf_forward.14} parent=0 // pred_check
    _
  $region11: #{bidaf_forward.14} parent=0 // pred_check_branch
    %18 = sbr.rel (0) target = $region13
  $region12: #{bidaf_forward.14} parent=0 // pred_region
    _
  $region13: #{bidaf_forward.14} parent=0 // pred_fallthru
    _
  // Predicated region
  $region14: #{bidaf_forward.14} parent=0 // pred_check
    _
  $region15: #{bidaf_forward.14} parent=0 // pred_check_branch
    %20 = sbr.rel (0) target = $region17
  $region16: #{bidaf_forward.14} parent=0 // pred_region
    _
  $region17: #{bidaf_forward.14} parent=0 // pred_fallthru
    _
  // Predicated region
  $region18: #{bidaf_forward.14} parent=0 // pred_check
    _
  $region19: #{bidaf_forward.14} parent=0 // pred_check_branch
    %22 = sbr.rel (0) target = $region21
  $region20: #{bidaf_forward.14} parent=0 // pred_region
    _
  $region21: #{bidaf_forward.14} parent=0 // pred_fallthru
    _
  // Predicated region
  $region22: #{bidaf_forward.14} parent=0 // pred_check
    _
  $region23: #{bidaf_forward.14} parent=0 // pred_check_branch
    %24 = sbr.rel (0) target = $region25
  $region24: #{bidaf_forward.14} parent=0 // pred_region
    _
  $region25: #{bidaf_forward.14} parent=0 // pred_fallthru
    _
  // Predicated region
  $region26: #{bidaf_forward.14} parent=0 // pred_check
    _
  $region27: #{bidaf_forward.14} parent=0 // pred_check_branch
    %26 = sbr.rel (0) target = $region29
  $region28: #{bidaf_forward.14} parent=0 // pred_region
    _
  $region29: #{bidaf_forward.14} parent=0 // pred_fallthru
    _
  // Predicated region
  $region30: #{bidaf_forward.14} parent=0 // pred_check
    _
  $region31: #{bidaf_forward.14} parent=0 // pred_check_branch
    %28 = sbr.rel (0) target = $region33
  $region32: #{bidaf_forward.14} parent=0 // pred_region
    _
  $region33: #{bidaf_forward.14} parent=0 // pred_fallthru
    _
  %v29 = vld [vmem:[%s0] sm:$0xff]
  %v30 = vld [vmem:[%s0 + $0x8] sm:$0xff]
  %v31 = vld [vmem:[%s0 + $0x10] sm:$0xff]
  %v32 = vld [vmem:[%s0 + $0x18] sm:$0xff]
  %v33 = vld [vmem:[%s0 + $0x20] sm:$0xff]
  %v34 = vld [vmem:[%s0 + $0x28] sm:$0xff]
  %v35 = vld [vmem:[%s0 + $0x30] sm:$0xff]
  %v36 = vld [vmem:[%s0 + $0x38] sm:$0xff]
  %v37 = vld [vmem:[%s1] sm:$0xff]
  %v38 = vld [vmem:[%s1 + $0x8] sm:$0xff]
  %v39 = vld [vmem:[%s1 + $0x10] sm:$0xff]
  %v40 = vld [vmem:[%s1 + $0x18] sm:$0xff]
  %v41 = vld [vmem:[%s1 + $0x20] sm:$0xff]
  %v42 = vld [vmem:[%s1 + $0x28] sm:$0xff]
  %v43 = vld [vmem:[%s1 + $0x30] sm:$0xff]
  %v44 = vld [vmem:[%s1 + $0x38] sm:$0xff]
  %v45 = vld [vmem:[%s1 + $0x40] sm:$0xff]
  %v46 = vld [vmem:[%s1 + $0x48] sm:$0xff]
  %v47 = vld [vmem:[%s1 + $0x50] sm:$0xff]
  %v48 = vld [vmem:[%s1 + $0x58] sm:$0xff]
  %v49 = vld [vmem:[%s1 + $0x60] sm:$0xff]
  %v50 = vld [vmem:[%s1 + $0x68] sm:$0xff]
  %v51 = vld [vmem:[%s1 + $0x70] sm:$0xff]
  %v52 = vld [vmem:[%s1 + $0x78] sm:$0xff]
  %v53 = vld [vmem:[%s1 + $0x80] sm:$0xff]
  %v54 = vld [vmem:[%s1 + $0x88] sm:$0xff]
  %v55 = vld [vmem:[%s1 + $0x90] sm:$0xff]
  %v56 = vld [vmem:[%s1 + $0x98] sm:$0xff]
  %v57 = vld [vmem:[%s1 + $0xa0] sm:$0xff]
  %v58 = vld [vmem:[%s1 + $0xa8] sm:$0xff]
  %v59 = vld [vmem:[%s1 + $0xb0] sm:$0xff]
  %v60 = vld [vmem:[%s1 + $0xb8] sm:$0xff]
  %v61 = vld [vmem:[%s1 + $0xc0] sm:$0xff]
  %v62 = vld [vmem:[%s1 + $0xc8] sm:$0xff]
  %v63 = vld [vmem:[%s1 + $0xd0] sm:$0xff]
  %v64 = vld [vmem:[%s1 + $0xd8] sm:$0xff]
  %v65 = vld [vmem:[%s1 + $0xe0] sm:$0xff]
  %v66 = vld [vmem:[%s1 + $0xe8] sm:$0xff]
  %v67 = vld [vmem:[%s1 + $0xf0] sm:$0xff]
  %v68 = vld [vmem:[%s1 + $0xf8] sm:$0xff]
  %v69 = vld [vmem:[%s2] sm:$0x1]
  %v71 = vperm.slane %v69, 0
  %73 = vmatpush.msra.mxu0 %v52
  %74 = vmatpush.msra.mxu0 %v51
  %75 = vmatpush.msra.mxu0 %v50
  %76 = vmatpush.msra.mxu0 %v49
  %77 = vmatpush.msra.mxu0 %v48
  %78 = vmatpush.msra.mxu0 %v47
  %79 = vmatpush.msra.mxu0 %v46
  %80 = vmatpush.msra.mxu0 %v45
  %81 = vmatpush.msra.mxu0 %v44
  %82 = vmatpush.msra.mxu0 %v43
  %83 = vmatpush.msra.mxu0 %v42
  %84 = vmatpush.msra.mxu0 %v41
  %85 = vmatpush.msra.mxu0 %v40
  %86 = vmatpush.msra.mxu0 %v39
  %87 = vmatpush.msra.mxu0 %v38
  %88 = vmatpush.msra.mxu0 %v37
  %89 = vmatmul.f32.gmra.mxu0 %v29
  %v90 = vpop.f32.mrf.mxu0
  %v91 = vadd.f32 %v71, %v90
  %92 = vmatmul.f32.gmra.mxu0 %v31
  %v93 = vpop.f32.mrf.mxu0
  %v94 = vadd.f32 %v71, %v93
  %95 = vmatmul.f32.gmra.mxu0 %v33
  %v96 = vpop.f32.mrf.mxu0
  %v97 = vadd.f32 %v71, %v96
  %98 = vmatmul.f32.gmra.mxu0 %v35
  %v99 = vpop.f32.mrf.mxu0
  %v100 = vadd.f32 %v71, %v99
  %101 = vdwg.mxu0
  %102 = vmatpush.msra.mxu0 %v68
  %103 = vmatpush.msra.mxu0 %v67
  %104 = vmatpush.msra.mxu0 %v66
  %105 = vmatpush.msra.mxu0 %v65
  %106 = vmatpush.msra.mxu0 %v64
  %107 = vmatpush.msra.mxu0 %v63
  %108 = vmatpush.msra.mxu0 %v62
  %109 = vmatpush.msra.mxu0 %v61
  %110 = vmatpush.msra.mxu0 %v60
  %111 = vmatpush.msra.mxu0 %v59
  %112 = vmatpush.msra.mxu0 %v58
  %113 = vmatpush.msra.mxu0 %v57
  %114 = vmatpush.msra.mxu0 %v56
  %115 = vmatpush.msra.mxu0 %v55
  %116 = vmatpush.msra.mxu0 %v54
  %117 = vmatpush.msra.mxu0 %v53
  %118 = vmatmul.f32.gmra.mxu0 %v30
  %v119 = vpop.f32.mrf.mxu0
  %v120 = vadd.f32 %v91, %v119
  %121 = vmatmul.f32.gmra.mxu0 %v32
  %v122 = vpop.f32.mrf.mxu0
  %v123 = vadd.f32 %v94, %v122
  %124 = vmatmul.f32.gmra.mxu0 %v34
  %v125 = vpop.f32.mrf.mxu0
  %v126 = vadd.f32 %v97, %v125
  %127 = vmatmul.f32.gmra.mxu0 %v36
  %v128 = vpop.f32.mrf.mxu0
  %v129 = vadd.f32 %v100, %v128
  %130 = vdwg.mxu0
  %131 = vst [vmem:[#allocation2] sm:$0xff] %v120
  %132 = vst [vmem:[#allocation2 + $0x8] sm:$0xff] %v123
  %133 = vst [vmem:[#allocation2 + $0x10] sm:$0xff] %v126
  %134 = vst [vmem:[#allocation2 + $0x18] sm:$0xff] %v129
  %v135 = vld [vmem:[%s4] sm:$0xff]
  %v136 = vld [vmem:[%s4 + $0x8] sm:$0xff]
  %v137 = vld [vmem:[%s4 + $0x10] sm:$0xff]
  %v138 = vld [vmem:[%s4 + $0x18] sm:$0xff]
  %v139 = vld [vmem:[%s4 + $0x20] sm:$0xff]
  %v140 = vld [vmem:[%s4 + $0x28] sm:$0xff]
  %v141 = vld [vmem:[%s4 + $0x30] sm:$0xff]
  %v142 = vld [vmem:[%s4 + $0x38] sm:$0xff]
  %v143 = vld [vmem:[%s4 + $0x40] sm:$0xff]
  %v144 = vld [vmem:[%s4 + $0x48] sm:$0xff]
  %v145 = vld [vmem:[%s4 + $0x50] sm:$0xff]
  %v146 = vld [vmem:[%s4 + $0x58] sm:$0xff]
  %v147 = vld [vmem:[%s4 + $0x60] sm:$0xff]
  %v148 = vld [vmem:[%s4 + $0x68] sm:$0xff]
  %v149 = vld [vmem:[%s4 + $0x70] sm:$0xff]
  %v150 = vld [vmem:[%s4 + $0x78] sm:$0xff]
  %v151 = vld [vmem:[%s4 + $0x80] sm:$0xff]
  %v152 = vld [vmem:[%s4 + $0x88] sm:$0xff]
  %v153 = vld [vmem:[%s4 + $0x90] sm:$0xff]
  %v154 = vld [vmem:[%s4 + $0x98] sm:$0xff]
  %v155 = vld [vmem:[%s4 + $0xa0] sm:$0xff]
  %v156 = vld [vmem:[%s4 + $0xa8] sm:$0xff]
  %v157 = vld [vmem:[%s4 + $0xb0] sm:$0xff]
  %v158 = vld [vmem:[%s4 + $0xb8] sm:$0xff]
  %v159 = vld [vmem:[%s4 + $0xc0] sm:$0xff]
  %v160 = vld [vmem:[%s4 + $0xc8] sm:$0xff]
  %v161 = vld [vmem:[%s4 + $0xd0] sm:$0xff]
  %v162 = vld [vmem:[%s4 + $0xd8] sm:$0xff]
  %v163 = vld [vmem:[%s4 + $0xe0] sm:$0xff]
  %v164 = vld [vmem:[%s4 + $0xe8] sm:$0xff]
  %v165 = vld [vmem:[%s4 + $0xf0] sm:$0xff]
  %v166 = vld [vmem:[%s4 + $0xf8] sm:$0xff]
  %v167 = vld [vmem:[%s5] sm:$0x1]
  %v169 = vperm.slane %v167, 0
  %171 = vmatpush.msra.mxu0 %v150
  %172 = vmatpush.msra.mxu0 %v149
  %173 = vmatpush.msra.mxu0 %v148
  %174 = vmatpush.msra.mxu0 %v147
  %175 = vmatpush.msra.mxu0 %v146
  %176 = vmatpush.msra.mxu0 %v145
  %177 = vmatpush.msra.mxu0 %v144
  %178 = vmatpush.msra.mxu0 %v143
  %179 = vmatpush.msra.mxu0 %v142
  %180 = vmatpush.msra.mxu0 %v141
  %181 = vmatpush.msra.mxu0 %v140
  %182 = vmatpush.msra.mxu0 %v139
  %183 = vmatpush.msra.mxu0 %v138
  %184 = vmatpush.msra.mxu0 %v137
  %185 = vmatpush.msra.mxu0 %v136
  %186 = vmatpush.msra.mxu0 %v135
  %187 = vmatmul.f32.gmra.mxu0 %v29
  %v188 = vpop.f32.mrf.mxu0
  %v189 = vadd.f32 %v169, %v188
  %190 = vmatmul.f32.gmra.mxu0 %v31
  %v191 = vpop.f32.mrf.mxu0
  %v192 = vadd.f32 %v169, %v191
  %193 = vmatmul.f32.gmra.mxu0 %v33
  %v194 = vpop.f32.mrf.mxu0
  %v195 = vadd.f32 %v169, %v194
  %196 = vmatmul.f32.gmra.mxu0 %v35
  %v197 = vpop.f32.mrf.mxu0
  %v198 = vadd.f32 %v169, %v197
  %199 = vdwg.mxu0
  %200 = vmatpush.msra.mxu0 %v166
  %201 = vmatpush.msra.mxu0 %v165
  %202 = vmatpush.msra.mxu0 %v164
  %203 = vmatpush.msra.mxu0 %v163
  %204 = vmatpush.msra.mxu0 %v162
  %205 = vmatpush.msra.mxu0 %v161
  %206 = vmatpush.msra.mxu0 %v160
  %207 = vmatpush.msra.mxu0 %v159
  %208 = vmatpush.msra.mxu0 %v158
  %209 = vmatpush.msra.mxu0 %v157
  %210 = vmatpush.msra.mxu0 %v156
  %211 = vmatpush.msra.mxu0 %v155
  %212 = vmatpush.msra.mxu0 %v154
  %213 = vmatpush.msra.mxu0 %v153
  %214 = vmatpush.msra.mxu0 %v152
  %215 = vmatpush.msra.mxu0 %v151
  %216 = vmatmul.f32.gmra.mxu0 %v30
  %v217 = vpop.f32.mrf.mxu0
  %v218 = vadd.f32 %v189, %v217
  %219 = vmatmul.f32.gmra.mxu0 %v32
  %v220 = vpop.f32.mrf.mxu0
  %v221 = vadd.f32 %v192, %v220
  %222 = vmatmul.f32.gmra.mxu0 %v34
  %v223 = vpop.f32.mrf.mxu0
  %v224 = vadd.f32 %v195, %v223
  %225 = vmatmul.f32.gmra.mxu0 %v36
  %v226 = vpop.f32.mrf.mxu0
  %v227 = vadd.f32 %v198, %v226
  %228 = vdwg.mxu0
  %229 = vst [vmem:[#allocation3] sm:$0xff] %v218
  %230 = vst [vmem:[#allocation3 + $0x8] sm:$0xff] %v221
  %231 = vst [vmem:[#allocation3 + $0x10] sm:$0xff] %v224
  %232 = vst [vmem:[#allocation3 + $0x18] sm:$0xff] %v227
  %v233 = vld [vmem:[%s3] sm:$0xff]
  %v234 = vld [vmem:[%s3 + $0x8] sm:$0xff]
  %v235 = vld [vmem:[%s3 + $0x10] sm:$0xff]
  %v236 = vld [vmem:[%s3 + $0x18] sm:$0xff]
  %v237 = vld [vmem:[%s6] sm:$0xff]
  %v238 = vld [vmem:[%s6 + $0x8] sm:$0xff]
  %v239 = vld [vmem:[%s6 + $0x10] sm:$0xff]
  %v240 = vld [vmem:[%s6 + $0x18] sm:$0xff]
  loop: start=0, step=1, limit=16
  $region34: #{bidaf_forward.14} parent=0 // loop_pre_header
    _
  $region35: #{bidaf_forward.14} parent=0 // loop_header
    %s242 = sphi 0, %s246
    %p243 = scmp.ge.s32.totalorder %s242, 16
    %v247 = vphi 0.0, %v422
    %v248 = vphi 0.0, %v425
    %v249 = vphi 0.0, %v433
    %v250 = vphi 0.0, %v436
  $region36: #{bidaf_forward.14} parent=0 // loop_header_branch
    %245 = sbr.rel (%p243) target = $region40
  $region37: #{bidaf_forward.14} parent=0 // loop_body
    %s251 = smul.u32 %s242, 2
    %s252 = ssub.s32 15, %s242
    %s253 = smul.u32 %s252, 2
    %s254 = scalar_lea.vmem [#allocation2], %s251
    %v255 = vld [vmem:[%s254] sm:$0x3]
    %257 = vrot.lane.b32.xlu0 %v247, 32
    %v258 = vpop.permute.xlu0 %257
    %vm259 = vcmask 261120
    %v260 = vsel %vm259, %v258, 0
    %262 = vmatpush.msra.mxu0 0.0
    %263 = vmatpush.msra.mxu0 0.0
    %264 = vmatpush.msra.mxu0 0.0
    %265 = vmatpush.msra.mxu0 0.0
    %266 = vmatpush.msra.mxu0 0.0
    %267 = vmatpush.msra.mxu0 0.0
    %268 = vmatpush.msra.mxu0 0.0
    %269 = vmatpush.msra.mxu0 0.0
    %270 = vmatpush.msra.mxu0 0.0
    %271 = vmatpush.msra.mxu0 0.0
    %272 = vmatpush.msra.mxu0 0.0
    %273 = vmatpush.msra.mxu0 0.0
    %274 = vmatpush.msra.mxu0 %v236
    %275 = vmatpush.msra.mxu0 %v235
    %276 = vmatpush.msra.mxu0 %v234
    %277 = vmatpush.msra.mxu0 %v233
    %278 = vmatmul.f32.gmra.mxu0 %v260
    %v279 = vpop.f32.mrf.mxu0
    %v280 = vadd.f32 0.0, %v279
    %281 = vdwg.mxu0
    %v282 = vadd.f32 %v255, %v280
    %v283 = vxor.u32 %v282, 2147483648
    %v284 = vmul.f32 %v283, 1.442695
    %v285 = vpow.pop %v284
    %v286 = vadd.f32 %v285, 1.0
    %v287 = vrcp.pop %v286
    %v288 = vmul.f32 %v286, %v287
    %v289 = vsub.f32 1.0, %v288
    %v290 = vmul.f32 %v287, %v289
    %v291 = vadd.f32 %v287, %v290
    %vm292 = vweird.f32 %v286
    %vm293 = vweird.f32 %v287
    %vm294 = vmor %vm292, %vm293
    %v295 = vsel %vm294, %v287, %v291
    %v296 = vand.u32 2147483647, %v286
    %vm297 = vcmp.eq.f32.partialorder %v296, 8.507059e+37
    %v298 = vand.u32 %v286, 2147483648
    %v299 = vor.u32 1.1754944e-38, %v298
    %v300 = vsel %vm297, %v299, %v295
    %v301 = vmul.f32 1.0, %v300
    %v302 = vtanh.pop %v282
    %v303 = vmul.f32 %v301, %v248
    %305 = vrot.lane.b32.xlu0 %v302, 64
    %v306 = vpop.permute.xlu0 %305
    %v308 = vmul.f32 %v301, %v306
    %310 = vrot.lane.b32.xlu0 %v308, 32
    %v311 = vpop.permute.xlu0 %310
    %v313 = vadd.f32 %v303, %v311
    %v314 = vtanh.pop %v313
    %316 = vrot.lane.b32.xlu0 %v314, 64
    %v317 = vpop.permute.xlu0 %316
    %v319 = vmul.f32 %v301, %v317
    %s320 = scalar_lea.vmem [#allocation3], %s253
    %v321 = vld [vmem:[%s320] sm:$0x3]
    %323 = vrot.lane.b32.xlu0 %v249, 32
    %v324 = vpop.permute.xlu0 %323
    %v325 = vsel %vm259, %v324, 0
    %327 = vmatpush.msra.mxu0 0.0
    %328 = vmatpush.msra.mxu0 0.0
    %329 = vmatpush.msra.mxu0 0.0
    %330 = vmatpush.msra.mxu0 0.0
    %331 = vmatpush.msra.mxu0 0.0
    %332 = vmatpush.msra.mxu0 0.0
    %333 = vmatpush.msra.mxu0 0.0
    %334 = vmatpush.msra.mxu0 0.0
    %335 = vmatpush.msra.mxu0 0.0
    %336 = vmatpush.msra.mxu0 0.0
    %337 = vmatpush.msra.mxu0 0.0
    %338 = vmatpush.msra.mxu0 0.0
    %339 = vmatpush.msra.mxu0 %v240
    %340 = vmatpush.msra.mxu0 %v239
    %341 = vmatpush.msra.mxu0 %v238
    %342 = vmatpush.msra.mxu0 %v237
    %343 = vmatmul.f32.gmra.mxu0 %v325
    %v344 = vpop.f32.mrf.mxu0
    %v345 = vadd.f32 0.0, %v344
    %346 = vdwg.mxu0
    %v347 = vadd.f32 %v321, %v345
    %v348 = vxor.u32 %v347, 2147483648
    %v349 = vmul.f32 %v348, 1.442695
    %v350 = vpow.pop %v349
    %v351 = vadd.f32 %v350, 1.0
    %v352 = vrcp.pop %v351
    %v353 = vmul.f32 %v351, %v352
    %v354 = vsub.f32 1.0, %v353
    %v355 = vmul.f32 %v352, %v354
    %v356 = vadd.f32 %v352, %v355
    %vm357 = vweird.f32 %v351
    %vm358 = vweird.f32 %v352
    %vm359 = vmor %vm357, %vm358
    %v360 = vsel %vm359, %v352, %v356
    %v361 = vand.u32 2147483647, %v351
    %vm362 = vcmp.eq.f32.partialorder %v361, 8.507059e+37
    %v363 = vand.u32 %v351, 2147483648
    %v364 = vor.u32 1.1754944e-38, %v363
    %v365 = vsel %vm362, %v364, %v360
    %v366 = vmul.f32 1.0, %v365
    %v367 = vtanh.pop %v347
    %v368 = vmul.f32 %v366, %v250
    %370 = vrot.lane.b32.xlu0 %v367, 64
    %v371 = vpop.permute.xlu0 %370
    %v373 = vmul.f32 %v366, %v371
    %375 = vrot.lane.b32.xlu0 %v373, 32
    %v376 = vpop.permute.xlu0 %375
    %v378 = vadd.f32 %v368, %v376
    %v379 = vtanh.pop %v378
    %381 = vrot.lane.b32.xlu0 %v379, 64
    %v382 = vpop.permute.xlu0 %381
    %v384 = vmul.f32 %v366, %v382
    %s385 = scalar_lea.vmem %s7, %s251
    %v386 = vld [vmem:[%s385] sm:$0x3]
    %s387 = scalar_lea.vmem %s7, %s253
    %v388 = vld [vmem:[%s387] sm:$0x3]
    %390 = vset.pattern.permute.xlu0 0
    %391 = vperm.xlu0 %390, %v386
    %v392 = vpop.permute.xlu0 %391
    %v394 = vmul.f32 %v392, %v319
    %396 = vrot.lane.b32.xlu0 %v394, 32
    %v397 = vpop.permute.xlu0 %396
    %s399 = scalar_lea.vmem %s8, %s251
    %vm400 = vcmask 254976
    %401 = vst.msk [vmem:[%s399] sm:$0x3] %vm400, %v397
    %403 = vset.pattern.permute.xlu0 0
    %404 = vperm.xlu0 %403, %v388
    %v405 = vpop.permute.xlu0 %404
    %v407 = vmul.f32 %v405, %v384
    %409 = vrot.lane.b32.xlu0 %v407, 64
    %v410 = vpop.permute.xlu0 %409
    %s412 = scalar_lea.vmem %s8, %s253
    %vm413 = vcmask 517376
    %414 = vst.msk [vmem:[%s412] sm:$0x3] %vm413, %v410
    %v415 = vsub.f32 1.0, %v386
    %417 = vset.pattern.permute.xlu0 0
    %418 = vperm.xlu0 %417, %v415
    %v419 = vpop.permute.xlu0 %418
    %v421 = vmul.f32 %v419, %v247
    %v422 = vadd.f32 %v394, %v421
    %v423 = vmul.f32 %v392, %v313
    %v424 = vmul.f32 %v419, %v248
    %v425 = vadd.f32 %v423, %v424
    %v426 = vsub.f32 1.0, %v388
    %428 = vset.pattern.permute.xlu0 0
    %429 = vperm.xlu0 %428, %v426
    %v430 = vpop.permute.xlu0 %429
    %v432 = vmul.f32 %v430, %v249
    %v433 = vadd.f32 %v407, %v432
    %v434 = vmul.f32 %v405, %v378
    %v435 = vmul.f32 %v430, %v250
    %v436 = vadd.f32 %v434, %v435
  $region38: #{bidaf_forward.14} parent=0 // loop_footer
    %s246 = sadd.s32 1, %s242
  $region39: #{bidaf_forward.14} parent=0 // loop_footer_branch
    %241 = sbr.rel target = $region35
  $region40: #{bidaf_forward.14} parent=0 // loop_exit
    _
  // Predicated region
  $region41: #{bidaf_forward.14} parent=0 // pred_check
    _
  $region42: #{bidaf_forward.14} parent=0 // pred_check_branch
    %438 = sbr.rel (0) target = $region44
  $region43: #{bidaf_forward.14} parent=0 // pred_region
    _
  $region44: #{bidaf_forward.14} parent=0 // pred_fallthru
    _
  // Predicated region
  $region45: #{bidaf_forward.14} parent=0 // pred_check
    _
  $region46: #{bidaf_forward.14} parent=0 // pred_check_branch
    %440 = sbr.rel (0) target = $region48
  $region47: #{bidaf_forward.14} parent=0 // pred_region
    _
  $region48: #{bidaf_forward.14} parent=0 // pred_fallthru
    _

</llo_original>
